<compile_context>
chip_gen: v7x
topology: tpu7x:2x2x1
jax: 0.10.0
libtpu: 0.0.40
codegen_flags: <defaults>
</compile_context>

<pallas_src>
import functools

import jax
import jax.numpy as jnp
from jax import lax
from jax.experimental import pallas as pl
from jax.experimental.pallas import tpu as pltpu


def _round_up(x, m):
    return (x + m - 1) // m * m


# ----------------------------------------------------------------------------
# Fused (pre+post) encoder GRU kernel.  One grid step = one time chunk.
#   xpre_ref / xpost_ref : (Tt*Bp, Ep)  bf16  flattened time-major embeddings
#   wihp_ref / wihq_ref  : (Ep, 3*Hp)   bf16  W_ih^T per GRU, gate blocks r|z|n
#   whhp_ref / whhq_ref  : (Hp, 3*Hp)   bf16  W_hh^T per GRU
#   bgi_ref              : (1, 6*Hp)    f32   [pre r|z|n | post r|z|n] input bias
#                                             (b_hh folded in for r,z gates)
#   bhn_ref              : (1, 2*Hp)    f32   [pre b_hn | post b_hn]
#   wfc_ref              : (2*Hp, Dp)   bf16  W_fc^T (rows: pre half | post half)
#   out_ref              : (Tt, Bp, 2*Hp) bf16 per-step hidden states [pre|post]
#   fcp_ref              : (Bp, Dp)     f32   (h_pre|h_post) @ W_fc^T
#   gi_scr               : (Tt*Bp, 6*Hp) bf16 hoisted input projection (scratch)
#   hp_scr / hq_scr      : (Bp, Hp)     f32   recurrent states (persist across
#                                             time chunks)
# ----------------------------------------------------------------------------
def gru_encoder_kernel(xpre_ref, xpost_ref, wihp_ref, wihq_ref,
                       whhp_ref, whhq_ref, bgi_ref, bhn_ref, wfc_ref,
                       out_ref, fcp_ref, gi_scr, hp_scr, hq_scr, *, seq_len):
    tc = pl.program_id(0)
    n_tc = pl.num_programs(0)
    t_chunk, b_p, two_h = out_ref.shape
    h_p = two_h // 2

    @pl.when(tc == 0)
    def _init():
        hp_scr[...] = jnp.zeros_like(hp_scr)
        hq_scr[...] = jnp.zeros_like(hq_scr)

    # ---- hoisted input projections: two MXU matmuls per chunk, staged bf16 --
    gi_pre = jnp.dot(xpre_ref[...], wihp_ref[...],
                     preferred_element_type=jnp.float32)          # (Tt*Bp, 3Hp)
    gi_post = jnp.dot(xpost_ref[...], wihq_ref[...],
                      preferred_element_type=jnp.float32)
    gi_scr[:, :3 * h_p] = (gi_pre + bgi_ref[:, :3 * h_p]).astype(gi_scr.dtype)
    gi_scr[:, 3 * h_p:] = (gi_post + bgi_ref[:, 3 * h_p:]).astype(gi_scr.dtype)

    whh_pre = whhp_ref[...]                      # stay resident across the loop
    whh_post = whhq_ref[...]
    bhn_pre = jnp.broadcast_to(bhn_ref[:, :h_p], (b_p, h_p))   # hoisted bcasts
    bhn_post = jnp.broadcast_to(bhn_ref[:, h_p:], (b_p, h_p))

    def step(t, carry):
        h_pre = hp_scr[...]                                      # (Bp, Hp) f32
        h_post = hq_scr[...]
        row = pl.multiple_of(t * b_p, b_p)
        gi_t = gi_scr[pl.ds(row, b_p), :]                        # (Bp, 6Hp) bf16

        # two independent recurrence chains, issued back-to-back so their MXU
        # fill/drain and EUP latencies overlap
        gh_p = jnp.dot(h_pre.astype(jnp.bfloat16), whh_pre,
                       preferred_element_type=jnp.float32)       # (Bp, 3Hp)
        gh_q = jnp.dot(h_post.astype(jnp.bfloat16), whh_post,
                       preferred_element_type=jnp.float32)

        r_p = jax.nn.sigmoid(gi_t[:, 0:h_p] + gh_p[:, 0:h_p])
        z_p = jax.nn.sigmoid(gi_t[:, h_p:2 * h_p] + gh_p[:, h_p:2 * h_p])
        n_p = jnp.tanh(gi_t[:, 2 * h_p:3 * h_p]
                       + r_p * (gh_p[:, 2 * h_p:3 * h_p] + bhn_pre))
        h_pre_new = (1.0 - z_p) * n_p + z_p * h_pre

        r_q = jax.nn.sigmoid(gi_t[:, 3 * h_p:4 * h_p] + gh_q[:, 0:h_p])
        z_q = jax.nn.sigmoid(gi_t[:, 4 * h_p:5 * h_p] + gh_q[:, h_p:2 * h_p])
        n_q = jnp.tanh(gi_t[:, 5 * h_p:6 * h_p]
                       + r_q * (gh_q[:, 2 * h_p:3 * h_p] + bhn_post))
        h_post_new = (1.0 - z_q) * n_q + z_q * h_post

        # freeze the state on padded time steps (beyond the true sequence length)
        valid = (tc * t_chunk + t) < seq_len
        h_pre_new = jnp.where(valid, h_pre_new, h_pre)
        h_post_new = jnp.where(valid, h_post_new, h_post)
        hp_scr[...] = h_pre_new
        hq_scr[...] = h_post_new
        out_ref[t] = jnp.concatenate([h_pre_new, h_post_new],
                                     axis=-1).astype(out_ref.dtype)
        return carry

    lax.fori_loop(0, t_chunk, step, 0, unroll=min(t_chunk, 16))

    @pl.when(tc == n_tc - 1)
    def _finalize():
        fcp_ref[...] = (
            jnp.dot(hp_scr[...].astype(jnp.bfloat16), wfc_ref[0:h_p, :],
                    preferred_element_type=jnp.float32)
            + jnp.dot(hq_scr[...].astype(jnp.bfloat16), wfc_ref[h_p:2 * h_p, :],
                      preferred_element_type=jnp.float32))


# ----------------------------------------------------------------------------
# Weight packing: PyTorch GRU layout (gate order r, z, n) -> padded, lane-aligned
# transposed blocks.  Gate g lives in lanes [g*H_pad, g*H_pad + H).
# ----------------------------------------------------------------------------
def _pack_gru_weights(w_ih, w_hh, b_ih, b_hh, E, H, E_pad, H_pad):
    w_ih = w_ih.astype(jnp.float32)
    w_hh = w_hh.astype(jnp.float32)
    b_ih = b_ih.astype(jnp.float32)
    b_hh = b_hh.astype(jnp.float32)

    wih_p = jnp.zeros((E_pad, 3 * H_pad), jnp.float32)
    whh_p = jnp.zeros((H_pad, 3 * H_pad), jnp.float32)
    bgi_p = jnp.zeros((1, 3 * H_pad), jnp.float32)
    bhn_p = jnp.zeros((1, H_pad), jnp.float32)
    for g in range(3):
        wih_p = wih_p.at[:E, g * H_pad:g * H_pad + H].set(w_ih[g * H:(g + 1) * H, :].T)
        whh_p = whh_p.at[:H, g * H_pad:g * H_pad + H].set(w_hh[g * H:(g + 1) * H, :].T)
        b = b_ih[g * H:(g + 1) * H]
        if g < 2:                                  # r, z: hidden bias folds into gi
            b = b + b_hh[g * H:(g + 1) * H]
        bgi_p = bgi_p.at[0, g * H_pad:g * H_pad + H].set(b)
    bhn_p = bhn_p.at[0, :H].set(b_hh[2 * H:3 * H])
    return (wih_p.astype(jnp.bfloat16), whh_p.astype(jnp.bfloat16), bgi_p, bhn_p)


# ----------------------------------------------------------------------------
# Encoder forward (matches the PyTorch module; dropout = identity / eval mode)
# ----------------------------------------------------------------------------
def encoder_forward(params, pre_seq, post_seq, *, time_chunk=64):
    # time_chunk=64 keeps the per-chunk working set comfortable on v7x's 64 MiB
    # VMEM at production shapes; retune (32..128) per generation.
    assert pre_seq.shape[1] == post_seq.shape[1]
    B, T = pre_seq.shape
    emb = params["embedding"]
    E = emb.shape[1]
    H = params["pre_w_hh"].shape[1]
    D = params["fc_w"].shape[0]

    B_pad = _round_up(B, 16)      # mult of 16: bf16 gi row slices stay tile-aligned
    E_pad = _round_up(E, 128)
    H_pad = _round_up(H, 128)
    D_pad = _round_up(D, 128)
    Tt = max(1, min(time_chunk, T))
    T_pad = _round_up(T, Tt)
    n_tc = T_pad // Tt

    # --- embedding lookup + pad / flatten to time-major (XLA glue) -----------
    # TODO(synk): nn.Dropout(p=0.5) treated as identity (eval mode).
    def pack_x(seq):
        x = jnp.take(emb, seq, axis=0).astype(jnp.float32)        # (B, T, E)
        x = jnp.transpose(x, (1, 0, 2))                           # (T, B, E)
        x = jnp.pad(x, ((0, T_pad - T), (0, B_pad - B), (0, E_pad - E)))
        return x.reshape(T_pad * B_pad, E_pad).astype(jnp.bfloat16)

    xpre = pack_x(pre_seq)
    xpost = pack_x(post_seq)

    # --- pack / pad weights ---------------------------------------------------
    wih_p, whh_p, bgi_p, bhn_p = _pack_gru_weights(
        params["pre_w_ih"], params["pre_w_hh"],
        params["pre_b_ih"], params["pre_b_hh"], E, H, E_pad, H_pad)
    wih_q, whh_q, bgi_q, bhn_q = _pack_gru_weights(
        params["post_w_ih"], params["post_w_hh"],
        params["post_b_ih"], params["post_b_hh"], E, H, E_pad, H_pad)
    bgi = jnp.concatenate([bgi_p, bgi_q], axis=1)                  # (1, 6Hp) f32
    bhn = jnp.concatenate([bhn_p, bhn_q], axis=1)                  # (1, 2Hp) f32

    w_fc = params["fc_w"].astype(jnp.float32)                      # (D, 2H)
    wfc = jnp.zeros((2 * H_pad, D_pad), jnp.float32)
    wfc = wfc.at[:H, :D].set(w_fc[:, :H].T)
    wfc = wfc.at[H_pad:H_pad + H, :D].set(w_fc[:, H:].T)
    wfc = wfc.astype(jnp.bfloat16)

    # scoped-VMEM limit: v5e defaults to 16 MiB, v7x only has 64 MiB physical
    try:
        vmem_cap = int(pltpu.get_tpu_info().vmem_capacity_bytes)
    except Exception:
        vmem_cap = 64 * 1024 * 1024
    vmem_limit = min(int(vmem_cap * 3 // 4), 100 * 1024 * 1024)

    kernel = functools.partial(gru_encoder_kernel, seq_len=T)
    out_p, fcp = pl.pallas_call(
        kernel,
        out_shape=(jax.ShapeDtypeStruct((T_pad, B_pad, 2 * H_pad), jnp.bfloat16),
                   jax.ShapeDtypeStruct((B_pad, D_pad), jnp.float32)),
        grid=(n_tc,),
        in_specs=[
            pl.BlockSpec((Tt * B_pad, E_pad), lambda tc: (tc, 0)),      # x pre
            pl.BlockSpec((Tt * B_pad, E_pad), lambda tc: (tc, 0)),      # x post
            pl.BlockSpec((E_pad, 3 * H_pad), lambda tc: (0, 0)),        # W_ih pre
            pl.BlockSpec((E_pad, 3 * H_pad), lambda tc: (0, 0)),        # W_ih post
            pl.BlockSpec((H_pad, 3 * H_pad), lambda tc: (0, 0)),        # W_hh pre
            pl.BlockSpec((H_pad, 3 * H_pad), lambda tc: (0, 0)),        # W_hh post
            pl.BlockSpec((1, 6 * H_pad), lambda tc: (0, 0)),            # gi bias
            pl.BlockSpec((1, 2 * H_pad), lambda tc: (0, 0)),            # b_hn
            pl.BlockSpec((2 * H_pad, D_pad), lambda tc: (0, 0)),        # W_fc^T
        ],
        out_specs=(
            pl.BlockSpec((Tt, B_pad, 2 * H_pad), lambda tc: (tc, 0, 0)),
            pl.BlockSpec((B_pad, D_pad), lambda tc: (0, 0)),
        ),
        scratch_shapes=[
            pltpu.VMEM((Tt * B_pad, 6 * H_pad), jnp.bfloat16),   # gi staging (bf16)
            pltpu.VMEM((B_pad, H_pad), jnp.float32),             # h_pre state
            pltpu.VMEM((B_pad, H_pad), jnp.float32),             # h_post state
        ],
        compiler_params=pltpu.CompilerParams(
            dimension_semantics=("arbitrary",),
            vmem_limit_bytes=vmem_limit),
    )(xpre, xpost, wih_p, wih_q, whh_p, whh_q, bgi, bhn, wfc)

    # enc_out = cat([pre_out, post_out], dim=1)  -> (B, 2T, H)
    pre_o = jnp.transpose(out_p[:T, :B, :H], (1, 0, 2)).astype(jnp.float32)
    post_o = jnp.transpose(out_p[:T, :B, H_pad:H_pad + H], (1, 0, 2)).astype(jnp.float32)
    enc_out = jnp.concatenate([pre_o, post_o], axis=1)

    # enc_hidden = tanh(fc(cat([pre_h, post_h], -1)))  -> (B, D)
    fc_b = params["fc_b"].astype(jnp.float32)
    enc_hidden = jnp.tanh(fcp[:B, :D] + fc_b[None, :])
    return enc_out, enc_hidden


# ----------------------------------------------------------------------------
# Pure-JAX reference (PyTorch GRU semantics) for a correctness smoke test.
# ----------------------------------------------------------------------------
def _gru_ref(x, w_ih, w_hh, b_ih, b_hh):
    B, T, E = x.shape
    H = w_hh.shape[1]
    h = jnp.zeros((B, H), jnp.float32)
    outs = []
    for t in range(T):
        gi = x[:, t] @ w_ih.T + b_ih
        gh = h @ w_hh.T + b_hh
        r = jax.nn.sigmoid(gi[:, :H] + gh[:, :H])
        z = jax.nn.sigmoid(gi[:, H:2 * H] + gh[:, H:2 * H])
        n = jnp.tanh(gi[:, 2 * H:] + r * gh[:, 2 * H:])
        h = (1.0 - z) * n + z * h
        outs.append(h)
    return jnp.stack(outs, axis=1), h


def _encoder_ref(params, pre_seq, post_seq):
    emb = params["embedding"]
    pre_x = jnp.take(emb, pre_seq, axis=0)
    post_x = jnp.take(emb, post_seq, axis=0)
    pre_out, pre_h = _gru_ref(pre_x, params["pre_w_ih"], params["pre_w_hh"],
                              params["pre_b_ih"], params["pre_b_hh"])
    post_out, post_h = _gru_ref(post_x, params["post_w_ih"], params["post_w_hh"],
                                params["post_b_ih"], params["post_b_hh"])
    enc_out = jnp.concatenate([pre_out, post_out], axis=1)
    h_cat = jnp.concatenate([pre_h, post_h], axis=-1)
    enc_hidden = jnp.tanh(h_cat @ params["fc_w"].T + params["fc_b"])
    return enc_out, enc_hidden


def init_params(key, vocab, emb_dim, enc_hid, dec_hid):
    ks = jax.random.split(key, 12)
    s = 1.0 / jnp.sqrt(enc_hid)
    u = lambda k, shp, sc: jax.random.uniform(k, shp, jnp.float32, -sc, sc)
    return {
        "embedding": jax.random.normal(ks[0], (vocab, emb_dim), jnp.float32),
        "pre_w_ih": u(ks[1], (3 * enc_hid, emb_dim), s),
        "pre_w_hh": u(ks[2], (3 * enc_hid, enc_hid), s),
        "pre_b_ih": u(ks[3], (3 * enc_hid,), s),
        "pre_b_hh": u(ks[4], (3 * enc_hid,), s),
        "post_w_ih": u(ks[5], (3 * enc_hid, emb_dim), s),
        "post_w_hh": u(ks[6], (3 * enc_hid, enc_hid), s),
        "post_b_ih": u(ks[7], (3 * enc_hid,), s),
        "post_b_hh": u(ks[8], (3 * enc_hid,), s),
        "fc_w": u(ks[9], (dec_hid, 2 * enc_hid), 1.0 / jnp.sqrt(2 * enc_hid)),
        "fc_b": u(ks[10], (dec_hid,), 1.0 / jnp.sqrt(2 * enc_hid)),
    }


if __name__ == "__main__":
    VOCAB, EMB, ENC_HID, DEC_HID = 20, 16, 32, 32
    B, L = 2, 8

    key = jax.random.PRNGKey(0)
    kp, kq, kw = jax.random.split(key, 3)
    params = init_params(kw, VOCAB, EMB, ENC_HID, DEC_HID)

    pre_seq = jax.random.randint(kp, (B, L), 0, VOCAB, dtype=jnp.int32)
    post_seq = jax.random.randint(kq, (B, L), 0, VOCAB, dtype=jnp.int32)

    # time_chunk < L so the multi-chunk state carry and time-padding guard are
    # exercised (production use: time_chunk=64).
    enc_out, enc_hidden = encoder_forward(params, pre_seq, post_seq, time_chunk=6)
    jax.block_until_ready((enc_out, enc_hidden))

    assert enc_out.shape == (B, 2 * L, ENC_HID)
    assert enc_hidden.shape == (B, DEC_HID)

    ref_out, ref_hidden = _encoder_ref(params, pre_seq, post_seq)
    assert float(jnp.max(jnp.abs(enc_out - ref_out))) < 8e-2      # bf16 matmul/storage drift
    assert float(jnp.max(jnp.abs(enc_hidden - ref_hidden))) < 8e-2
    print("KERNEL_OK")
</pallas_src>

<mosaic_0001>
module attributes {stable_mosaic.version = 11 : i64} {
  func.func @gru_encoder_kernel(%arg0: i32, %arg1: memref<96x128xbf16, #tpu.memory_space<vmem>>, %arg2: memref<96x128xbf16, #tpu.memory_space<vmem>>, %arg3: memref<128x384xbf16, #tpu.memory_space<vmem>>, %arg4: memref<128x384xbf16, #tpu.memory_space<vmem>>, %arg5: memref<128x384xbf16, #tpu.memory_space<vmem>>, %arg6: memref<128x384xbf16, #tpu.memory_space<vmem>>, %arg7: memref<1x768xf32, #tpu.memory_space<vmem>>, %arg8: memref<1x256xf32, #tpu.memory_space<vmem>>, %arg9: memref<256x128xbf16, #tpu.memory_space<vmem>>, %arg10: memref<6x16x256xbf16, #tpu.memory_space<vmem>>, %arg11: memref<16x128xf32, #tpu.memory_space<vmem>>, %arg12: memref<96x768xbf16, #tpu.memory_space<vmem>>, %arg13: memref<16x128xf32, #tpu.memory_space<vmem>>, %arg14: memref<16x128xf32, #tpu.memory_space<vmem>>) attributes {dimension_semantics = [#tpu.dimension_semantics<arbitrary>], iteration_bounds = array<i64: 2>, scalar_prefetch = 0 : i64, scratch_operands = 3 : i64, tpu.core_type = #tpu.core_type<tc>, window_params = [{transform_indices = @transform_0, window_bounds = array<i64: 96, 128>}, {transform_indices = @transform_1, window_bounds = array<i64: 96, 128>}, {pipeline_mode = #tpu.pipeline_mode<synchronous>, transform_indices = @transform_2, window_bounds = array<i64: 128, 384>}, {pipeline_mode = #tpu.pipeline_mode<synchronous>, transform_indices = @transform_3, window_bounds = array<i64: 128, 384>}, {pipeline_mode = #tpu.pipeline_mode<synchronous>, transform_indices = @transform_4, window_bounds = array<i64: 128, 384>}, {pipeline_mode = #tpu.pipeline_mode<synchronous>, transform_indices = @transform_5, window_bounds = array<i64: 128, 384>}, {pipeline_mode = #tpu.pipeline_mode<synchronous>, transform_indices = @transform_6, window_bounds = array<i64: 1, 768>}, {pipeline_mode = #tpu.pipeline_mode<synchronous>, transform_indices = @transform_7, window_bounds = array<i64: 1, 256>}, {pipeline_mode = #tpu.pipeline_mode<synchronous>, transform_indices = @transform_8, window_bounds = array<i64: 256, 128>}, {transform_indices = @transform_9, window_bounds = array<i64: 6, 16, 256>}, {pipeline_mode = #tpu.pipeline_mode<synchronous>, transform_indices = @transform_10, window_bounds = array<i64: 16, 128>}]} {
    %c0_i32 = arith.constant 0 : i32
    %0 = arith.cmpi eq, %arg0, %c0_i32 : i32
    %1 = arith.extui %0 : i1 to i32
    %c0_i32_0 = arith.constant 0 : i32
    %2 = arith.cmpi ne, %1, %c0_i32_0 : i32
    scf.if %2 {
      %cst_156 = arith.constant 0.000000e+00 : f32
      %528 = vector.broadcast %cst_156 : f32 to vector<16x128xf32>
      %c0_157 = arith.constant 0 : index
      %c0_158 = arith.constant 0 : index
      %529 = vector.load %arg13[%c0_157, %c0_158] : memref<16x128xf32, #tpu.memory_space<vmem>>, vector<16x128xf32>
      tpu.vector_store %arg13[%c0_157, %c0_158], %528 {strides = array<i32>} : memref<16x128xf32, #tpu.memory_space<vmem>>, vector<16x128xf32>,
      %cst_159 = arith.constant 0.000000e+00 : f32
      %530 = vector.broadcast %cst_159 : f32 to vector<16x128xf32>
      %c0_160 = arith.constant 0 : index
      %c0_161 = arith.constant 0 : index
      %531 = vector.load %arg14[%c0_160, %c0_161] : memref<16x128xf32, #tpu.memory_space<vmem>>, vector<16x128xf32>
      tpu.vector_store %arg14[%c0_160, %c0_161], %530 {strides = array<i32>} : memref<16x128xf32, #tpu.memory_space<vmem>>, vector<16x128xf32>,
    } else {
    }
    %c0 = arith.constant 0 : index
    %c0_1 = arith.constant 0 : index
    %3 = vector.load %arg1[%c0, %c0_1] : memref<96x128xbf16, #tpu.memory_space<vmem>>, vector<96x128xbf16>
    %c0_2 = arith.constant 0 : index
    %c0_3 = arith.constant 0 : index
    %4 = vector.load %arg3[%c0_2, %c0_3] : memref<128x384xbf16, #tpu.memory_space<vmem>>, vector<128x384xbf16>
    %cst = arith.constant dense<0.000000e+00> : vector<96x384xf32>
    %5 = tpu.matmul %3, %4, %cst {dimension_numbers = #tpu.dot_dimension_numbers<[1], [0], [0], [1], [0, 0, 1, 1], [], []>} : vector<96x128xbf16>, vector<128x384xbf16>, vector<96x384xf32> -> vector<96x384xf32>
    %c0_4 = arith.constant 0 : index
    %c0_5 = arith.constant 0 : index
    %6 = vector.load %arg2[%c0_4, %c0_5] : memref<96x128xbf16, #tpu.memory_space<vmem>>, vector<96x128xbf16>
    %c0_6 = arith.constant 0 : index
    %c0_7 = arith.constant 0 : index
    %7 = vector.load %arg4[%c0_6, %c0_7] : memref<128x384xbf16, #tpu.memory_space<vmem>>, vector<128x384xbf16>
    %cst_8 = arith.constant dense<0.000000e+00> : vector<96x384xf32>
    %8 = tpu.matmul %6, %7, %cst_8 {dimension_numbers = #tpu.dot_dimension_numbers<[1], [0], [0], [1], [0, 0, 1, 1], [], []>} : vector<96x128xbf16>, vector<128x384xbf16>, vector<96x384xf32> -> vector<96x384xf32>
    %c0_9 = arith.constant 0 : index
    %c0_10 = arith.constant 0 : index
    %9 = vector.load %arg7[%c0_9, %c0_10] : memref<1x768xf32, #tpu.memory_space<vmem>>, vector<1x384xf32>
    %10 = vector.broadcast %9 : vector<1x384xf32> to vector<96x384xf32>
    %11 = arith.addf %5, %10 : vector<96x384xf32>
    %12 = arith.truncf %11 : vector<96x384xf32> to vector<96x384xbf16>
    %c0_11 = arith.constant 0 : index
    %c0_12 = arith.constant 0 : index
    %13 = vector.load %arg12[%c0_11, %c0_12] : memref<96x768xbf16, #tpu.memory_space<vmem>>, vector<96x384xbf16>
    tpu.vector_store %arg12[%c0_11, %c0_12], %12 {strides = array<i32>} : memref<96x768xbf16, #tpu.memory_space<vmem>>, vector<96x384xbf16>,
    %c0_13 = arith.constant 0 : index
    %c384 = arith.constant 384 : index
    %14 = vector.load %arg7[%c0_13, %c384] : memref<1x768xf32, #tpu.memory_space<vmem>>, vector<1x384xf32>
    %15 = vector.broadcast %14 : vector<1x384xf32> to vector<96x384xf32>
    %16 = arith.addf %8, %15 : vector<96x384xf32>
    %17 = arith.truncf %16 : vector<96x384xf32> to vector<96x384xbf16>
    %c0_14 = arith.constant 0 : index
    %c384_15 = arith.constant 384 : index
    %18 = vector.load %arg12[%c0_14, %c384_15] : memref<96x768xbf16, #tpu.memory_space<vmem>>, vector<96x384xbf16>
    tpu.vector_store %arg12[%c0_14, %c384_15], %17 {strides = array<i32>} : memref<96x768xbf16, #tpu.memory_space<vmem>>, vector<96x384xbf16>,
    %c0_16 = arith.constant 0 : index
    %c0_17 = arith.constant 0 : index
    %19 = vector.load %arg5[%c0_16, %c0_17] : memref<128x384xbf16, #tpu.memory_space<vmem>>, vector<128x384xbf16>
    %c0_18 = arith.constant 0 : index
    %c0_19 = arith.constant 0 : index
    %20 = vector.load %arg6[%c0_18, %c0_19] : memref<128x384xbf16, #tpu.memory_space<vmem>>, vector<128x384xbf16>
    %c0_20 = arith.constant 0 : index
    %c0_21 = arith.constant 0 : index
    %21 = vector.load %arg8[%c0_20, %c0_21] : memref<1x256xf32, #tpu.memory_space<vmem>>, vector<1x128xf32>
    %22 = vector.shape_cast %21 : vector<1x128xf32> to vector<1x128xf32>
    %23 = vector.broadcast %22 : vector<1x128xf32> to vector<16x128xf32>
    %c0_22 = arith.constant 0 : index
    %c128 = arith.constant 128 : index
    %24 = vector.load %arg8[%c0_22, %c128] : memref<1x256xf32, #tpu.memory_space<vmem>>, vector<1x128xf32>
    %25 = vector.shape_cast %24 : vector<1x128xf32> to vector<1x128xf32>
    %26 = vector.broadcast %25 : vector<1x128xf32> to vector<16x128xf32>
    %c0_i32_23 = arith.constant 0 : i32
    %c0_24 = arith.constant 0 : index
    %c0_25 = arith.constant 0 : index
    %27 = vector.load %arg13[%c0_24, %c0_25] : memref<16x128xf32, #tpu.memory_space<vmem>>, vector<16x128xf32>
    %c0_26 = arith.constant 0 : index
    %c0_27 = arith.constant 0 : index
    %28 = vector.load %arg14[%c0_26, %c0_27] : memref<16x128xf32, #tpu.memory_space<vmem>>, vector<16x128xf32>
    %c16_i32 = arith.constant 16 : i32
    %29 = arith.muli %c0_i32_23, %c16_i32 : i32
    %30 = tpu.assume_multiple %29, 16 : i32
    %31 = arith.index_cast %30 : i32 to index
    %c0_28 = arith.constant 0 : index
    %32 = vector.load %arg12[%31, %c0_28] : memref<96x768xbf16, #tpu.memory_space<vmem>>, vector<16x768xbf16>
    %33 = arith.truncf %27 : vector<16x128xf32> to vector<16x128xbf16>
    %cst_29 = arith.constant dense<0.000000e+00> : vector<16x384xf32>
    %34 = tpu.matmul %33, %19, %cst_29 {dimension_numbers = #tpu.dot_dimension_numbers<[1], [0], [0], [1], [0, 0, 1, 1], [], []>} : vector<16x128xbf16>, vector<128x384xbf16>, vector<16x384xf32> -> vector<16x384xf32>
    %35 = arith.truncf %28 : vector<16x128xf32> to vector<16x128xbf16>
    %cst_30 = arith.constant dense<0.000000e+00> : vector<16x384xf32>
    %36 = tpu.matmul %35, %20, %cst_30 {dimension_numbers = #tpu.dot_dimension_numbers<[1], [0], [0], [1], [0, 0, 1, 1], [], []>} : vector<16x128xbf16>, vector<128x384xbf16>, vector<16x384xf32> -> vector<16x384xf32>
    %37 = vector.extract_strided_slice %32 {offsets = [0, 0], sizes = [16, 128], strides = [1, 1]} : vector<16x768xbf16> to vector<16x128xbf16>
    %38 = vector.extract_strided_slice %34 {offsets = [0, 0], sizes = [16, 128], strides = [1, 1]} : vector<16x384xf32> to vector<16x128xf32>
    %39 = arith.extf %37 : vector<16x128xbf16> to vector<16x128xf32>
    %40 = arith.addf %39, %38 : vector<16x128xf32>
    %41 = arith.negf %40 : vector<16x128xf32>
    %42 = math.exp %41 : vector<16x128xf32>
    %cst_31 = arith.constant 1.000000e+00 : f32
    %43 = vector.broadcast %cst_31 : f32 to vector<16x128xf32>
    %44 = arith.addf %43, %42 : vector<16x128xf32>
    %45 = arith.divf %43, %44 : vector<16x128xf32>
    %46 = vector.extract_strided_slice %32 {offsets = [0, 128], sizes = [16, 128], strides = [1, 1]} : vector<16x768xbf16> to vector<16x128xbf16>
    %47 = vector.extract_strided_slice %34 {offsets = [0, 128], sizes = [16, 128], strides = [1, 1]} : vector<16x384xf32> to vector<16x128xf32>
    %48 = arith.extf %46 : vector<16x128xbf16> to vector<16x128xf32>
    %49 = arith.addf %48, %47 : vector<16x128xf32>
    %50 = arith.negf %49 : vector<16x128xf32>
    %51 = math.exp %50 : vector<16x128xf32>
    %cst_32 = arith.constant 1.000000e+00 : f32
    %52 = vector.broadcast %cst_32 : f32 to vector<16x128xf32>
    %53 = arith.addf %52, %51 : vector<16x128xf32>
    %54 = arith.divf %52, %53 : vector<16x128xf32>
    %55 = vector.extract_strided_slice %32 {offsets = [0, 256], sizes = [16, 128], strides = [1, 1]} : vector<16x768xbf16> to vector<16x128xbf16>
    %56 = vector.extract_strided_slice %34 {offsets = [0, 256], sizes = [16, 128], strides = [1, 1]} : vector<16x384xf32> to vector<16x128xf32>
    %57 = arith.addf %56, %23 : vector<16x128xf32>
    %58 = arith.mulf %45, %57 : vector<16x128xf32>
    %59 = arith.extf %55 : vector<16x128xbf16> to vector<16x128xf32>
    %60 = arith.addf %59, %58 : vector<16x128xf32>
    %61 = math.tanh %60 : vector<16x128xf32>
    %cst_33 = arith.constant 1.000000e+00 : f32
    %62 = vector.broadcast %cst_33 : f32 to vector<16x128xf32>
    %63 = arith.subf %62, %54 : vector<16x128xf32>
    %64 = arith.mulf %63, %61 : vector<16x128xf32>
    %65 = arith.mulf %54, %27 : vector<16x128xf32>
    %66 = arith.addf %64, %65 : vector<16x128xf32>
    %67 = vector.extract_strided_slice %32 {offsets = [0, 384], sizes = [16, 128], strides = [1, 1]} : vector<16x768xbf16> to vector<16x128xbf16>
    %68 = vector.extract_strided_slice %36 {offsets = [0, 0], sizes = [16, 128], strides = [1, 1]} : vector<16x384xf32> to vector<16x128xf32>
    %69 = arith.extf %67 : vector<16x128xbf16> to vector<16x128xf32>
    %70 = arith.addf %69, %68 : vector<16x128xf32>
    %71 = arith.negf %70 : vector<16x128xf32>
    %72 = math.exp %71 : vector<16x128xf32>
    %cst_34 = arith.constant 1.000000e+00 : f32
    %73 = vector.broadcast %cst_34 : f32 to vector<16x128xf32>
    %74 = arith.addf %73, %72 : vector<16x128xf32>
    %75 = arith.divf %73, %74 : vector<16x128xf32>
    %76 = vector.extract_strided_slice %32 {offsets = [0, 512], sizes = [16, 128], strides = [1, 1]} : vector<16x768xbf16> to vector<16x128xbf16>
    %77 = vector.extract_strided_slice %36 {offsets = [0, 128], sizes = [16, 128], strides = [1, 1]} : vector<16x384xf32> to vector<16x128xf32>
    %78 = arith.extf %76 : vector<16x128xbf16> to vector<16x128xf32>
    %79 = arith.addf %78, %77 : vector<16x128xf32>
    %80 = arith.negf %79 : vector<16x128xf32>
    %81 = math.exp %80 : vector<16x128xf32>
    %cst_35 = arith.constant 1.000000e+00 : f32
    %82 = vector.broadcast %cst_35 : f32 to vector<16x128xf32>
    %83 = arith.addf %82, %81 : vector<16x128xf32>
    %84 = arith.divf %82, %83 : vector<16x128xf32>
    %85 = vector.extract_strided_slice %32 {offsets = [0, 640], sizes = [16, 128], strides = [1, 1]} : vector<16x768xbf16> to vector<16x128xbf16>
    %86 = vector.extract_strided_slice %36 {offsets = [0, 256], sizes = [16, 128], strides = [1, 1]} : vector<16x384xf32> to vector<16x128xf32>
    %87 = arith.addf %86, %26 : vector<16x128xf32>
    %88 = arith.mulf %75, %87 : vector<16x128xf32>
    %89 = arith.extf %85 : vector<16x128xbf16> to vector<16x128xf32>
    %90 = arith.addf %89, %88 : vector<16x128xf32>
    %91 = math.tanh %90 : vector<16x128xf32>
    %cst_36 = arith.constant 1.000000e+00 : f32
    %92 = vector.broadcast %cst_36 : f32 to vector<16x128xf32>
    %93 = arith.subf %92, %84 : vector<16x128xf32>
    %94 = arith.mulf %93, %91 : vector<16x128xf32>
    %95 = arith.mulf %84, %28 : vector<16x128xf32>
    %96 = arith.addf %94, %95 : vector<16x128xf32>
    %c6_i32 = arith.constant 6 : i32
    %97 = arith.muli %arg0, %c6_i32 : i32
    %98 = arith.addi %97, %c0_i32_23 : i32
    %c8_i32 = arith.constant 8 : i32
    %99 = arith.cmpi slt, %98, %c8_i32 : i32
    %100 = arith.select %99, %66, %27 : vector<16x128xf32>
    %101 = arith.select %99, %96, %28 : vector<16x128xf32>
    %c0_37 = arith.constant 0 : index
    %c0_38 = arith.constant 0 : index
    %102 = vector.load %arg13[%c0_37, %c0_38] : memref<16x128xf32, #tpu.memory_space<vmem>>, vector<16x128xf32>
    tpu.vector_store %arg13[%c0_37, %c0_38], %100 {strides = array<i32>} : memref<16x128xf32, #tpu.memory_space<vmem>>, vector<16x128xf32>,
    %c0_39 = arith.constant 0 : index
    %c0_40 = arith.constant 0 : index
    %103 = vector.load %arg14[%c0_39, %c0_40] : memref<16x128xf32, #tpu.memory_space<vmem>>, vector<16x128xf32>
    tpu.vector_store %arg14[%c0_39, %c0_40], %101 {strides = array<i32>} : memref<16x128xf32, #tpu.memory_space<vmem>>, vector<16x128xf32>,
    %104 = tpu.concatenate %100, %101 in 1 : vector<16x128xf32>, vector<16x128xf32> -> vector<16x256xf32>
    %105 = arith.truncf %104 : vector<16x256xf32> to vector<16x256xbf16>
    %106 = arith.index_cast %c0_i32_23 : i32 to index
    %c0_41 = arith.constant 0 : index
    %c0_42 = arith.constant 0 : index
    %107 = vector.load %arg10[%106, %c0_41, %c0_42] : memref<6x16x256xbf16, #tpu.memory_space<vmem>>, vector<1x16x256xbf16>
    %108 = vector.shape_cast %107 : vector<1x16x256xbf16> to vector<16x256xbf16>
    %109 = vector.shape_cast %105 : vector<16x256xbf16> to vector<1x16x256xbf16>
    tpu.vector_store %arg10[%106, %c0_41, %c0_42], %109 {strides = array<i32>} : memref<6x16x256xbf16, #tpu.memory_space<vmem>>, vector<1x16x256xbf16>,
    %c1_i32 = arith.constant 1 : i32
    %c0_43 = arith.constant 0 : index
    %c0_44 = arith.constant 0 : index
    %110 = vector.load %arg13[%c0_43, %c0_44] : memref<16x128xf32, #tpu.memory_space<vmem>>, vector<16x128xf32>
    %c0_45 = arith.constant 0 : index
    %c0_46 = arith.constant 0 : index
    %111 = vector.load %arg14[%c0_45, %c0_46] : memref<16x128xf32, #tpu.memory_space<vmem>>, vector<16x128xf32>
    %c16_i32_47 = arith.constant 16 : i32
    %112 = arith.muli %c1_i32, %c16_i32_47 : i32
    %113 = tpu.assume_multiple %112, 16 : i32
    %114 = arith.index_cast %113 : i32 to index
    %c0_48 = arith.constant 0 : index
    %115 = vector.load %arg12[%114, %c0_48] : memref<96x768xbf16, #tpu.memory_space<vmem>>, vector<16x768xbf16>
    %116 = arith.truncf %110 : vector<16x128xf32> to vector<16x128xbf16>
    %cst_49 = arith.constant dense<0.000000e+00> : vector<16x384xf32>
    %117 = tpu.matmul %116, %19, %cst_49 {dimension_numbers = #tpu.dot_dimension_numbers<[1], [0], [0], [1], [0, 0, 1, 1], [], []>} : vector<16x128xbf16>, vector<128x384xbf16>, vector<16x384xf32> -> vector<16x384xf32>
    %118 = arith.truncf %111 : vector<16x128xf32> to vector<16x128xbf16>
    %cst_50 = arith.constant dense<0.000000e+00> : vector<16x384xf32>
    %119 = tpu.matmul %118, %20, %cst_50 {dimension_numbers = #tpu.dot_dimension_numbers<[1], [0], [0], [1], [0, 0, 1, 1], [], []>} : vector<16x128xbf16>, vector<128x384xbf16>, vector<16x384xf32> -> vector<16x384xf32>
    %120 = vector.extract_strided_slice %115 {offsets = [0, 0], sizes = [16, 128], strides = [1, 1]} : vector<16x768xbf16> to vector<16x128xbf16>
    %121 = vector.extract_strided_slice %117 {offsets = [0, 0], sizes = [16, 128], strides = [1, 1]} : vector<16x384xf32> to vector<16x128xf32>
    %122 = arith.extf %120 : vector<16x128xbf16> to vector<16x128xf32>
    %123 = arith.addf %122, %121 : vector<16x128xf32>
    %124 = arith.negf %123 : vector<16x128xf32>
    %125 = math.exp %124 : vector<16x128xf32>
    %cst_51 = arith.constant 1.000000e+00 : f32
    %126 = vector.broadcast %cst_51 : f32 to vector<16x128xf32>
    %127 = arith.addf %126, %125 : vector<16x128xf32>
    %128 = arith.divf %126, %127 : vector<16x128xf32>
    %129 = vector.extract_strided_slice %115 {offsets = [0, 128], sizes = [16, 128], strides = [1, 1]} : vector<16x768xbf16> to vector<16x128xbf16>
    %130 = vector.extract_strided_slice %117 {offsets = [0, 128], sizes = [16, 128], strides = [1, 1]} : vector<16x384xf32> to vector<16x128xf32>
    %131 = arith.extf %129 : vector<16x128xbf16> to vector<16x128xf32>
    %132 = arith.addf %131, %130 : vector<16x128xf32>
    %133 = arith.negf %132 : vector<16x128xf32>
    %134 = math.exp %133 : vector<16x128xf32>
    %cst_52 = arith.constant 1.000000e+00 : f32
    %135 = vector.broadcast %cst_52 : f32 to vector<16x128xf32>
    %136 = arith.addf %135, %134 : vector<16x128xf32>
    %137 = arith.divf %135, %136 : vector<16x128xf32>
    %138 = vector.extract_strided_slice %115 {offsets = [0, 256], sizes = [16, 128], strides = [1, 1]} : vector<16x768xbf16> to vector<16x128xbf16>
    %139 = vector.extract_strided_slice %117 {offsets = [0, 256], sizes = [16, 128], strides = [1, 1]} : vector<16x384xf32> to vector<16x128xf32>
    %140 = arith.addf %139, %23 : vector<16x128xf32>
    %141 = arith.mulf %128, %140 : vector<16x128xf32>
    %142 = arith.extf %138 : vector<16x128xbf16> to vector<16x128xf32>
    %143 = arith.addf %142, %141 : vector<16x128xf32>
    %144 = math.tanh %143 : vector<16x128xf32>
    %cst_53 = arith.constant 1.000000e+00 : f32
    %145 = vector.broadcast %cst_53 : f32 to vector<16x128xf32>
    %146 = arith.subf %145, %137 : vector<16x128xf32>
    %147 = arith.mulf %146, %144 : vector<16x128xf32>
    %148 = arith.mulf %137, %110 : vector<16x128xf32>
    %149 = arith.addf %147, %148 : vector<16x128xf32>
    %150 = vector.extract_strided_slice %115 {offsets = [0, 384], sizes = [16, 128], strides = [1, 1]} : vector<16x768xbf16> to vector<16x128xbf16>
    %151 = vector.extract_strided_slice %119 {offsets = [0, 0], sizes = [16, 128], strides = [1, 1]} : vector<16x384xf32> to vector<16x128xf32>
    %152 = arith.extf %150 : vector<16x128xbf16> to vector<16x128xf32>
    %153 = arith.addf %152, %151 : vector<16x128xf32>
    %154 = arith.negf %153 : vector<16x128xf32>
    %155 = math.exp %154 : vector<16x128xf32>
    %cst_54 = arith.constant 1.000000e+00 : f32
    %156 = vector.broadcast %cst_54 : f32 to vector<16x128xf32>
    %157 = arith.addf %156, %155 : vector<16x128xf32>
    %158 = arith.divf %156, %157 : vector<16x128xf32>
    %159 = vector.extract_strided_slice %115 {offsets = [0, 512], sizes = [16, 128], strides = [1, 1]} : vector<16x768xbf16> to vector<16x128xbf16>
    %160 = vector.extract_strided_slice %119 {offsets = [0, 128], sizes = [16, 128], strides = [1, 1]} : vector<16x384xf32> to vector<16x128xf32>
    %161 = arith.extf %159 : vector<16x128xbf16> to vector<16x128xf32>
    %162 = arith.addf %161, %160 : vector<16x128xf32>
    %163 = arith.negf %162 : vector<16x128xf32>
    %164 = math.exp %163 : vector<16x128xf32>
    %cst_55 = arith.constant 1.000000e+00 : f32
    %165 = vector.broadcast %cst_55 : f32 to vector<16x128xf32>
    %166 = arith.addf %165, %164 : vector<16x128xf32>
    %167 = arith.divf %165, %166 : vector<16x128xf32>
    %168 = vector.extract_strided_slice %115 {offsets = [0, 640], sizes = [16, 128], strides = [1, 1]} : vector<16x768xbf16> to vector<16x128xbf16>
    %169 = vector.extract_strided_slice %119 {offsets = [0, 256], sizes = [16, 128], strides = [1, 1]} : vector<16x384xf32> to vector<16x128xf32>
    %170 = arith.addf %169, %26 : vector<16x128xf32>
    %171 = arith.mulf %158, %170 : vector<16x128xf32>
    %172 = arith.extf %168 : vector<16x128xbf16> to vector<16x128xf32>
    %173 = arith.addf %172, %171 : vector<16x128xf32>
    %174 = math.tanh %173 : vector<16x128xf32>
    %cst_56 = arith.constant 1.000000e+00 : f32
    %175 = vector.broadcast %cst_56 : f32 to vector<16x128xf32>
    %176 = arith.subf %175, %167 : vector<16x128xf32>
    %177 = arith.mulf %176, %174 : vector<16x128xf32>
    %178 = arith.mulf %167, %111 : vector<16x128xf32>
    %179 = arith.addf %177, %178 : vector<16x128xf32>
    %c6_i32_57 = arith.constant 6 : i32
    %180 = arith.muli %arg0, %c6_i32_57 : i32
    %181 = arith.addi %180, %c1_i32 : i32
    %c8_i32_58 = arith.constant 8 : i32
    %182 = arith.cmpi slt, %181, %c8_i32_58 : i32
    %183 = arith.select %182, %149, %110 : vector<16x128xf32>
    %184 = arith.select %182, %179, %111 : vector<16x128xf32>
    %c0_59 = arith.constant 0 : index
    %c0_60 = arith.constant 0 : index
    %185 = vector.load %arg13[%c0_59, %c0_60] : memref<16x128xf32, #tpu.memory_space<vmem>>, vector<16x128xf32>
    tpu.vector_store %arg13[%c0_59, %c0_60], %183 {strides = array<i32>} : memref<16x128xf32, #tpu.memory_space<vmem>>, vector<16x128xf32>,
    %c0_61 = arith.constant 0 : index
    %c0_62 = arith.constant 0 : index
    %186 = vector.load %arg14[%c0_61, %c0_62] : memref<16x128xf32, #tpu.memory_space<vmem>>, vector<16x128xf32>
    tpu.vector_store %arg14[%c0_61, %c0_62], %184 {strides = array<i32>} : memref<16x128xf32, #tpu.memory_space<vmem>>, vector<16x128xf32>,
    %187 = tpu.concatenate %183, %184 in 1 : vector<16x128xf32>, vector<16x128xf32> -> vector<16x256xf32>
    %188 = arith.truncf %187 : vector<16x256xf32> to vector<16x256xbf16>
    %189 = arith.index_cast %c1_i32 : i32 to index
    %c0_63 = arith.constant 0 : index
    %c0_64 = arith.constant 0 : index
    %190 = vector.load %arg10[%189, %c0_63, %c0_64] : memref<6x16x256xbf16, #tpu.memory_space<vmem>>, vector<1x16x256xbf16>
    %191 = vector.shape_cast %190 : vector<1x16x256xbf16> to vector<16x256xbf16>
    %192 = vector.shape_cast %188 : vector<16x256xbf16> to vector<1x16x256xbf16>
    tpu.vector_store %arg10[%189, %c0_63, %c0_64], %192 {strides = array<i32>} : memref<6x16x256xbf16, #tpu.memory_space<vmem>>, vector<1x16x256xbf16>,
    %c2_i32 = arith.constant 2 : i32
    %c0_65 = arith.constant 0 : index
    %c0_66 = arith.constant 0 : index
    %193 = vector.load %arg13[%c0_65, %c0_66] : memref<16x128xf32, #tpu.memory_space<vmem>>, vector<16x128xf32>
    %c0_67 = arith.constant 0 : index
    %c0_68 = arith.constant 0 : index
    %194 = vector.load %arg14[%c0_67, %c0_68] : memref<16x128xf32, #tpu.memory_space<vmem>>, vector<16x128xf32>
    %c16_i32_69 = arith.constant 16 : i32
    %195 = arith.muli %c2_i32, %c16_i32_69 : i32
    %196 = tpu.assume_multiple %195, 16 : i32
    %197 = arith.index_cast %196 : i32 to index
    %c0_70 = arith.constant 0 : index
    %198 = vector.load %arg12[%197, %c0_70] : memref<96x768xbf16, #tpu.memory_space<vmem>>, vector<16x768xbf16>
    %199 = arith.truncf %193 : vector<16x128xf32> to vector<16x128xbf16>
    %cst_71 = arith.constant dense<0.000000e+00> : vector<16x384xf32>
    %200 = tpu.matmul %199, %19, %cst_71 {dimension_numbers = #tpu.dot_dimension_numbers<[1], [0], [0], [1], [0, 0, 1, 1], [], []>} : vector<16x128xbf16>, vector<128x384xbf16>, vector<16x384xf32> -> vector<16x384xf32>
    %201 = arith.truncf %194 : vector<16x128xf32> to vector<16x128xbf16>
    %cst_72 = arith.constant dense<0.000000e+00> : vector<16x384xf32>
    %202 = tpu.matmul %201, %20, %cst_72 {dimension_numbers = #tpu.dot_dimension_numbers<[1], [0], [0], [1], [0, 0, 1, 1], [], []>} : vector<16x128xbf16>, vector<128x384xbf16>, vector<16x384xf32> -> vector<16x384xf32>
    %203 = vector.extract_strided_slice %198 {offsets = [0, 0], sizes = [16, 128], strides = [1, 1]} : vector<16x768xbf16> to vector<16x128xbf16>
    %204 = vector.extract_strided_slice %200 {offsets = [0, 0], sizes = [16, 128], strides = [1, 1]} : vector<16x384xf32> to vector<16x128xf32>
    %205 = arith.extf %203 : vector<16x128xbf16> to vector<16x128xf32>
    %206 = arith.addf %205, %204 : vector<16x128xf32>
    %207 = arith.negf %206 : vector<16x128xf32>
    %208 = math.exp %207 : vector<16x128xf32>
    %cst_73 = arith.constant 1.000000e+00 : f32
    %209 = vector.broadcast %cst_73 : f32 to vector<16x128xf32>
    %210 = arith.addf %209, %208 : vector<16x128xf32>
    %211 = arith.divf %209, %210 : vector<16x128xf32>
    %212 = vector.extract_strided_slice %198 {offsets = [0, 128], sizes = [16, 128], strides = [1, 1]} : vector<16x768xbf16> to vector<16x128xbf16>
    %213 = vector.extract_strided_slice %200 {offsets = [0, 128], sizes = [16, 128], strides = [1, 1]} : vector<16x384xf32> to vector<16x128xf32>
    %214 = arith.extf %212 : vector<16x128xbf16> to vector<16x128xf32>
    %215 = arith.addf %214, %213 : vector<16x128xf32>
    %216 = arith.negf %215 : vector<16x128xf32>
    %217 = math.exp %216 : vector<16x128xf32>
    %cst_74 = arith.constant 1.000000e+00 : f32
    %218 = vector.broadcast %cst_74 : f32 to vector<16x128xf32>
    %219 = arith.addf %218, %217 : vector<16x128xf32>
    %220 = arith.divf %218, %219 : vector<16x128xf32>
    %221 = vector.extract_strided_slice %198 {offsets = [0, 256], sizes = [16, 128], strides = [1, 1]} : vector<16x768xbf16> to vector<16x128xbf16>
    %222 = vector.extract_strided_slice %200 {offsets = [0, 256], sizes = [16, 128], strides = [1, 1]} : vector<16x384xf32> to vector<16x128xf32>
    %223 = arith.addf %222, %23 : vector<16x128xf32>
    %224 = arith.mulf %211, %223 : vector<16x128xf32>
    %225 = arith.extf %221 : vector<16x128xbf16> to vector<16x128xf32>
    %226 = arith.addf %225, %224 : vector<16x128xf32>
    %227 = math.tanh %226 : vector<16x128xf32>
    %cst_75 = arith.constant 1.000000e+00 : f32
    %228 = vector.broadcast %cst_75 : f32 to vector<16x128xf32>
    %229 = arith.subf %228, %220 : vector<16x128xf32>
    %230 = arith.mulf %229, %227 : vector<16x128xf32>
    %231 = arith.mulf %220, %193 : vector<16x128xf32>
    %232 = arith.addf %230, %231 : vector<16x128xf32>
    %233 = vector.extract_strided_slice %198 {offsets = [0, 384], sizes = [16, 128], strides = [1, 1]} : vector<16x768xbf16> to vector<16x128xbf16>
    %234 = vector.extract_strided_slice %202 {offsets = [0, 0], sizes = [16, 128], strides = [1, 1]} : vector<16x384xf32> to vector<16x128xf32>
    %235 = arith.extf %233 : vector<16x128xbf16> to vector<16x128xf32>
    %236 = arith.addf %235, %234 : vector<16x128xf32>
    %237 = arith.negf %236 : vector<16x128xf32>
    %238 = math.exp %237 : vector<16x128xf32>
    %cst_76 = arith.constant 1.000000e+00 : f32
    %239 = vector.broadcast %cst_76 : f32 to vector<16x128xf32>
    %240 = arith.addf %239, %238 : vector<16x128xf32>
    %241 = arith.divf %239, %240 : vector<16x128xf32>
    %242 = vector.extract_strided_slice %198 {offsets = [0, 512], sizes = [16, 128], strides = [1, 1]} : vector<16x768xbf16> to vector<16x128xbf16>
    %243 = vector.extract_strided_slice %202 {offsets = [0, 128], sizes = [16, 128], strides = [1, 1]} : vector<16x384xf32> to vector<16x128xf32>
    %244 = arith.extf %242 : vector<16x128xbf16> to vector<16x128xf32>
    %245 = arith.addf %244, %243 : vector<16x128xf32>
    %246 = arith.negf %245 : vector<16x128xf32>
    %247 = math.exp %246 : vector<16x128xf32>
    %cst_77 = arith.constant 1.000000e+00 : f32
    %248 = vector.broadcast %cst_77 : f32 to vector<16x128xf32>
    %249 = arith.addf %248, %247 : vector<16x128xf32>
    %250 = arith.divf %248, %249 : vector<16x128xf32>
    %251 = vector.extract_strided_slice %198 {offsets = [0, 640], sizes = [16, 128], strides = [1, 1]} : vector<16x768xbf16> to vector<16x128xbf16>
    %252 = vector.extract_strided_slice %202 {offsets = [0, 256], sizes = [16, 128], strides = [1, 1]} : vector<16x384xf32> to vector<16x128xf32>
    %253 = arith.addf %252, %26 : vector<16x128xf32>
    %254 = arith.mulf %241, %253 : vector<16x128xf32>
    %255 = arith.extf %251 : vector<16x128xbf16> to vector<16x128xf32>
    %256 = arith.addf %255, %254 : vector<16x128xf32>
    %257 = math.tanh %256 : vector<16x128xf32>
    %cst_78 = arith.constant 1.000000e+00 : f32
    %258 = vector.broadcast %cst_78 : f32 to vector<16x128xf32>
    %259 = arith.subf %258, %250 : vector<16x128xf32>
    %260 = arith.mulf %259, %257 : vector<16x128xf32>
    %261 = arith.mulf %250, %194 : vector<16x128xf32>
    %262 = arith.addf %260, %261 : vector<16x128xf32>
    %c6_i32_79 = arith.constant 6 : i32
    %263 = arith.muli %arg0, %c6_i32_79 : i32
    %264 = arith.addi %263, %c2_i32 : i32
    %c8_i32_80 = arith.constant 8 : i32
    %265 = arith.cmpi slt, %264, %c8_i32_80 : i32
    %266 = arith.select %265, %232, %193 : vector<16x128xf32>
    %267 = arith.select %265, %262, %194 : vector<16x128xf32>
    %c0_81 = arith.constant 0 : index
    %c0_82 = arith.constant 0 : index
    %268 = vector.load %arg13[%c0_81, %c0_82] : memref<16x128xf32, #tpu.memory_space<vmem>>, vector<16x128xf32>
    tpu.vector_store %arg13[%c0_81, %c0_82], %266 {strides = array<i32>} : memref<16x128xf32, #tpu.memory_space<vmem>>, vector<16x128xf32>,
    %c0_83 = arith.constant 0 : index
    %c0_84 = arith.constant 0 : index
    %269 = vector.load %arg14[%c0_83, %c0_84] : memref<16x128xf32, #tpu.memory_space<vmem>>, vector<16x128xf32>
    tpu.vector_store %arg14[%c0_83, %c0_84], %267 {strides = array<i32>} : memref<16x128xf32, #tpu.memory_space<vmem>>, vector<16x128xf32>,
    %270 = tpu.concatenate %266, %267 in 1 : vector<16x128xf32>, vector<16x128xf32> -> vector<16x256xf32>
    %271 = arith.truncf %270 : vector<16x256xf32> to vector<16x256xbf16>
    %272 = arith.index_cast %c2_i32 : i32 to index
    %c0_85 = arith.constant 0 : index
    %c0_86 = arith.constant 0 : index
    %273 = vector.load %arg10[%272, %c0_85, %c0_86] : memref<6x16x256xbf16, #tpu.memory_space<vmem>>, vector<1x16x256xbf16>
    %274 = vector.shape_cast %273 : vector<1x16x256xbf16> to vector<16x256xbf16>
    %275 = vector.shape_cast %271 : vector<16x256xbf16> to vector<1x16x256xbf16>
    tpu.vector_store %arg10[%272, %c0_85, %c0_86], %275 {strides = array<i32>} : memref<6x16x256xbf16, #tpu.memory_space<vmem>>, vector<1x16x256xbf16>,
    %c3_i32 = arith.constant 3 : i32
    %c0_87 = arith.constant 0 : index
    %c0_88 = arith.constant 0 : index
    %276 = vector.load %arg13[%c0_87, %c0_88] : memref<16x128xf32, #tpu.memory_space<vmem>>, vector<16x128xf32>
    %c0_89 = arith.constant 0 : index
    %c0_90 = arith.constant 0 : index
    %277 = vector.load %arg14[%c0_89, %c0_90] : memref<16x128xf32, #tpu.memory_space<vmem>>, vector<16x128xf32>
    %c16_i32_91 = arith.constant 16 : i32
    %278 = arith.muli %c3_i32, %c16_i32_91 : i32
    %279 = tpu.assume_multiple %278, 16 : i32
    %280 = arith.index_cast %279 : i32 to index
    %c0_92 = arith.constant 0 : index
    %281 = vector.load %arg12[%280, %c0_92] : memref<96x768xbf16, #tpu.memory_space<vmem>>, vector<16x768xbf16>
    %282 = arith.truncf %276 : vector<16x128xf32> to vector<16x128xbf16>
    %cst_93 = arith.constant dense<0.000000e+00> : vector<16x384xf32>
    %283 = tpu.matmul %282, %19, %cst_93 {dimension_numbers = #tpu.dot_dimension_numbers<[1], [0], [0], [1], [0, 0, 1, 1], [], []>} : vector<16x128xbf16>, vector<128x384xbf16>, vector<16x384xf32> -> vector<16x384xf32>
    %284 = arith.truncf %277 : vector<16x128xf32> to vector<16x128xbf16>
    %cst_94 = arith.constant dense<0.000000e+00> : vector<16x384xf32>
    %285 = tpu.matmul %284, %20, %cst_94 {dimension_numbers = #tpu.dot_dimension_numbers<[1], [0], [0], [1], [0, 0, 1, 1], [], []>} : vector<16x128xbf16>, vector<128x384xbf16>, vector<16x384xf32> -> vector<16x384xf32>
    %286 = vector.extract_strided_slice %281 {offsets = [0, 0], sizes = [16, 128], strides = [1, 1]} : vector<16x768xbf16> to vector<16x128xbf16>
    %287 = vector.extract_strided_slice %283 {offsets = [0, 0], sizes = [16, 128], strides = [1, 1]} : vector<16x384xf32> to vector<16x128xf32>
    %288 = arith.extf %286 : vector<16x128xbf16> to vector<16x128xf32>
    %289 = arith.addf %288, %287 : vector<16x128xf32>
    %290 = arith.negf %289 : vector<16x128xf32>
    %291 = math.exp %290 : vector<16x128xf32>
    %cst_95 = arith.constant 1.000000e+00 : f32
    %292 = vector.broadcast %cst_95 : f32 to vector<16x128xf32>
    %293 = arith.addf %292, %291 : vector<16x128xf32>
    %294 = arith.divf %292, %293 : vector<16x128xf32>
    %295 = vector.extract_strided_slice %281 {offsets = [0, 128], sizes = [16, 128], strides = [1, 1]} : vector<16x768xbf16> to vector<16x128xbf16>
    %296 = vector.extract_strided_slice %283 {offsets = [0, 128], sizes = [16, 128], strides = [1, 1]} : vector<16x384xf32> to vector<16x128xf32>
    %297 = arith.extf %295 : vector<16x128xbf16> to vector<16x128xf32>
    %298 = arith.addf %297, %296 : vector<16x128xf32>
    %299 = arith.negf %298 : vector<16x128xf32>
    %300 = math.exp %299 : vector<16x128xf32>
    %cst_96 = arith.constant 1.000000e+00 : f32
    %301 = vector.broadcast %cst_96 : f32 to vector<16x128xf32>
    %302 = arith.addf %301, %300 : vector<16x128xf32>
    %303 = arith.divf %301, %302 : vector<16x128xf32>
    %304 = vector.extract_strided_slice %281 {offsets = [0, 256], sizes = [16, 128], strides = [1, 1]} : vector<16x768xbf16> to vector<16x128xbf16>
    %305 = vector.extract_strided_slice %283 {offsets = [0, 256], sizes = [16, 128], strides = [1, 1]} : vector<16x384xf32> to vector<16x128xf32>
    %306 = arith.addf %305, %23 : vector<16x128xf32>
    %307 = arith.mulf %294, %306 : vector<16x128xf32>
    %308 = arith.extf %304 : vector<16x128xbf16> to vector<16x128xf32>
    %309 = arith.addf %308, %307 : vector<16x128xf32>
    %310 = math.tanh %309 : vector<16x128xf32>
    %cst_97 = arith.constant 1.000000e+00 : f32
    %311 = vector.broadcast %cst_97 : f32 to vector<16x128xf32>
    %312 = arith.subf %311, %303 : vector<16x128xf32>
    %313 = arith.mulf %312, %310 : vector<16x128xf32>
    %314 = arith.mulf %303, %276 : vector<16x128xf32>
    %315 = arith.addf %313, %314 : vector<16x128xf32>
    %316 = vector.extract_strided_slice %281 {offsets = [0, 384], sizes = [16, 128], strides = [1, 1]} : vector<16x768xbf16> to vector<16x128xbf16>
    %317 = vector.extract_strided_slice %285 {offsets = [0, 0], sizes = [16, 128], strides = [1, 1]} : vector<16x384xf32> to vector<16x128xf32>
    %318 = arith.extf %316 : vector<16x128xbf16> to vector<16x128xf32>
    %319 = arith.addf %318, %317 : vector<16x128xf32>
    %320 = arith.negf %319 : vector<16x128xf32>
    %321 = math.exp %320 : vector<16x128xf32>
    %cst_98 = arith.constant 1.000000e+00 : f32
    %322 = vector.broadcast %cst_98 : f32 to vector<16x128xf32>
    %323 = arith.addf %322, %321 : vector<16x128xf32>
    %324 = arith.divf %322, %323 : vector<16x128xf32>
    %325 = vector.extract_strided_slice %281 {offsets = [0, 512], sizes = [16, 128], strides = [1, 1]} : vector<16x768xbf16> to vector<16x128xbf16>
    %326 = vector.extract_strided_slice %285 {offsets = [0, 128], sizes = [16, 128], strides = [1, 1]} : vector<16x384xf32> to vector<16x128xf32>
    %327 = arith.extf %325 : vector<16x128xbf16> to vector<16x128xf32>
    %328 = arith.addf %327, %326 : vector<16x128xf32>
    %329 = arith.negf %328 : vector<16x128xf32>
    %330 = math.exp %329 : vector<16x128xf32>
    %cst_99 = arith.constant 1.000000e+00 : f32
    %331 = vector.broadcast %cst_99 : f32 to vector<16x128xf32>
    %332 = arith.addf %331, %330 : vector<16x128xf32>
    %333 = arith.divf %331, %332 : vector<16x128xf32>
    %334 = vector.extract_strided_slice %281 {offsets = [0, 640], sizes = [16, 128], strides = [1, 1]} : vector<16x768xbf16> to vector<16x128xbf16>
    %335 = vector.extract_strided_slice %285 {offsets = [0, 256], sizes = [16, 128], strides = [1, 1]} : vector<16x384xf32> to vector<16x128xf32>
    %336 = arith.addf %335, %26 : vector<16x128xf32>
    %337 = arith.mulf %324, %336 : vector<16x128xf32>
    %338 = arith.extf %334 : vector<16x128xbf16> to vector<16x128xf32>
    %339 = arith.addf %338, %337 : vector<16x128xf32>
    %340 = math.tanh %339 : vector<16x128xf32>
    %cst_100 = arith.constant 1.000000e+00 : f32
    %341 = vector.broadcast %cst_100 : f32 to vector<16x128xf32>
    %342 = arith.subf %341, %333 : vector<16x128xf32>
    %343 = arith.mulf %342, %340 : vector<16x128xf32>
    %344 = arith.mulf %333, %277 : vector<16x128xf32>
    %345 = arith.addf %343, %344 : vector<16x128xf32>
    %c6_i32_101 = arith.constant 6 : i32
    %346 = arith.muli %arg0, %c6_i32_101 : i32
    %347 = arith.addi %346, %c3_i32 : i32
    %c8_i32_102 = arith.constant 8 : i32
    %348 = arith.cmpi slt, %347, %c8_i32_102 : i32
    %349 = arith.select %348, %315, %276 : vector<16x128xf32>
    %350 = arith.select %348, %345, %277 : vector<16x128xf32>
    %c0_103 = arith.constant 0 : index
    %c0_104 = arith.constant 0 : index
    %351 = vector.load %arg13[%c0_103, %c0_104] : memref<16x128xf32, #tpu.memory_space<vmem>>, vector<16x128xf32>
    tpu.vector_store %arg13[%c0_103, %c0_104], %349 {strides = array<i32>} : memref<16x128xf32, #tpu.memory_space<vmem>>, vector<16x128xf32>,
    %c0_105 = arith.constant 0 : index
    %c0_106 = arith.constant 0 : index
    %352 = vector.load %arg14[%c0_105, %c0_106] : memref<16x128xf32, #tpu.memory_space<vmem>>, vector<16x128xf32>
    tpu.vector_store %arg14[%c0_105, %c0_106], %350 {strides = array<i32>} : memref<16x128xf32, #tpu.memory_space<vmem>>, vector<16x128xf32>,
    %353 = tpu.concatenate %349, %350 in 1 : vector<16x128xf32>, vector<16x128xf32> -> vector<16x256xf32>
    %354 = arith.truncf %353 : vector<16x256xf32> to vector<16x256xbf16>
    %355 = arith.index_cast %c3_i32 : i32 to index
    %c0_107 = arith.constant 0 : index
    %c0_108 = arith.constant 0 : index
    %356 = vector.load %arg10[%355, %c0_107, %c0_108] : memref<6x16x256xbf16, #tpu.memory_space<vmem>>, vector<1x16x256xbf16>
    %357 = vector.shape_cast %356 : vector<1x16x256xbf16> to vector<16x256xbf16>
    %358 = vector.shape_cast %354 : vector<16x256xbf16> to vector<1x16x256xbf16>
    tpu.vector_store %arg10[%355, %c0_107, %c0_108], %358 {strides = array<i32>} : memref<6x16x256xbf16, #tpu.memory_space<vmem>>, vector<1x16x256xbf16>,
    %c4_i32 = arith.constant 4 : i32
    %c0_109 = arith.constant 0 : index
    %c0_110 = arith.constant 0 : index
    %359 = vector.load %arg13[%c0_109, %c0_110] : memref<16x128xf32, #tpu.memory_space<vmem>>, vector<16x128xf32>
    %c0_111 = arith.constant 0 : index
    %c0_112 = arith.constant 0 : index
    %360 = vector.load %arg14[%c0_111, %c0_112] : memref<16x128xf32, #tpu.memory_space<vmem>>, vector<16x128xf32>
    %c16_i32_113 = arith.constant 16 : i32
    %361 = arith.muli %c4_i32, %c16_i32_113 : i32
    %362 = tpu.assume_multiple %361, 16 : i32
    %363 = arith.index_cast %362 : i32 to index
    %c0_114 = arith.constant 0 : index
    %364 = vector.load %arg12[%363, %c0_114] : memref<96x768xbf16, #tpu.memory_space<vmem>>, vector<16x768xbf16>
    %365 = arith.truncf %359 : vector<16x128xf32> to vector<16x128xbf16>
    %cst_115 = arith.constant dense<0.000000e+00> : vector<16x384xf32>
    %366 = tpu.matmul %365, %19, %cst_115 {dimension_numbers = #tpu.dot_dimension_numbers<[1], [0], [0], [1], [0, 0, 1, 1], [], []>} : vector<16x128xbf16>, vector<128x384xbf16>, vector<16x384xf32> -> vector<16x384xf32>
    %367 = arith.truncf %360 : vector<16x128xf32> to vector<16x128xbf16>
    %cst_116 = arith.constant dense<0.000000e+00> : vector<16x384xf32>
    %368 = tpu.matmul %367, %20, %cst_116 {dimension_numbers = #tpu.dot_dimension_numbers<[1], [0], [0], [1], [0, 0, 1, 1], [], []>} : vector<16x128xbf16>, vector<128x384xbf16>, vector<16x384xf32> -> vector<16x384xf32>
    %369 = vector.extract_strided_slice %364 {offsets = [0, 0], sizes = [16, 128], strides = [1, 1]} : vector<16x768xbf16> to vector<16x128xbf16>
    %370 = vector.extract_strided_slice %366 {offsets = [0, 0], sizes = [16, 128], strides = [1, 1]} : vector<16x384xf32> to vector<16x128xf32>
    %371 = arith.extf %369 : vector<16x128xbf16> to vector<16x128xf32>
    %372 = arith.addf %371, %370 : vector<16x128xf32>
    %373 = arith.negf %372 : vector<16x128xf32>
    %374 = math.exp %373 : vector<16x128xf32>
    %cst_117 = arith.constant 1.000000e+00 : f32
    %375 = vector.broadcast %cst_117 : f32 to vector<16x128xf32>
    %376 = arith.addf %375, %374 : vector<16x128xf32>
    %377 = arith.divf %375, %376 : vector<16x128xf32>
    %378 = vector.extract_strided_slice %364 {offsets = [0, 128], sizes = [16, 128], strides = [1, 1]} : vector<16x768xbf16> to vector<16x128xbf16>
    %379 = vector.extract_strided_slice %366 {offsets = [0, 128], sizes = [16, 128], strides = [1, 1]} : vector<16x384xf32> to vector<16x128xf32>
    %380 = arith.extf %378 : vector<16x128xbf16> to vector<16x128xf32>
    %381 = arith.addf %380, %379 : vector<16x128xf32>
    %382 = arith.negf %381 : vector<16x128xf32>
    %383 = math.exp %382 : vector<16x128xf32>
    %cst_118 = arith.constant 1.000000e+00 : f32
    %384 = vector.broadcast %cst_118 : f32 to vector<16x128xf32>
    %385 = arith.addf %384, %383 : vector<16x128xf32>
    %386 = arith.divf %384, %385 : vector<16x128xf32>
    %387 = vector.extract_strided_slice %364 {offsets = [0, 256], sizes = [16, 128], strides = [1, 1]} : vector<16x768xbf16> to vector<16x128xbf16>
    %388 = vector.extract_strided_slice %366 {offsets = [0, 256], sizes = [16, 128], strides = [1, 1]} : vector<16x384xf32> to vector<16x128xf32>
    %389 = arith.addf %388, %23 : vector<16x128xf32>
    %390 = arith.mulf %377, %389 : vector<16x128xf32>
    %391 = arith.extf %387 : vector<16x128xbf16> to vector<16x128xf32>
    %392 = arith.addf %391, %390 : vector<16x128xf32>
    %393 = math.tanh %392 : vector<16x128xf32>
    %cst_119 = arith.constant 1.000000e+00 : f32
    %394 = vector.broadcast %cst_119 : f32 to vector<16x128xf32>
    %395 = arith.subf %394, %386 : vector<16x128xf32>
    %396 = arith.mulf %395, %393 : vector<16x128xf32>
    %397 = arith.mulf %386, %359 : vector<16x128xf32>
    %398 = arith.addf %396, %397 : vector<16x128xf32>
    %399 = vector.extract_strided_slice %364 {offsets = [0, 384], sizes = [16, 128], strides = [1, 1]} : vector<16x768xbf16> to vector<16x128xbf16>
    %400 = vector.extract_strided_slice %368 {offsets = [0, 0], sizes = [16, 128], strides = [1, 1]} : vector<16x384xf32> to vector<16x128xf32>
    %401 = arith.extf %399 : vector<16x128xbf16> to vector<16x128xf32>
    %402 = arith.addf %401, %400 : vector<16x128xf32>
    %403 = arith.negf %402 : vector<16x128xf32>
    %404 = math.exp %403 : vector<16x128xf32>
    %cst_120 = arith.constant 1.000000e+00 : f32
    %405 = vector.broadcast %cst_120 : f32 to vector<16x128xf32>
    %406 = arith.addf %405, %404 : vector<16x128xf32>
    %407 = arith.divf %405, %406 : vector<16x128xf32>
    %408 = vector.extract_strided_slice %364 {offsets = [0, 512], sizes = [16, 128], strides = [1, 1]} : vector<16x768xbf16> to vector<16x128xbf16>
    %409 = vector.extract_strided_slice %368 {offsets = [0, 128], sizes = [16, 128], strides = [1, 1]} : vector<16x384xf32> to vector<16x128xf32>
    %410 = arith.extf %408 : vector<16x128xbf16> to vector<16x128xf32>
    %411 = arith.addf %410, %409 : vector<16x128xf32>
    %412 = arith.negf %411 : vector<16x128xf32>
    %413 = math.exp %412 : vector<16x128xf32>
    %cst_121 = arith.constant 1.000000e+00 : f32
    %414 = vector.broadcast %cst_121 : f32 to vector<16x128xf32>
    %415 = arith.addf %414, %413 : vector<16x128xf32>
    %416 = arith.divf %414, %415 : vector<16x128xf32>
    %417 = vector.extract_strided_slice %364 {offsets = [0, 640], sizes = [16, 128], strides = [1, 1]} : vector<16x768xbf16> to vector<16x128xbf16>
    %418 = vector.extract_strided_slice %368 {offsets = [0, 256], sizes = [16, 128], strides = [1, 1]} : vector<16x384xf32> to vector<16x128xf32>
    %419 = arith.addf %418, %26 : vector<16x128xf32>
    %420 = arith.mulf %407, %419 : vector<16x128xf32>
    %421 = arith.extf %417 : vector<16x128xbf16> to vector<16x128xf32>
    %422 = arith.addf %421, %420 : vector<16x128xf32>
    %423 = math.tanh %422 : vector<16x128xf32>
    %cst_122 = arith.constant 1.000000e+00 : f32
    %424 = vector.broadcast %cst_122 : f32 to vector<16x128xf32>
    %425 = arith.subf %424, %416 : vector<16x128xf32>
    %426 = arith.mulf %425, %423 : vector<16x128xf32>
    %427 = arith.mulf %416, %360 : vector<16x128xf32>
    %428 = arith.addf %426, %427 : vector<16x128xf32>
    %c6_i32_123 = arith.constant 6 : i32
    %429 = arith.muli %arg0, %c6_i32_123 : i32
    %430 = arith.addi %429, %c4_i32 : i32
    %c8_i32_124 = arith.constant 8 : i32
    %431 = arith.cmpi slt, %430, %c8_i32_124 : i32
    %432 = arith.select %431, %398, %359 : vector<16x128xf32>
    %433 = arith.select %431, %428, %360 : vector<16x128xf32>
    %c0_125 = arith.constant 0 : index
    %c0_126 = arith.constant 0 : index
    %434 = vector.load %arg13[%c0_125, %c0_126] : memref<16x128xf32, #tpu.memory_space<vmem>>, vector<16x128xf32>
    tpu.vector_store %arg13[%c0_125, %c0_126], %432 {strides = array<i32>} : memref<16x128xf32, #tpu.memory_space<vmem>>, vector<16x128xf32>,
    %c0_127 = arith.constant 0 : index
    %c0_128 = arith.constant 0 : index
    %435 = vector.load %arg14[%c0_127, %c0_128] : memref<16x128xf32, #tpu.memory_space<vmem>>, vector<16x128xf32>
    tpu.vector_store %arg14[%c0_127, %c0_128], %433 {strides = array<i32>} : memref<16x128xf32, #tpu.memory_space<vmem>>, vector<16x128xf32>,
    %436 = tpu.concatenate %432, %433 in 1 : vector<16x128xf32>, vector<16x128xf32> -> vector<16x256xf32>
    %437 = arith.truncf %436 : vector<16x256xf32> to vector<16x256xbf16>
    %438 = arith.index_cast %c4_i32 : i32 to index
    %c0_129 = arith.constant 0 : index
    %c0_130 = arith.constant 0 : index
    %439 = vector.load %arg10[%438, %c0_129, %c0_130] : memref<6x16x256xbf16, #tpu.memory_space<vmem>>, vector<1x16x256xbf16>
    %440 = vector.shape_cast %439 : vector<1x16x256xbf16> to vector<16x256xbf16>
    %441 = vector.shape_cast %437 : vector<16x256xbf16> to vector<1x16x256xbf16>
    tpu.vector_store %arg10[%438, %c0_129, %c0_130], %441 {strides = array<i32>} : memref<6x16x256xbf16, #tpu.memory_space<vmem>>, vector<1x16x256xbf16>,
    %c5_i32 = arith.constant 5 : i32
    %c0_131 = arith.constant 0 : index
    %c0_132 = arith.constant 0 : index
    %442 = vector.load %arg13[%c0_131, %c0_132] : memref<16x128xf32, #tpu.memory_space<vmem>>, vector<16x128xf32>
    %c0_133 = arith.constant 0 : index
    %c0_134 = arith.constant 0 : index
    %443 = vector.load %arg14[%c0_133, %c0_134] : memref<16x128xf32, #tpu.memory_space<vmem>>, vector<16x128xf32>
    %c16_i32_135 = arith.constant 16 : i32
    %444 = arith.muli %c5_i32, %c16_i32_135 : i32
    %445 = tpu.assume_multiple %444, 16 : i32
    %446 = arith.index_cast %445 : i32 to index
    %c0_136 = arith.constant 0 : index
    %447 = vector.load %arg12[%446, %c0_136] : memref<96x768xbf16, #tpu.memory_space<vmem>>, vector<16x768xbf16>
    %448 = arith.truncf %442 : vector<16x128xf32> to vector<16x128xbf16>
    %cst_137 = arith.constant dense<0.000000e+00> : vector<16x384xf32>
    %449 = tpu.matmul %448, %19, %cst_137 {dimension_numbers = #tpu.dot_dimension_numbers<[1], [0], [0], [1], [0, 0, 1, 1], [], []>} : vector<16x128xbf16>, vector<128x384xbf16>, vector<16x384xf32> -> vector<16x384xf32>
    %450 = arith.truncf %443 : vector<16x128xf32> to vector<16x128xbf16>
    %cst_138 = arith.constant dense<0.000000e+00> : vector<16x384xf32>
    %451 = tpu.matmul %450, %20, %cst_138 {dimension_numbers = #tpu.dot_dimension_numbers<[1], [0], [0], [1], [0, 0, 1, 1], [], []>} : vector<16x128xbf16>, vector<128x384xbf16>, vector<16x384xf32> -> vector<16x384xf32>
    %452 = vector.extract_strided_slice %447 {offsets = [0, 0], sizes = [16, 128], strides = [1, 1]} : vector<16x768xbf16> to vector<16x128xbf16>
    %453 = vector.extract_strided_slice %449 {offsets = [0, 0], sizes = [16, 128], strides = [1, 1]} : vector<16x384xf32> to vector<16x128xf32>
    %454 = arith.extf %452 : vector<16x128xbf16> to vector<16x128xf32>
    %455 = arith.addf %454, %453 : vector<16x128xf32>
    %456 = arith.negf %455 : vector<16x128xf32>
    %457 = math.exp %456 : vector<16x128xf32>
    %cst_139 = arith.constant 1.000000e+00 : f32
    %458 = vector.broadcast %cst_139 : f32 to vector<16x128xf32>
    %459 = arith.addf %458, %457 : vector<16x128xf32>
    %460 = arith.divf %458, %459 : vector<16x128xf32>
    %461 = vector.extract_strided_slice %447 {offsets = [0, 128], sizes = [16, 128], strides = [1, 1]} : vector<16x768xbf16> to vector<16x128xbf16>
    %462 = vector.extract_strided_slice %449 {offsets = [0, 128], sizes = [16, 128], strides = [1, 1]} : vector<16x384xf32> to vector<16x128xf32>
    %463 = arith.extf %461 : vector<16x128xbf16> to vector<16x128xf32>
    %464 = arith.addf %463, %462 : vector<16x128xf32>
    %465 = arith.negf %464 : vector<16x128xf32>
    %466 = math.exp %465 : vector<16x128xf32>
    %cst_140 = arith.constant 1.000000e+00 : f32
    %467 = vector.broadcast %cst_140 : f32 to vector<16x128xf32>
    %468 = arith.addf %467, %466 : vector<16x128xf32>
    %469 = arith.divf %467, %468 : vector<16x128xf32>
    %470 = vector.extract_strided_slice %447 {offsets = [0, 256], sizes = [16, 128], strides = [1, 1]} : vector<16x768xbf16> to vector<16x128xbf16>
    %471 = vector.extract_strided_slice %449 {offsets = [0, 256], sizes = [16, 128], strides = [1, 1]} : vector<16x384xf32> to vector<16x128xf32>
    %472 = arith.addf %471, %23 : vector<16x128xf32>
    %473 = arith.mulf %460, %472 : vector<16x128xf32>
    %474 = arith.extf %470 : vector<16x128xbf16> to vector<16x128xf32>
    %475 = arith.addf %474, %473 : vector<16x128xf32>
    %476 = math.tanh %475 : vector<16x128xf32>
    %cst_141 = arith.constant 1.000000e+00 : f32
    %477 = vector.broadcast %cst_141 : f32 to vector<16x128xf32>
    %478 = arith.subf %477, %469 : vector<16x128xf32>
    %479 = arith.mulf %478, %476 : vector<16x128xf32>
    %480 = arith.mulf %469, %442 : vector<16x128xf32>
    %481 = arith.addf %479, %480 : vector<16x128xf32>
    %482 = vector.extract_strided_slice %447 {offsets = [0, 384], sizes = [16, 128], strides = [1, 1]} : vector<16x768xbf16> to vector<16x128xbf16>
    %483 = vector.extract_strided_slice %451 {offsets = [0, 0], sizes = [16, 128], strides = [1, 1]} : vector<16x384xf32> to vector<16x128xf32>
    %484 = arith.extf %482 : vector<16x128xbf16> to vector<16x128xf32>
    %485 = arith.addf %484, %483 : vector<16x128xf32>
    %486 = arith.negf %485 : vector<16x128xf32>
    %487 = math.exp %486 : vector<16x128xf32>
    %cst_142 = arith.constant 1.000000e+00 : f32
    %488 = vector.broadcast %cst_142 : f32 to vector<16x128xf32>
    %489 = arith.addf %488, %487 : vector<16x128xf32>
    %490 = arith.divf %488, %489 : vector<16x128xf32>
    %491 = vector.extract_strided_slice %447 {offsets = [0, 512], sizes = [16, 128], strides = [1, 1]} : vector<16x768xbf16> to vector<16x128xbf16>
    %492 = vector.extract_strided_slice %451 {offsets = [0, 128], sizes = [16, 128], strides = [1, 1]} : vector<16x384xf32> to vector<16x128xf32>
    %493 = arith.extf %491 : vector<16x128xbf16> to vector<16x128xf32>
    %494 = arith.addf %493, %492 : vector<16x128xf32>
    %495 = arith.negf %494 : vector<16x128xf32>
    %496 = math.exp %495 : vector<16x128xf32>
    %cst_143 = arith.constant 1.000000e+00 : f32
    %497 = vector.broadcast %cst_143 : f32 to vector<16x128xf32>
    %498 = arith.addf %497, %496 : vector<16x128xf32>
    %499 = arith.divf %497, %498 : vector<16x128xf32>
    %500 = vector.extract_strided_slice %447 {offsets = [0, 640], sizes = [16, 128], strides = [1, 1]} : vector<16x768xbf16> to vector<16x128xbf16>
    %501 = vector.extract_strided_slice %451 {offsets = [0, 256], sizes = [16, 128], strides = [1, 1]} : vector<16x384xf32> to vector<16x128xf32>
    %502 = arith.addf %501, %26 : vector<16x128xf32>
    %503 = arith.mulf %490, %502 : vector<16x128xf32>
    %504 = arith.extf %500 : vector<16x128xbf16> to vector<16x128xf32>
    %505 = arith.addf %504, %503 : vector<16x128xf32>
    %506 = math.tanh %505 : vector<16x128xf32>
    %cst_144 = arith.constant 1.000000e+00 : f32
    %507 = vector.broadcast %cst_144 : f32 to vector<16x128xf32>
    %508 = arith.subf %507, %499 : vector<16x128xf32>
    %509 = arith.mulf %508, %506 : vector<16x128xf32>
    %510 = arith.mulf %499, %443 : vector<16x128xf32>
    %511 = arith.addf %509, %510 : vector<16x128xf32>
    %c6_i32_145 = arith.constant 6 : i32
    %512 = arith.muli %arg0, %c6_i32_145 : i32
    %513 = arith.addi %512, %c5_i32 : i32
    %c8_i32_146 = arith.constant 8 : i32
    %514 = arith.cmpi slt, %513, %c8_i32_146 : i32
    %515 = arith.select %514, %481, %442 : vector<16x128xf32>
    %516 = arith.select %514, %511, %443 : vector<16x128xf32>
    %c0_147 = arith.constant 0 : index
    %c0_148 = arith.constant 0 : index
    %517 = vector.load %arg13[%c0_147, %c0_148] : memref<16x128xf32, #tpu.memory_space<vmem>>, vector<16x128xf32>
    tpu.vector_store %arg13[%c0_147, %c0_148], %515 {strides = array<i32>} : memref<16x128xf32, #tpu.memory_space<vmem>>, vector<16x128xf32>,
    %c0_149 = arith.constant 0 : index
    %c0_150 = arith.constant 0 : index
    %518 = vector.load %arg14[%c0_149, %c0_150] : memref<16x128xf32, #tpu.memory_space<vmem>>, vector<16x128xf32>
    tpu.vector_store %arg14[%c0_149, %c0_150], %516 {strides = array<i32>} : memref<16x128xf32, #tpu.memory_space<vmem>>, vector<16x128xf32>,
    %519 = tpu.concatenate %515, %516 in 1 : vector<16x128xf32>, vector<16x128xf32> -> vector<16x256xf32>
    %520 = arith.truncf %519 : vector<16x256xf32> to vector<16x256xbf16>
    %521 = arith.index_cast %c5_i32 : i32 to index
    %c0_151 = arith.constant 0 : index
    %c0_152 = arith.constant 0 : index
    %522 = vector.load %arg10[%521, %c0_151, %c0_152] : memref<6x16x256xbf16, #tpu.memory_space<vmem>>, vector<1x16x256xbf16>
    %523 = vector.shape_cast %522 : vector<1x16x256xbf16> to vector<16x256xbf16>
    %524 = vector.shape_cast %520 : vector<16x256xbf16> to vector<1x16x256xbf16>
    tpu.vector_store %arg10[%521, %c0_151, %c0_152], %524 {strides = array<i32>} : memref<6x16x256xbf16, #tpu.memory_space<vmem>>, vector<1x16x256xbf16>,
    %c6_i32_153 = arith.constant 6 : i32
    %c1_i32_154 = arith.constant 1 : i32
    %525 = arith.cmpi eq, %arg0, %c1_i32_154 : i32
    %526 = arith.extui %525 : i1 to i32
    %c0_i32_155 = arith.constant 0 : i32
    %527 = arith.cmpi ne, %526, %c0_i32_155 : i32
    scf.if %527 {
      %c0_156 = arith.constant 0 : index
      %c0_157 = arith.constant 0 : index
      %528 = vector.load %arg13[%c0_156, %c0_157] : memref<16x128xf32, #tpu.memory_space<vmem>>, vector<16x128xf32>
      %529 = arith.truncf %528 : vector<16x128xf32> to vector<16x128xbf16>
      %c0_158 = arith.constant 0 : index
      %c0_159 = arith.constant 0 : index
      %530 = vector.load %arg9[%c0_158, %c0_159] : memref<256x128xbf16, #tpu.memory_space<vmem>>, vector<128x128xbf16>
      %cst_160 = arith.constant dense<0.000000e+00> : vector<16x128xf32>
      %531 = tpu.matmul %529, %530, %cst_160 {dimension_numbers = #tpu.dot_dimension_numbers<[1], [0], [0], [1], [0, 0, 1, 1], [], []>} : vector<16x128xbf16>, vector<128x128xbf16>, vector<16x128xf32> -> vector<16x128xf32>
      %c0_161 = arith.constant 0 : index
      %c0_162 = arith.constant 0 : index
      %532 = vector.load %arg14[%c0_161, %c0_162] : memref<16x128xf32, #tpu.memory_space<vmem>>, vector<16x128xf32>
      %533 = arith.truncf %532 : vector<16x128xf32> to vector<16x128xbf16>
      %c128_163 = arith.constant 128 : index
      %c0_164 = arith.constant 0 : index
      %534 = vector.load %arg9[%c128_163, %c0_164] : memref<256x128xbf16, #tpu.memory_space<vmem>>, vector<128x128xbf16>
      %cst_165 = arith.constant dense<0.000000e+00> : vector<16x128xf32>
      %535 = tpu.matmul %533, %534, %cst_165 {dimension_numbers = #tpu.dot_dimension_numbers<[1], [0], [0], [1], [0, 0, 1, 1], [], []>} : vector<16x128xbf16>, vector<128x128xbf16>, vector<16x128xf32> -> vector<16x128xf32>
      %536 = arith.addf %531, %535 : vector<16x128xf32>
      %c0_166 = arith.constant 0 : index
      %c0_167 = arith.constant 0 : index
      %537 = vector.load %arg11[%c0_166, %c0_167] : memref<16x128xf32, #tpu.memory_space<vmem>>, vector<16x128xf32>
      tpu.vector_store %arg11[%c0_166, %c0_167], %536 {strides = array<i32>} : memref<16x128xf32, #tpu.memory_space<vmem>>, vector<16x128xf32>,
    } else {
    }
    return
  }
  func.func @transform_0(%arg0: i32) -> (i32, i32) {
    %c0_i32 = arith.constant 0 : i32
    %c0_i32_0 = arith.constant 0 : i32
    return %arg0, %c0_i32 : i32, i32
  }
  func.func @transform_1(%arg0: i32) -> (i32, i32) {
    %c0_i32 = arith.constant 0 : i32
    %c0_i32_0 = arith.constant 0 : i32
    return %arg0, %c0_i32 : i32, i32
  }
  func.func @transform_2(%arg0: i32) -> (i32, i32) {
    %c0_i32 = arith.constant 0 : i32
    %c0_i32_0 = arith.constant 0 : i32
    %c0_i32_1 = arith.constant 0 : i32
    return %c0_i32, %c0_i32_0 : i32, i32
  }
  func.func @transform_3(%arg0: i32) -> (i32, i32) {
    %c0_i32 = arith.constant 0 : i32
    %c0_i32_0 = arith.constant 0 : i32
    %c0_i32_1 = arith.constant 0 : i32
    return %c0_i32, %c0_i32_0 : i32, i32
  }
  func.func @transform_4(%arg0: i32) -> (i32, i32) {
    %c0_i32 = arith.constant 0 : i32
    %c0_i32_0 = arith.constant 0 : i32
    %c0_i32_1 = arith.constant 0 : i32
    return %c0_i32, %c0_i32_0 : i32, i32
  }
  func.func @transform_5(%arg0: i32) -> (i32, i32) {
    %c0_i32 = arith.constant 0 : i32
    %c0_i32_0 = arith.constant 0 : i32
    %c0_i32_1 = arith.constant 0 : i32
    return %c0_i32, %c0_i32_0 : i32, i32
  }
  func.func @transform_6(%arg0: i32) -> (i32, i32) {
    %c0_i32 = arith.constant 0 : i32
    %c0_i32_0 = arith.constant 0 : i32
    %c0_i32_1 = arith.constant 0 : i32
    return %c0_i32, %c0_i32_0 : i32, i32
  }
  func.func @transform_7(%arg0: i32) -> (i32, i32) {
    %c0_i32 = arith.constant 0 : i32
    %c0_i32_0 = arith.constant 0 : i32
    %c0_i32_1 = arith.constant 0 : i32
    return %c0_i32, %c0_i32_0 : i32, i32
  }
  func.func @transform_8(%arg0: i32) -> (i32, i32) {
    %c0_i32 = arith.constant 0 : i32
    %c0_i32_0 = arith.constant 0 : i32
    %c0_i32_1 = arith.constant 0 : i32
    return %c0_i32, %c0_i32_0 : i32, i32
  }
  func.func @transform_9(%arg0: i32) -> (i32, i32, i32) {
    %c0_i32 = arith.constant 0 : i32
    %c0_i32_0 = arith.constant 0 : i32
    %c0_i32_1 = arith.constant 0 : i32
    return %arg0, %c0_i32, %c0_i32_0 : i32, i32, i32
  }
  func.func @transform_10(%arg0: i32) -> (i32, i32) {
    %c0_i32 = arith.constant 0 : i32
    %c0_i32_0 = arith.constant 0 : i32
    %c0_i32_1 = arith.constant 0 : i32
    return %c0_i32, %c0_i32_0 : i32, i32
  }
}

</mosaic_0001>

<llo_original>
// kernel: tpu_custom_call.1
$region0: #{tpu_custom_call.1}
  #allocation0 [shape = 'u32[]', space=smem, size = 0x4, offset = 0x4, fixed_abs, tag = 'smem constant byte address 0x4 - core index']
  #allocation1 [shape = 'u32[144,128]{1,0:T(1,128)}', space=vmem, size = 0x12000, scoped, tag = 'internal scratch']
  #allocation2 [shape = 'bf16[96,768]{1,0:T(16,128)(2,1)}', space=vmem, size = 0x24000, scoped, tag = 'scratch operand']
  #allocation3 [shape = 'f32[16,128]{1,0:T(8,128)}', space=vmem, size = 0x2000, scoped, tag = 'scratch operand']
  #allocation4 [shape = 'f32[16,128]{1,0:T(8,128)}', space=vmem, size = 0x2000, scoped, tag = 'scratch operand']
  %s0 = inlined_call_operand.hbm [shape: bf16[192,128], index: 0, kind: input, shape index: {}]
  %s1 = inlined_call_operand.hbm [shape: bf16[192,128], index: 1, kind: input, shape index: {}]
  %s2 = inlined_call_operand.hbm [shape: bf16[128,384], index: 2, kind: input, shape index: {}]
  %s3 = inlined_call_operand.hbm [shape: bf16[128,384], index: 3, kind: input, shape index: {}]
  %s4 = inlined_call_operand.hbm [shape: bf16[128,384], index: 4, kind: input, shape index: {}]
  %s5 = inlined_call_operand.hbm [shape: bf16[128,384], index: 5, kind: input, shape index: {}]
  %s6 = inlined_call_operand.vmem [shape: f32[1,768], index: 6, kind: input, shape index: {}]
  %s7 = inlined_call_operand.vmem [shape: f32[1,256], index: 7, kind: input, shape index: {}]
  %s8 = inlined_call_operand.hbm [shape: bf16[256,128], index: 8, kind: input, shape index: {}]
  %s9 = inlined_call_operand.hbm [shape: bf16[12,16,256], index: 9, kind: output, shape index: {0}]
  %s10 = inlined_call_operand.hbm [shape: f32[16,128], index: 10, kind: output, shape index: {1}]
  %11 = xla_tuple %s9, %s10
  %s12 = sld [smem:[#allocation0]]
  $region113: #{tpu_custom_call.1} parent=0
    _
  %s14 = ssub.s32 1, %s12
  %s15 = scalar_select 0, %s14, %s12
  $region1: #{tpu_custom_call.1} parent=0
    #allocation5 [shape = 'u8[49152]{0}', space=vmem, size = 0xc000, scoped, tag = 'input window, operand 0']
    #allocation6 [shape = 's32[2]{0}', space=sflag, size = 0x8, scoped, tag = 'scoped memory for tpu_custom_call.1']
    #allocation7 [shape = 's32[2]{0}', space=sflag, size = 0x8, scoped, tag = 'scoped memory for tpu_custom_call.1']
    #allocation8 [shape = 'u8[49152]{0}', space=vmem, size = 0xc000, scoped, tag = 'input window, operand 1']
    #allocation9 [shape = 's32[2]{0}', space=sflag, size = 0x8, scoped, tag = 'scoped memory for tpu_custom_call.1']
    #allocation10 [shape = 'u8[98304]{0}', space=vmem, size = 0x18000, scoped, tag = 'input window, operand 2, single buffered']
    #allocation11 [shape = 'u8[98304]{0}', space=vmem, size = 0x18000, scoped, tag = 'input window, operand 3, single buffered']
    #allocation12 [shape = 's32[1]{0}', space=sflag, size = 0x4, scoped, tag = 'scoped memory for tpu_custom_call.1']
    #allocation13 [shape = 'u8[98304]{0}', space=vmem, size = 0x18000, scoped, tag = 'input window, operand 4, single buffered']
    #allocation14 [shape = 'u8[98304]{0}', space=vmem, size = 0x18000, scoped, tag = 'input window, operand 5, single buffered']
    #allocation15 [shape = 's32[1]{0}', space=sflag, size = 0x4, scoped, tag = 'scoped memory for tpu_custom_call.1']
    #allocation16 [shape = 'u8[65536]{0}', space=vmem, size = 0x10000, scoped, tag = 'input window, operand 8, single buffered']
    #allocation17 [shape = 'u8[98304]{0}', space=vmem, size = 0x18000, scoped, tag = 'output window, operand 0']
    #allocation18 [shape = 'u8[8192]{0}', space=vmem, size = 0x2000, scoped, tag = 'output window, operand 1, single buffered']
    #allocation19 [shape = 's32[1]{0}', space=sflag, size = 0x4, scoped, tag = 'scoped memory for tpu_custom_call.1']
    %16 = vsyncpa [#allocation6], 0
    %s17 = scalar_lea.sflag [#allocation6], 1
    %18 = vsyncpa %s17, 0
    %19 = vsyncpa [#allocation9], 0
    %s20 = scalar_lea.sflag [#allocation9], 1
    %21 = vsyncpa %s20, 0
    %22 = vsyncpa [#allocation12], 0
    %23 = vsyncpa [#allocation15], 0
    %24 = vsyncpa [#allocation7], 0
    %s25 = scalar_lea.sflag [#allocation7], 1
    %26 = vsyncpa %s25, 0
    %27 = vsyncpa [#allocation19], 0
    loop: start=0, step=1, limit=4
    $region2: #{tpu_custom_call.1} parent=1 // loop_pre_header
      _
    $region3: #{tpu_custom_call.1} parent=1 // loop_header
      %s29 = sphi 0, %s33
      %p30 = scmp.ge.s32.totalorder %s29, 4
      %s39 = sphi 0, %s41
      %s42 = sphi 0, %s39
      %s43 = sphi 0, %s42
      %s59 = sphi 0, %s43
      %s65 = sphi 0, %s67
      %s68 = sphi 0, %s65
      %s69 = sphi 0, %s68
      %s85 = sphi 0, %s69
      %s89 = sphi 0, %s89
      %s91 = sphi 0, %s89
      %s92 = sphi 0, %s91
      %s106 = sphi 0, %s92
      %s110 = sphi 0, %s110
      %s112 = sphi 0, %s110
      %s113 = sphi 0, %s112
      %s127 = sphi 0, %s113
      %s131 = sphi 0, %s131
      %s133 = sphi 0, %s131
      %s134 = sphi 0, %s133
      %s148 = sphi 0, %s134
      %s152 = sphi 0, %s152
      %s154 = sphi 0, %s152
      %s155 = sphi 0, %s154
      %s169 = sphi 0, %s155
      %s173 = sphi 0, %s173
      %s175 = sphi 0, %s173
      %s176 = sphi 0, %s175
      %s190 = sphi 0, %s176
      %s194 = sphi 0, %s194
      %s196 = sphi 0, %s194
      %s197 = sphi 0, %s196
      %s211 = sphi 0, %s197
      %s215 = sphi 0, %s215
      %s217 = sphi 0, %s215
      %s218 = sphi 0, %s217
      %s232 = sphi 0, %s218
      %s238 = sphi 0, %s240
      %s241 = sphi 0, %s238
      %s242 = sphi 0, %s241
      %s258 = sphi 0, %s242
      %s262 = sphi 0, %s262
      %s264 = sphi 0, %s262
      %s265 = sphi 0, %s264
      %s279 = sphi 0, %s265
    $region4: #{tpu_custom_call.1} parent=1 // loop_header_branch
      %32 = sbr.rel (%p30) target = $region8
    $region5: #{tpu_custom_call.1} parent=1 // loop_body
      %s34 = ssub.s32 %s29, 1
      %s35 = ssub.s32 %s29, 2
      %s36 = sadd.s32 %s29, 1
      %s37 = ssub.s32 %s29, %s36
      %p38 = scmp.eq.s32.totalorder %s37, 0
      %s40 = sadd.s32 %s39, 1
      %s41 = scalar_select %p38, %s39, %s40
      %p44 = pneg %p38
      %p45 = scmp.eq.s32.totalorder %s29, 1
      %p46 = por %p44, %p45
      %p47 = scmp.ne.s32.totalorder %s39, %s42
      %p48 = scmp.eq.s32.totalorder %s29, 0
      %p49 = por %p47, %p48
      %p50 = scmp.ne.s32.totalorder %s39, %s42
      %p51 = scmp.eq.s32.totalorder %s34, 1
      %p52 = por %p50, %p51
      %p53 = scmp.ne.s32.totalorder %s42, %s43
      %p54 = scmp.eq.s32.totalorder %s34, 0
      %p55 = por %p53, %p54
      %p56 = scmp.ne.s32.totalorder %s42, %s43
      %p57 = scmp.eq.s32.totalorder %s35, 1
      %p58 = por %p56, %p57
      %p60 = scmp.ne.s32.totalorder %s43, %s59
      %p61 = scmp.eq.s32.totalorder %s35, 0
      %p62 = por %p60, %p61
      %s63 = ssub.s32 %s29, %s36
      %p64 = scmp.eq.s32.totalorder %s63, 0
      %s66 = sadd.s32 %s65, 1
      %s67 = scalar_select %p64, %s65, %s66
      %p70 = pneg %p64
      %p71 = scmp.eq.s32.totalorder %s29, 1
      %p72 = por %p70, %p71
      %p73 = scmp.ne.s32.totalorder %s65, %s68
      %p74 = scmp.eq.s32.totalorder %s29, 0
      %p75 = por %p73, %p74
      %p76 = scmp.ne.s32.totalorder %s65, %s68
      %p77 = scmp.eq.s32.totalorder %s34, 1
      %p78 = por %p76, %p77
      %p79 = scmp.ne.s32.totalorder %s68, %s69
      %p80 = scmp.eq.s32.totalorder %s34, 0
      %p81 = por %p79, %p80
      %p82 = scmp.ne.s32.totalorder %s68, %s69
      %p83 = scmp.eq.s32.totalorder %s35, 1
      %p84 = por %p82, %p83
      %p86 = scmp.ne.s32.totalorder %s69, %s85
      %p87 = scmp.eq.s32.totalorder %s35, 0
      %p88 = por %p86, %p87
      %s90 = sadd.s32 %s89, 1
      %p93 = scmp.eq.s32.totalorder %s29, 1
      %p94 = scmp.ne.s32.totalorder %s89, %s91
      %p95 = scmp.eq.s32.totalorder %s29, 0
      %p96 = por %p94, %p95
      %p97 = scmp.ne.s32.totalorder %s89, %s91
      %p98 = scmp.eq.s32.totalorder %s34, 1
      %p99 = por %p97, %p98
      %p100 = scmp.ne.s32.totalorder %s91, %s92
      %p101 = scmp.eq.s32.totalorder %s34, 0
      %p102 = por %p100, %p101
      %p103 = scmp.ne.s32.totalorder %s91, %s92
      %p104 = scmp.eq.s32.totalorder %s35, 1
      %p105 = por %p103, %p104
      %p107 = scmp.ne.s32.totalorder %s92, %s106
      %p108 = scmp.eq.s32.totalorder %s35, 0
      %p109 = por %p107, %p108
      %s111 = sadd.s32 %s110, 1
      %p114 = scmp.eq.s32.totalorder %s29, 1
      %p115 = scmp.ne.s32.totalorder %s110, %s112
      %p116 = scmp.eq.s32.totalorder %s29, 0
      %p117 = por %p115, %p116
      %p118 = scmp.ne.s32.totalorder %s110, %s112
      %p119 = scmp.eq.s32.totalorder %s34, 1
      %p120 = por %p118, %p119
      %p121 = scmp.ne.s32.totalorder %s112, %s113
      %p122 = scmp.eq.s32.totalorder %s34, 0
      %p123 = por %p121, %p122
      %p124 = scmp.ne.s32.totalorder %s112, %s113
      %p125 = scmp.eq.s32.totalorder %s35, 1
      %p126 = por %p124, %p125
      %p128 = scmp.ne.s32.totalorder %s113, %s127
      %p129 = scmp.eq.s32.totalorder %s35, 0
      %p130 = por %p128, %p129
      %s132 = sadd.s32 %s131, 1
      %p135 = scmp.eq.s32.totalorder %s29, 1
      %p136 = scmp.ne.s32.totalorder %s131, %s133
      %p137 = scmp.eq.s32.totalorder %s29, 0
      %p138 = por %p136, %p137
      %p139 = scmp.ne.s32.totalorder %s131, %s133
      %p140 = scmp.eq.s32.totalorder %s34, 1
      %p141 = por %p139, %p140
      %p142 = scmp.ne.s32.totalorder %s133, %s134
      %p143 = scmp.eq.s32.totalorder %s34, 0
      %p144 = por %p142, %p143
      %p145 = scmp.ne.s32.totalorder %s133, %s134
      %p146 = scmp.eq.s32.totalorder %s35, 1
      %p147 = por %p145, %p146
      %p149 = scmp.ne.s32.totalorder %s134, %s148
      %p150 = scmp.eq.s32.totalorder %s35, 0
      %p151 = por %p149, %p150
      %s153 = sadd.s32 %s152, 1
      %p156 = scmp.eq.s32.totalorder %s29, 1
      %p157 = scmp.ne.s32.totalorder %s152, %s154
      %p158 = scmp.eq.s32.totalorder %s29, 0
      %p159 = por %p157, %p158
      %p160 = scmp.ne.s32.totalorder %s152, %s154
      %p161 = scmp.eq.s32.totalorder %s34, 1
      %p162 = por %p160, %p161
      %p163 = scmp.ne.s32.totalorder %s154, %s155
      %p164 = scmp.eq.s32.totalorder %s34, 0
      %p165 = por %p163, %p164
      %p166 = scmp.ne.s32.totalorder %s154, %s155
      %p167 = scmp.eq.s32.totalorder %s35, 1
      %p168 = por %p166, %p167
      %p170 = scmp.ne.s32.totalorder %s155, %s169
      %p171 = scmp.eq.s32.totalorder %s35, 0
      %p172 = por %p170, %p171
      %s174 = sadd.s32 %s173, 1
      %p177 = scmp.eq.s32.totalorder %s29, 1
      %p178 = scmp.ne.s32.totalorder %s173, %s175
      %p179 = scmp.eq.s32.totalorder %s29, 0
      %p180 = por %p178, %p179
      %p181 = scmp.ne.s32.totalorder %s173, %s175
      %p182 = scmp.eq.s32.totalorder %s34, 1
      %p183 = por %p181, %p182
      %p184 = scmp.ne.s32.totalorder %s175, %s176
      %p185 = scmp.eq.s32.totalorder %s34, 0
      %p186 = por %p184, %p185
      %p187 = scmp.ne.s32.totalorder %s175, %s176
      %p188 = scmp.eq.s32.totalorder %s35, 1
      %p189 = por %p187, %p188
      %p191 = scmp.ne.s32.totalorder %s176, %s190
      %p192 = scmp.eq.s32.totalorder %s35, 0
      %p193 = por %p191, %p192
      %s195 = sadd.s32 %s194, 1
      %p198 = scmp.eq.s32.totalorder %s29, 1
      %p199 = scmp.ne.s32.totalorder %s194, %s196
      %p200 = scmp.eq.s32.totalorder %s29, 0
      %p201 = por %p199, %p200
      %p202 = scmp.ne.s32.totalorder %s194, %s196
      %p203 = scmp.eq.s32.totalorder %s34, 1
      %p204 = por %p202, %p203
      %p205 = scmp.ne.s32.totalorder %s196, %s197
      %p206 = scmp.eq.s32.totalorder %s34, 0
      %p207 = por %p205, %p206
      %p208 = scmp.ne.s32.totalorder %s196, %s197
      %p209 = scmp.eq.s32.totalorder %s35, 1
      %p210 = por %p208, %p209
      %p212 = scmp.ne.s32.totalorder %s197, %s211
      %p213 = scmp.eq.s32.totalorder %s35, 0
      %p214 = por %p212, %p213
      %s216 = sadd.s32 %s215, 1
      %p219 = scmp.eq.s32.totalorder %s29, 1
      %p220 = scmp.ne.s32.totalorder %s215, %s217
      %p221 = scmp.eq.s32.totalorder %s29, 0
      %p222 = por %p220, %p221
      %p223 = scmp.ne.s32.totalorder %s215, %s217
      %p224 = scmp.eq.s32.totalorder %s34, 1
      %p225 = por %p223, %p224
      %p226 = scmp.ne.s32.totalorder %s217, %s218
      %p227 = scmp.eq.s32.totalorder %s34, 0
      %p228 = por %p226, %p227
      %p229 = scmp.ne.s32.totalorder %s217, %s218
      %p230 = scmp.eq.s32.totalorder %s35, 1
      %p231 = por %p229, %p230
      %p233 = scmp.ne.s32.totalorder %s218, %s232
      %p234 = scmp.eq.s32.totalorder %s35, 0
      %p235 = por %p233, %p234
      %s236 = ssub.s32 %s29, %s36
      %p237 = scmp.eq.s32.totalorder %s236, 0
      %s239 = sadd.s32 %s238, 1
      %s240 = scalar_select %p237, %s238, %s239
      %p243 = pneg %p237
      %p244 = scmp.eq.s32.totalorder %s29, 1
      %p245 = por %p243, %p244
      %p246 = scmp.ne.s32.totalorder %s238, %s241
      %p247 = scmp.eq.s32.totalorder %s29, 0
      %p248 = por %p246, %p247
      %p249 = scmp.ne.s32.totalorder %s238, %s241
      %p250 = scmp.eq.s32.totalorder %s34, 1
      %p251 = por %p249, %p250
      %p252 = scmp.ne.s32.totalorder %s241, %s242
      %p253 = scmp.eq.s32.totalorder %s34, 0
      %p254 = por %p252, %p253
      %p255 = scmp.ne.s32.totalorder %s241, %s242
      %p256 = scmp.eq.s32.totalorder %s35, 1
      %p257 = por %p255, %p256
      %p259 = scmp.ne.s32.totalorder %s242, %s258
      %p260 = scmp.eq.s32.totalorder %s35, 0
      %p261 = por %p259, %p260
      %s263 = sadd.s32 %s262, 1
      %p266 = scmp.eq.s32.totalorder %s29, 1
      %p267 = scmp.ne.s32.totalorder %s262, %s264
      %p268 = scmp.eq.s32.totalorder %s29, 0
      %p269 = por %p267, %p268
      %p270 = scmp.ne.s32.totalorder %s262, %s264
      %p271 = scmp.eq.s32.totalorder %s34, 1
      %p272 = por %p270, %p271
      %p273 = scmp.ne.s32.totalorder %s264, %s265
      %p274 = scmp.eq.s32.totalorder %s34, 0
      %p275 = por %p273, %p274
      %p276 = scmp.ne.s32.totalorder %s264, %s265
      %p277 = scmp.eq.s32.totalorder %s35, 1
      %p278 = por %p276, %p277
      %p280 = scmp.ne.s32.totalorder %s265, %s279
      %p281 = scmp.eq.s32.totalorder %s35, 0
      %p282 = por %p280, %p281
      %p283 = scmp.le.s32.totalorder 1, %s29
      %p284 = scmp.lt.s32.totalorder %s29, 3
      %p285 = pnand %p283, %p284
      %p286 = pneg %p285
      // Predicated region
      $region9: #{tpu_custom_call.1} parent=5 // pred_check
        _
      $region10: #{tpu_custom_call.1} parent=5 // pred_check_branch
        %288 = sbr.rel (%p285) target = $region12
      $region11: #{tpu_custom_call.1} parent=5 // pred_region
        %s289 = ssub.s32 %s29, 1
        // Predicated region
        $region13: #{tpu_custom_call.1} parent=11 // pred_check
          %p290 = pneg %p102
        $region14: #{tpu_custom_call.1} parent=11 // pred_check_branch
          %292 = sbr.rel (%p290) target = $region16
        $region15: #{tpu_custom_call.1} parent=11 // pred_region
          %s294 = ssub.s32 3072, 3072
          %295 = vsyncadd [#allocation9], %s294
          %s296 = sshll.u32 [#allocation10], 4
          %s297 = int_to_ptr.vmem [resolvable:$true] %s296
          %302 = dma.hbm_to_vmem [thread:$0]  %s2, 3072, %s297, [#allocation9], 192, 192, 12
        $region16: #{tpu_custom_call.1} parent=11 // pred_fallthru
          _
        // Predicated region
        $region17: #{tpu_custom_call.1} parent=11 // pred_check
          %p303 = pneg %p123
        $region18: #{tpu_custom_call.1} parent=11 // pred_check_branch
          %305 = sbr.rel (%p303) target = $region20
        $region19: #{tpu_custom_call.1} parent=11 // pred_region
          %s307 = ssub.s32 3072, 3072
          %308 = vsyncadd [#allocation12], %s307
          %s309 = sshll.u32 [#allocation11], 4
          %s310 = int_to_ptr.vmem [resolvable:$true] %s309
          %315 = dma.hbm_to_vmem [thread:$0]  %s3, 3072, %s310, [#allocation12], 192, 192, 12
        $region20: #{tpu_custom_call.1} parent=11 // pred_fallthru
          _
        // Predicated region
        $region21: #{tpu_custom_call.1} parent=11 // pred_check
          %p316 = pneg %p144
        $region22: #{tpu_custom_call.1} parent=11 // pred_check_branch
          %318 = sbr.rel (%p316) target = $region24
        $region23: #{tpu_custom_call.1} parent=11 // pred_region
          %s320 = ssub.s32 3072, 3072
          %321 = vsyncadd [#allocation12], %s320
          %s322 = sshll.u32 [#allocation13], 4
          %s323 = int_to_ptr.vmem [resolvable:$true] %s322
          %328 = dma.hbm_to_vmem [thread:$0]  %s4, 3072, %s323, [#allocation12], 192, 192, 12
        $region24: #{tpu_custom_call.1} parent=11 // pred_fallthru
          _
        // Predicated region
        $region25: #{tpu_custom_call.1} parent=11 // pred_check
          %p329 = pneg %p165
        $region26: #{tpu_custom_call.1} parent=11 // pred_check_branch
          %331 = sbr.rel (%p329) target = $region28
        $region27: #{tpu_custom_call.1} parent=11 // pred_region
          %s333 = ssub.s32 3072, 3072
          %334 = vsyncadd [#allocation15], %s333
          %s335 = sshll.u32 [#allocation14], 4
          %s336 = int_to_ptr.vmem [resolvable:$true] %s335
          %341 = dma.hbm_to_vmem [thread:$0]  %s5, 3072, %s336, [#allocation15], 192, 192, 12
        $region28: #{tpu_custom_call.1} parent=11 // pred_fallthru
          _
        // Predicated region
        $region29: #{tpu_custom_call.1} parent=11 // pred_check
          %p342 = pneg %p186
        $region30: #{tpu_custom_call.1} parent=11 // pred_check_branch
          %344 = sbr.rel (%p342) target = $region32
        $region31: #{tpu_custom_call.1} parent=11 // pred_region
          _
        $region32: #{tpu_custom_call.1} parent=11 // pred_fallthru
          _
        // Predicated region
        $region33: #{tpu_custom_call.1} parent=11 // pred_check
          %p345 = pneg %p207
        $region34: #{tpu_custom_call.1} parent=11 // pred_check_branch
          %347 = sbr.rel (%p345) target = $region36
        $region35: #{tpu_custom_call.1} parent=11 // pred_region
          _
        $region36: #{tpu_custom_call.1} parent=11 // pred_fallthru
          _
        // Predicated region
        $region37: #{tpu_custom_call.1} parent=11 // pred_check
          %p348 = pneg %p228
        $region38: #{tpu_custom_call.1} parent=11 // pred_check_branch
          %350 = sbr.rel (%p348) target = $region40
        $region39: #{tpu_custom_call.1} parent=11 // pred_region
          %s352 = ssub.s32 2048, 2048
          %353 = vsyncadd [#allocation15], %s352
          %s354 = sshll.u32 [#allocation16], 4
          %s355 = int_to_ptr.vmem [resolvable:$true] %s354
          %360 = dma.hbm_to_vmem [thread:$0]  %s8, 2048, %s355, [#allocation15], 64, 64, 4
        $region40: #{tpu_custom_call.1} parent=11 // pred_fallthru
          _
      $region12: #{tpu_custom_call.1} parent=5 // pred_fallthru
        _
      %p361 = scmp.lt.s32.totalorder %s29, 2
      // Predicated region
      $region41: #{tpu_custom_call.1} parent=5 // pred_check
        %p362 = pneg %p361
      $region42: #{tpu_custom_call.1} parent=5 // pred_check_branch
        %364 = sbr.rel (%p362) target = $region44
      $region43: #{tpu_custom_call.1} parent=5 // pred_region
        // Predicated region
        $region45: #{tpu_custom_call.1} parent=43 // pred_check
          %p365 = pneg %p49
        $region46: #{tpu_custom_call.1} parent=43 // pred_check_branch
          %367 = sbr.rel (%p365) target = $region48
        $region47: #{tpu_custom_call.1} parent=43 // pred_region
          %s368 = sand.u32 %s39, 1
          %s369 = scalar_lea.sflag [#allocation6], %s368
          %s370 = sand.u32 %s39, 1
          %s371 = smul.addr %s370, 48
          %s372 = scalar_lea.vmem [#allocation5], %s371
          %s373 = smul.u32 12, %s29
          %s375 = ssub.s32 768, 768
          %376 = vsyncadd %s369, %s375
          %s377 = smul.addr %s373, 64
          %s378 = scalar_lea.hbm %s0, %s377
          %s379 = sshll.u32 %s372, 4
          %s380 = int_to_ptr.vmem [resolvable:$true] %s379
          %385 = dma.hbm_to_vmem [thread:$0]  %s378, 768, %s380, %s369, 64, 64, 4
        $region48: #{tpu_custom_call.1} parent=43 // pred_fallthru
          _
        // Predicated region
        $region49: #{tpu_custom_call.1} parent=43 // pred_check
          %p386 = pneg %p75
        $region50: #{tpu_custom_call.1} parent=43 // pred_check_branch
          %388 = sbr.rel (%p386) target = $region52
        $region51: #{tpu_custom_call.1} parent=43 // pred_region
          %s389 = sand.u32 %s29, 1
          %s390 = scalar_lea.sflag [#allocation9], %s389
          %s391 = sand.u32 %s65, 1
          %s392 = smul.addr %s391, 48
          %s393 = scalar_lea.vmem [#allocation8], %s392
          %s394 = smul.u32 12, %s29
          %s396 = ssub.s32 768, 768
          %397 = vsyncadd %s390, %s396
          %s398 = smul.addr %s394, 64
          %s399 = scalar_lea.hbm %s1, %s398
          %s400 = sshll.u32 %s393, 4
          %s401 = int_to_ptr.vmem [resolvable:$true] %s400
          %406 = dma.hbm_to_vmem [thread:$0]  %s399, 768, %s401, %s390, 64, 64, 4
        $region52: #{tpu_custom_call.1} parent=43 // pred_fallthru
          _
      $region44: #{tpu_custom_call.1} parent=5 // pred_fallthru
        _
      %p407 = scmp.le.s32.totalorder 1, %s29
      %p408 = scmp.lt.s32.totalorder %s29, 3
      %p409 = pnand %p407, %p408
      %p410 = pneg %p409
      // Predicated region
      $region53: #{tpu_custom_call.1} parent=5 // pred_check
        _
      $region54: #{tpu_custom_call.1} parent=5 // pred_check_branch
        %412 = sbr.rel (%p409) target = $region56
      $region55: #{tpu_custom_call.1} parent=5 // pred_region
        %s413 = ssub.s32 %s29, 1
        %s414 = sand.u32 %s42, 1
        %s415 = scalar_lea.sflag [#allocation6], %s414
        %s416 = sand.u32 %s42, 1
        %s417 = smul.addr %s416, 48
        %s418 = scalar_lea.vmem [#allocation5], %s417
        // Predicated region
        $region57: #{tpu_custom_call.1} parent=55 // pred_check
          %p419 = pneg %p55
        $region58: #{tpu_custom_call.1} parent=55 // pred_check_branch
          %421 = sbr.rel (%p419) target = $region60
        $region59: #{tpu_custom_call.1} parent=55 // pred_region
          %422 = dma.done %s415, 768
        $region60: #{tpu_custom_call.1} parent=55 // pred_fallthru
          _
        %s423 = sand.u32 %s34, 1
        %s424 = scalar_lea.sflag [#allocation9], %s423
        %s425 = sand.u32 %s68, 1
        %s426 = smul.addr %s425, 48
        %s427 = scalar_lea.vmem [#allocation8], %s426
        // Predicated region
        $region61: #{tpu_custom_call.1} parent=55 // pred_check
          %p428 = pneg %p81
        $region62: #{tpu_custom_call.1} parent=55 // pred_check_branch
          %430 = sbr.rel (%p428) target = $region64
        $region63: #{tpu_custom_call.1} parent=55 // pred_region
          %431 = dma.done %s424, 768
        $region64: #{tpu_custom_call.1} parent=55 // pred_fallthru
          _
        // Predicated region
        $region65: #{tpu_custom_call.1} parent=55 // pred_check
          %p432 = pneg %p102
        $region66: #{tpu_custom_call.1} parent=55 // pred_check_branch
          %434 = sbr.rel (%p432) target = $region68
        $region67: #{tpu_custom_call.1} parent=55 // pred_region
          %435 = dma.done [#allocation9], 3072
        $region68: #{tpu_custom_call.1} parent=55 // pred_fallthru
          _
        // Predicated region
        $region69: #{tpu_custom_call.1} parent=55 // pred_check
          %p436 = pneg %p123
        $region70: #{tpu_custom_call.1} parent=55 // pred_check_branch
          %438 = sbr.rel (%p436) target = $region72
        $region71: #{tpu_custom_call.1} parent=55 // pred_region
          %439 = dma.done [#allocation12], 3072
        $region72: #{tpu_custom_call.1} parent=55 // pred_fallthru
          _
        // Predicated region
        $region73: #{tpu_custom_call.1} parent=55 // pred_check
          %p440 = pneg %p144
        $region74: #{tpu_custom_call.1} parent=55 // pred_check_branch
          %442 = sbr.rel (%p440) target = $region76
        $region75: #{tpu_custom_call.1} parent=55 // pred_region
          %443 = dma.done [#allocation12], 3072
        $region76: #{tpu_custom_call.1} parent=55 // pred_fallthru
          _
        // Predicated region
        $region77: #{tpu_custom_call.1} parent=55 // pred_check
          %p444 = pneg %p165
        $region78: #{tpu_custom_call.1} parent=55 // pred_check_branch
          %446 = sbr.rel (%p444) target = $region80
        $region79: #{tpu_custom_call.1} parent=55 // pred_region
          %447 = dma.done [#allocation15], 3072
        $region80: #{tpu_custom_call.1} parent=55 // pred_fallthru
          _
        // Predicated region
        $region81: #{tpu_custom_call.1} parent=55 // pred_check
          %p448 = pneg %p228
        $region82: #{tpu_custom_call.1} parent=55 // pred_check_branch
          %450 = sbr.rel (%p448) target = $region84
        $region83: #{tpu_custom_call.1} parent=55 // pred_region
          %451 = dma.done [#allocation15], 2048
        $region84: #{tpu_custom_call.1} parent=55 // pred_fallthru
          _
        %s452 = sand.u32 %s42, 1
        %s453 = scalar_lea.sflag [#allocation6], %s452
        %s454 = sand.u32 %s42, 1
        %s455 = smul.addr %s454, 48
        %s456 = scalar_lea.vmem [#allocation5], %s455
        %p457 = pneg %p55
        %p458 = pneg %p52
        %s459 = sand.u32 %s34, 1
        %s460 = scalar_lea.sflag [#allocation9], %s459
        %s461 = sand.u32 %s68, 1
        %s462 = smul.addr %s461, 48
        %s463 = scalar_lea.vmem [#allocation8], %s462
        %p464 = pneg %p81
        %p465 = pneg %p78
        %p466 = pneg %p102
        %p467 = pneg %p99
        %p468 = pneg %p123
        %p469 = pneg %p120
        %p470 = pneg %p144
        %p471 = pneg %p141
        %p472 = pneg %p165
        %p473 = pneg %p162
        %p474 = pneg %p186
        %p475 = pneg %p183
        %p476 = pneg %p207
        %p477 = pneg %p204
        %p478 = pneg %p228
        %p479 = pneg %p225
        %p480 = pneg %p254
        %p481 = pneg %p251
        %s482 = sand.u32 %s241, 1
        %s483 = scalar_lea.sflag [#allocation7], %s482
        %s484 = sand.u32 %s241, 1
        %s485 = smul.addr %s484, 96
        %s486 = scalar_lea.vmem [#allocation17], %s485
        %p487 = pneg %p275
        %p488 = pneg %p272
        %s489 = smul.u32 12, %s34
        %s490 = smul.u32 12, %s34
        %s491 = smul.u32 6, %s34
        %p493 = scmp.eq.s32.totalorder %s34, 0
        // Predicated region
        $region85: #{tpu_custom_call.1} parent=55 // pred_check
          %p494 = pneg %p493
        $region86: #{tpu_custom_call.1} parent=55 // pred_check_branch
          %496 = sbr.rel (%p494) target = $region88
        $region87: #{tpu_custom_call.1} parent=55 // pred_region
          %497 = vst [vmem:[#allocation3] sm:$0xff] 0.0
          %498 = vst [vmem:[#allocation3 + $0x8] sm:$0xff] 0.0
          %499 = vst [vmem:[#allocation4] sm:$0xff] 0.0
          %500 = vst [vmem:[#allocation4 + $0x8] sm:$0xff] 0.0
        $region88: #{tpu_custom_call.1} parent=55 // pred_fallthru
          _
        %v501 = vld [vmem:[%s418] sm:$0xf]
        %v502 = vld [vmem:[%s418 + $0x4] sm:$0xf]
        %v503 = vld [vmem:[%s418 + $0x8] sm:$0xf]
        %v504 = vld [vmem:[%s418 + $0xc] sm:$0xf]
        %v505 = vld [vmem:[%s418 + $0x10] sm:$0xf]
        %v506 = vld [vmem:[%s418 + $0x14] sm:$0xf]
        %v507 = vld [vmem:[%s418 + $0x18] sm:$0xf]
        %v508 = vld [vmem:[%s418 + $0x1c] sm:$0xf]
        %v509 = vld [vmem:[%s418 + $0x20] sm:$0xf]
        %v510 = vld [vmem:[%s418 + $0x24] sm:$0xf]
        %v511 = vld [vmem:[%s418 + $0x28] sm:$0xf]
        %v512 = vld [vmem:[%s418 + $0x2c] sm:$0xf]
        %v513 = vld [vmem:[#allocation10] sm:$0xff]
        %v514 = vld [vmem:[#allocation10 + $0x8] sm:$0xf]
        %v515 = vld [vmem:[#allocation10 + $0xc] sm:$0xff]
        %v516 = vld [vmem:[#allocation10 + $0x14] sm:$0xf]
        %v517 = vld [vmem:[#allocation10 + $0x18] sm:$0xff]
        %v518 = vld [vmem:[#allocation10 + $0x20] sm:$0xf]
        %v519 = vld [vmem:[#allocation10 + $0x24] sm:$0xff]
        %v520 = vld [vmem:[#allocation10 + $0x2c] sm:$0xf]
        %v521 = vld [vmem:[#allocation10 + $0x30] sm:$0xff]
        %v522 = vld [vmem:[#allocation10 + $0x38] sm:$0xf]
        %v523 = vld [vmem:[#allocation10 + $0x3c] sm:$0xff]
        %v524 = vld [vmem:[#allocation10 + $0x44] sm:$0xf]
        %v525 = vld [vmem:[#allocation10 + $0x48] sm:$0xff]
        %v526 = vld [vmem:[#allocation10 + $0x50] sm:$0xf]
        %v527 = vld [vmem:[#allocation10 + $0x54] sm:$0xff]
        %v528 = vld [vmem:[#allocation10 + $0x5c] sm:$0xf]
        %v529 = vld [vmem:[#allocation10 + $0x60] sm:$0xff]
        %v530 = vld [vmem:[#allocation10 + $0x68] sm:$0xf]
        %v531 = vld [vmem:[#allocation10 + $0x6c] sm:$0xff]
        %v532 = vld [vmem:[#allocation10 + $0x74] sm:$0xf]
        %v533 = vld [vmem:[#allocation10 + $0x78] sm:$0xff]
        %v534 = vld [vmem:[#allocation10 + $0x80] sm:$0xf]
        %v535 = vld [vmem:[#allocation10 + $0x84] sm:$0xff]
        %v536 = vld [vmem:[#allocation10 + $0x8c] sm:$0xf]
        %v537 = vld [vmem:[#allocation10 + $0x90] sm:$0xff]
        %v538 = vld [vmem:[#allocation10 + $0x98] sm:$0xf]
        %v539 = vld [vmem:[#allocation10 + $0x9c] sm:$0xff]
        %v540 = vld [vmem:[#allocation10 + $0xa4] sm:$0xf]
        %v541 = vld [vmem:[#allocation10 + $0xa8] sm:$0xff]
        %v542 = vld [vmem:[#allocation10 + $0xb0] sm:$0xf]
        %v543 = vld [vmem:[#allocation10 + $0xb4] sm:$0xff]
        %v544 = vld [vmem:[#allocation10 + $0xbc] sm:$0xf]
        %v545 = vld [vmem:[%s427] sm:$0xf]
        %v546 = vld [vmem:[%s427 + $0x4] sm:$0xf]
        %v547 = vld [vmem:[%s427 + $0x8] sm:$0xf]
        %v548 = vld [vmem:[%s427 + $0xc] sm:$0xf]
        %v549 = vld [vmem:[%s427 + $0x10] sm:$0xf]
        %v550 = vld [vmem:[%s427 + $0x14] sm:$0xf]
        %v551 = vld [vmem:[%s427 + $0x18] sm:$0xf]
        %v552 = vld [vmem:[%s427 + $0x1c] sm:$0xf]
        %v553 = vld [vmem:[%s427 + $0x20] sm:$0xf]
        %v554 = vld [vmem:[%s427 + $0x24] sm:$0xf]
        %v555 = vld [vmem:[%s427 + $0x28] sm:$0xf]
        %v556 = vld [vmem:[%s427 + $0x2c] sm:$0xf]
        %v557 = vld [vmem:[#allocation11] sm:$0xff]
        %v558 = vld [vmem:[#allocation11 + $0x8] sm:$0xf]
        %v559 = vld [vmem:[#allocation11 + $0xc] sm:$0xff]
        %v560 = vld [vmem:[#allocation11 + $0x14] sm:$0xf]
        %v561 = vld [vmem:[#allocation11 + $0x18] sm:$0xff]
        %v562 = vld [vmem:[#allocation11 + $0x20] sm:$0xf]
        %v563 = vld [vmem:[#allocation11 + $0x24] sm:$0xff]
        %v564 = vld [vmem:[#allocation11 + $0x2c] sm:$0xf]
        %v565 = vld [vmem:[#allocation11 + $0x30] sm:$0xff]
        %v566 = vld [vmem:[#allocation11 + $0x38] sm:$0xf]
        %v567 = vld [vmem:[#allocation11 + $0x3c] sm:$0xff]
        %v568 = vld [vmem:[#allocation11 + $0x44] sm:$0xf]
        %v569 = vld [vmem:[#allocation11 + $0x48] sm:$0xff]
        %v570 = vld [vmem:[#allocation11 + $0x50] sm:$0xf]
        %v571 = vld [vmem:[#allocation11 + $0x54] sm:$0xff]
        %v572 = vld [vmem:[#allocation11 + $0x5c] sm:$0xf]
        %v573 = vld [vmem:[#allocation11 + $0x60] sm:$0xff]
        %v574 = vld [vmem:[#allocation11 + $0x68] sm:$0xf]
        %v575 = vld [vmem:[#allocation11 + $0x6c] sm:$0xff]
        %v576 = vld [vmem:[#allocation11 + $0x74] sm:$0xf]
        %v577 = vld [vmem:[#allocation11 + $0x78] sm:$0xff]
        %v578 = vld [vmem:[#allocation11 + $0x80] sm:$0xf]
        %v579 = vld [vmem:[#allocation11 + $0x84] sm:$0xff]
        %v580 = vld [vmem:[#allocation11 + $0x8c] sm:$0xf]
        %v581 = vld [vmem:[#allocation11 + $0x90] sm:$0xff]
        %v582 = vld [vmem:[#allocation11 + $0x98] sm:$0xf]
        %v583 = vld [vmem:[#allocation11 + $0x9c] sm:$0xff]
        %v584 = vld [vmem:[#allocation11 + $0xa4] sm:$0xf]
        %v585 = vld [vmem:[#allocation11 + $0xa8] sm:$0xff]
        %v586 = vld [vmem:[#allocation11 + $0xb0] sm:$0xf]
        %v587 = vld [vmem:[#allocation11 + $0xb4] sm:$0xff]
        %v588 = vld [vmem:[#allocation11 + $0xbc] sm:$0xf]
        %v589 = vld [vmem:[%s6] sm:$0x7]
        %v591 = vlaneseq
        %v592 = vshrl.u32 %v591, 7
        %v593 = vsub.s32 0, %v592
        %v594 = vrot.slane %v589, %v593
        %v595 = vlaneseq
        %v596 = vshrl.u32 %v595, 7
        %v597 = vsub.s32 1, %v596
        %v598 = vrot.slane %v589, %v597
        %v599 = vlaneseq
        %v600 = vshrl.u32 %v599, 7
        %v601 = vsub.s32 2, %v600
        %v602 = vrot.slane %v589, %v601
        %v618 = vunpack.c.l.b16 %v501
        %v619 = vunpack.c.l.b16 %v502
        %v620 = vunpack.c.l.b16 %v503
        %v621 = vunpack.c.l.b16 %v504
        %v622 = vunpack.c.l.b16 %v505
        %v623 = vunpack.c.l.b16 %v506
        %v624 = vunpack.c.l.b16 %v507
        %v625 = vunpack.c.l.b16 %v508
        %v626 = vunpack.c.l.b16 %v509
        %v627 = vunpack.c.l.b16 %v510
        %v628 = vunpack.c.l.b16 %v511
        %v629 = vunpack.c.l.b16 %v512
        %v630 = vpack.c.b16 %v619, %v618
        %v631 = vpack.c.b16 %v621, %v620
        %v632 = vpack.c.b16 %v623, %v622
        %v633 = vpack.c.b16 %v625, %v624
        %v634 = vpack.c.b16 %v627, %v626
        %v635 = vpack.c.b16 %v629, %v628
        %v674 = vunpack.c.l.b16 %v513
        %v675 = vunpack.c.h.b16 %v513
        %v676 = vunpack.c.l.b16 %v514
        %v677 = vunpack.c.l.b16 %v515
        %v678 = vunpack.c.h.b16 %v515
        %v679 = vunpack.c.l.b16 %v516
        %v680 = vunpack.c.l.b16 %v517
        %v681 = vunpack.c.h.b16 %v517
        %v682 = vunpack.c.l.b16 %v518
        %v683 = vunpack.c.l.b16 %v519
        %v684 = vunpack.c.h.b16 %v519
        %v685 = vunpack.c.l.b16 %v520
        %v686 = vunpack.c.l.b16 %v521
        %v687 = vunpack.c.h.b16 %v521
        %v688 = vunpack.c.l.b16 %v522
        %v689 = vunpack.c.l.b16 %v523
        %v690 = vunpack.c.h.b16 %v523
        %v691 = vunpack.c.l.b16 %v524
        %v692 = vunpack.c.l.b16 %v525
        %v693 = vunpack.c.h.b16 %v525
        %v694 = vunpack.c.l.b16 %v526
        %v695 = vunpack.c.l.b16 %v527
        %v696 = vunpack.c.h.b16 %v527
        %v697 = vunpack.c.l.b16 %v528
        %v698 = vunpack.c.l.b16 %v529
        %v699 = vunpack.c.h.b16 %v529
        %v700 = vunpack.c.l.b16 %v530
        %v701 = vunpack.c.l.b16 %v531
        %v702 = vunpack.c.h.b16 %v531
        %v703 = vunpack.c.l.b16 %v532
        %v704 = vunpack.c.l.b16 %v533
        %v705 = vunpack.c.h.b16 %v533
        %v706 = vunpack.c.l.b16 %v534
        %v707 = vunpack.c.l.b16 %v535
        %v708 = vunpack.c.h.b16 %v535
        %v709 = vunpack.c.l.b16 %v536
        %v710 = vunpack.c.l.b16 %v537
        %v711 = vunpack.c.h.b16 %v537
        %v712 = vunpack.c.l.b16 %v538
        %v713 = vunpack.c.l.b16 %v539
        %v714 = vunpack.c.h.b16 %v539
        %v715 = vunpack.c.l.b16 %v540
        %v716 = vunpack.c.l.b16 %v541
        %v717 = vunpack.c.h.b16 %v541
        %v718 = vunpack.c.l.b16 %v542
        %v719 = vunpack.c.l.b16 %v543
        %v720 = vunpack.c.h.b16 %v543
        %v721 = vunpack.c.l.b16 %v544
        %v722 = vpack.c.b16 %v677, %v674
        %v723 = vpack.c.b16 %v678, %v675
        %v724 = vpack.c.b16 %v679, %v676
        %v725 = vpack.c.b16 %v683, %v680
        %v726 = vpack.c.b16 %v684, %v681
        %v727 = vpack.c.b16 %v685, %v682
        %v728 = vpack.c.b16 %v689, %v686
        %v729 = vpack.c.b16 %v690, %v687
        %v730 = vpack.c.b16 %v691, %v688
        %v731 = vpack.c.b16 %v695, %v692
        %v732 = vpack.c.b16 %v696, %v693
        %v733 = vpack.c.b16 %v697, %v694
        %v734 = vpack.c.b16 %v701, %v698
        %v735 = vpack.c.b16 %v702, %v699
        %v736 = vpack.c.b16 %v703, %v700
        %v737 = vpack.c.b16 %v707, %v704
        %v738 = vpack.c.b16 %v708, %v705
        %v739 = vpack.c.b16 %v709, %v706
        %v740 = vpack.c.b16 %v713, %v710
        %v741 = vpack.c.b16 %v714, %v711
        %v742 = vpack.c.b16 %v715, %v712
        %v743 = vpack.c.b16 %v719, %v716
        %v744 = vpack.c.b16 %v720, %v717
        %v745 = vpack.c.b16 %v721, %v718
        %770 = vmatprep.subr.bf16.mxu0 %v723
        %771 = vmatpush1.bf16.msra.mxu0 %v722
        %772 = vmatprep.subr.bf16.mxu0 %v726
        %773 = vmatpush1.bf16.msra.mxu0 %v725
        %774 = vmatprep.subr.bf16.mxu0 %v729
        %775 = vmatpush1.bf16.msra.mxu0 %v728
        %776 = vmatprep.subr.bf16.mxu0 %v732
        %777 = vmatpush1.bf16.msra.mxu0 %v731
        %778 = vmatprep.subr.bf16.mxu0 %v735
        %779 = vmatpush1.bf16.msra.mxu0 %v734
        %780 = vmatprep.subr.bf16.mxu0 %v738
        %781 = vmatpush1.bf16.msra.mxu0 %v737
        %782 = vmatprep.subr.bf16.mxu0 %v741
        %783 = vmatpush1.bf16.msra.mxu0 %v740
        %784 = vmatprep.subr.bf16.mxu0 %v744
        %785 = vmatpush1.bf16.msra.mxu0 %v743
        %786 = vmatprep.subr.bf16.mxu0 0
        %787 = vmatpush1.bf16.msra.mxu0 0
        %788 = vmatprep.subr.bf16.mxu0 0
        %789 = vmatpush1.bf16.msra.mxu0 0
        %790 = vmatprep.subr.bf16.mxu0 0
        %791 = vmatpush1.bf16.msra.mxu0 0
        %792 = vmatprep.subr.bf16.mxu0 0
        %793 = vmatpush1.bf16.msra.mxu0 0
        %794 = vmatprep.subr.bf16.mxu0 0
        %795 = vmatpush1.bf16.msra.mxu0 0
        %796 = vmatprep.subr.bf16.mxu0 0
        %797 = vmatpush1.bf16.msra.mxu0 0
        %798 = vmatprep.subr.bf16.mxu0 0
        %799 = vmatpush1.bf16.msra.mxu0 0
        %800 = vmatprep.subr.bf16.mxu0 0
        %801 = vmatpush1.bf16.msra.mxu0 0
        %802 = vmatprep.mubr.bf16.mxu0 0
        %803 = vmatmul.mubr.bf16.gmra.mrb[0].mxu0 %v630
        %v804 = vpop.f32.mrb[0].mxu0
        %v805 = vadd.f32 %v594, %v804
        %v806 = vpop.f32.mrb[0].mxu0
        %v807 = vadd.f32 %v598, %v806
        %v808 = vpop.f32.mrb[0].mxu0
        %v809 = vadd.f32 %v594, %v808
        %v810 = vpop.f32.mrb[0].mxu0
        %v811 = vadd.f32 %v598, %v810
        %812 = vmatprep.mubr.bf16.mxu0 0
        %813 = vmatmul.mubr.bf16.gmra.mrb[0].mxu0 %v631
        %v814 = vpop.f32.mrb[0].mxu0
        %v815 = vadd.f32 %v594, %v814
        %v816 = vpop.f32.mrb[0].mxu0
        %v817 = vadd.f32 %v598, %v816
        %v818 = vpop.f32.mrb[0].mxu0
        %v819 = vadd.f32 %v594, %v818
        %v820 = vpop.f32.mrb[0].mxu0
        %v821 = vadd.f32 %v598, %v820
        %822 = vmatprep.mubr.bf16.mxu0 0
        %823 = vmatmul.mubr.bf16.gmra.mrb[0].mxu0 %v632
        %v824 = vpop.f32.mrb[0].mxu0
        %v825 = vadd.f32 %v594, %v824
        %v826 = vpop.f32.mrb[0].mxu0
        %v827 = vadd.f32 %v598, %v826
        %v828 = vpop.f32.mrb[0].mxu0
        %v829 = vadd.f32 %v594, %v828
        %v830 = vpop.f32.mrb[0].mxu0
        %v831 = vadd.f32 %v598, %v830
        %832 = vmatprep.mubr.bf16.mxu0 0
        %833 = vmatmul.mubr.bf16.gmra.mrb[0].mxu0 %v633
        %v834 = vpop.f32.mrb[0].mxu0
        %v835 = vadd.f32 %v594, %v834
        %v836 = vpop.f32.mrb[0].mxu0
        %v837 = vadd.f32 %v598, %v836
        %v838 = vpop.f32.mrb[0].mxu0
        %v839 = vadd.f32 %v594, %v838
        %v840 = vpop.f32.mrb[0].mxu0
        %v841 = vadd.f32 %v598, %v840
        %842 = vmatprep.mubr.bf16.mxu0 0
        %843 = vmatmul.mubr.bf16.gmra.mrb[0].mxu0 %v634
        %v844 = vpop.f32.mrb[0].mxu0
        %v845 = vadd.f32 %v594, %v844
        %v846 = vpop.f32.mrb[0].mxu0
        %v847 = vadd.f32 %v598, %v846
        %v848 = vpop.f32.mrb[0].mxu0
        %v849 = vadd.f32 %v594, %v848
        %v850 = vpop.f32.mrb[0].mxu0
        %v851 = vadd.f32 %v598, %v850
        %852 = vmatprep.mubr.bf16.mxu0 0
        %853 = vmatmul.mubr.bf16.gmra.mrb[0].mxu0 %v635
        %v854 = vpop.f32.mrb[0].mxu0
        %v855 = vadd.f32 %v594, %v854
        %v856 = vpop.f32.mrb[0].mxu0
        %v857 = vadd.f32 %v598, %v856
        %v858 = vpop.f32.mrb[0].mxu0
        %v859 = vadd.f32 %v594, %v858
        %v860 = vpop.f32.mrb[0].mxu0
        %v861 = vadd.f32 %v598, %v860
        %862 = vdwg.mxu0
        %863 = vmatprep.subr.bf16.mxu0 0
        %864 = vmatpush1.bf16.msra.mxu0 %v724
        %865 = vmatprep.subr.bf16.mxu0 0
        %866 = vmatpush1.bf16.msra.mxu0 %v727
        %867 = vmatprep.subr.bf16.mxu0 0
        %868 = vmatpush1.bf16.msra.mxu0 %v730
        %869 = vmatprep.subr.bf16.mxu0 0
        %870 = vmatpush1.bf16.msra.mxu0 %v733
        %871 = vmatprep.subr.bf16.mxu0 0
        %872 = vmatpush1.bf16.msra.mxu0 %v736
        %873 = vmatprep.subr.bf16.mxu0 0
        %874 = vmatpush1.bf16.msra.mxu0 %v739
        %875 = vmatprep.subr.bf16.mxu0 0
        %876 = vmatpush1.bf16.msra.mxu0 %v742
        %877 = vmatprep.subr.bf16.mxu0 0
        %878 = vmatpush1.bf16.msra.mxu0 %v745
        %879 = vmatprep.subr.bf16.mxu0 0
        %880 = vmatpush1.bf16.msra.mxu0 0
        %881 = vmatprep.subr.bf16.mxu0 0
        %882 = vmatpush1.bf16.msra.mxu0 0
        %883 = vmatprep.subr.bf16.mxu0 0
        %884 = vmatpush1.bf16.msra.mxu0 0
        %885 = vmatprep.subr.bf16.mxu0 0
        %886 = vmatpush1.bf16.msra.mxu0 0
        %887 = vmatprep.subr.bf16.mxu0 0
        %888 = vmatpush1.bf16.msra.mxu0 0
        %889 = vmatprep.subr.bf16.mxu0 0
        %890 = vmatpush1.bf16.msra.mxu0 0
        %891 = vmatprep.subr.bf16.mxu0 0
        %892 = vmatpush1.bf16.msra.mxu0 0
        %893 = vmatprep.subr.bf16.mxu0 0
        %894 = vmatpush1.bf16.msra.mxu0 0
        %895 = vmatprep.mubr.bf16.mxu0 0
        %896 = vmatmul.mubr.bf16.gmra.mrb[0].mxu0 %v630
        %v897 = vpop.f32.mrb[0].mxu0
        %v898 = vadd.f32 %v602, %v897
        %v899 = vpop.f32.mrb[0].mxu0
        %v900 = vpop.f32.mrb[0].mxu0
        %v901 = vadd.f32 %v602, %v900
        %v902 = vpop.f32.mrb[0].mxu0
        %903 = vmatprep.mubr.bf16.mxu0 0
        %904 = vmatmul.mubr.bf16.gmra.mrb[0].mxu0 %v631
        %v905 = vpop.f32.mrb[0].mxu0
        %v906 = vadd.f32 %v602, %v905
        %v907 = vpop.f32.mrb[0].mxu0
        %v908 = vpop.f32.mrb[0].mxu0
        %v909 = vadd.f32 %v602, %v908
        %v910 = vpop.f32.mrb[0].mxu0
        %911 = vmatprep.mubr.bf16.mxu0 0
        %912 = vmatmul.mubr.bf16.gmra.mrb[0].mxu0 %v632
        %v913 = vpop.f32.mrb[0].mxu0
        %v914 = vadd.f32 %v602, %v913
        %v915 = vpop.f32.mrb[0].mxu0
        %v916 = vpop.f32.mrb[0].mxu0
        %v917 = vadd.f32 %v602, %v916
        %v918 = vpop.f32.mrb[0].mxu0
        %919 = vmatprep.mubr.bf16.mxu0 0
        %920 = vmatmul.mubr.bf16.gmra.mrb[0].mxu0 %v633
        %v921 = vpop.f32.mrb[0].mxu0
        %v922 = vadd.f32 %v602, %v921
        %v923 = vpop.f32.mrb[0].mxu0
        %v924 = vpop.f32.mrb[0].mxu0
        %v925 = vadd.f32 %v602, %v924
        %v926 = vpop.f32.mrb[0].mxu0
        %927 = vmatprep.mubr.bf16.mxu0 0
        %928 = vmatmul.mubr.bf16.gmra.mrb[0].mxu0 %v634
        %v929 = vpop.f32.mrb[0].mxu0
        %v930 = vadd.f32 %v602, %v929
        %v931 = vpop.f32.mrb[0].mxu0
        %v932 = vpop.f32.mrb[0].mxu0
        %v933 = vadd.f32 %v602, %v932
        %v934 = vpop.f32.mrb[0].mxu0
        %935 = vmatprep.mubr.bf16.mxu0 0
        %936 = vmatmul.mubr.bf16.gmra.mrb[0].mxu0 %v635
        %v937 = vpop.f32.mrb[0].mxu0
        %v938 = vadd.f32 %v602, %v937
        %v939 = vpop.f32.mrb[0].mxu0
        %v940 = vpop.f32.mrb[0].mxu0
        %v941 = vadd.f32 %v602, %v940
        %v942 = vpop.f32.mrb[0].mxu0
        %943 = vdwg.mxu0
        %v944 = vpack.c.bf16 %v809, %v805
        %v945 = vpack.c.bf16 %v811, %v807
        %v946 = vpack.c.bf16 %v901, %v898
        %v947 = vpack.c.bf16 %v819, %v815
        %v948 = vpack.c.bf16 %v821, %v817
        %v949 = vpack.c.bf16 %v909, %v906
        %v950 = vpack.c.bf16 %v829, %v825
        %v951 = vpack.c.bf16 %v831, %v827
        %v952 = vpack.c.bf16 %v917, %v914
        %v953 = vpack.c.bf16 %v839, %v835
        %v954 = vpack.c.bf16 %v841, %v837
        %v955 = vpack.c.bf16 %v925, %v922
        %v956 = vpack.c.bf16 %v849, %v845
        %v957 = vpack.c.bf16 %v851, %v847
        %v958 = vpack.c.bf16 %v933, %v930
        %v959 = vpack.c.bf16 %v859, %v855
        %v960 = vpack.c.bf16 %v861, %v857
        %v961 = vpack.c.bf16 %v941, %v938
        %962 = vst [vmem:[#allocation2] sm:$0xff] %v944
        %963 = vst [vmem:[#allocation2 + $0x8] sm:$0xff] %v945
        %964 = vst [vmem:[#allocation2 + $0x10] sm:$0xff] %v946
        %965 = vst [vmem:[#allocation2 + $0x30] sm:$0xff] %v947
        %966 = vst [vmem:[#allocation2 + $0x38] sm:$0xff] %v948
        %967 = vst [vmem:[#allocation2 + $0x40] sm:$0xff] %v949
        %968 = vst [vmem:[#allocation2 + $0x60] sm:$0xff] %v950
        %969 = vst [vmem:[#allocation2 + $0x68] sm:$0xff] %v951
        %970 = vst [vmem:[#allocation2 + $0x70] sm:$0xff] %v952
        %971 = vst [vmem:[#allocation2 + $0x90] sm:$0xff] %v953
        %972 = vst [vmem:[#allocation2 + $0x98] sm:$0xff] %v954
        %973 = vst [vmem:[#allocation2 + $0xa0] sm:$0xff] %v955
        %974 = vst [vmem:[#allocation2 + $0xc0] sm:$0xff] %v956
        %975 = vst [vmem:[#allocation2 + $0xc8] sm:$0xff] %v957
        %976 = vst [vmem:[#allocation2 + $0xd0] sm:$0xff] %v958
        %977 = vst [vmem:[#allocation2 + $0xf0] sm:$0xff] %v959
        %978 = vst [vmem:[#allocation2 + $0xf8] sm:$0xff] %v960
        %979 = vst [vmem:[#allocation2 + $0x100] sm:$0xff] %v961
        %v980 = vld [vmem:[%s6 + $0x3] sm:$0x7]
        %v982 = vlaneseq
        %v983 = vshrl.u32 %v982, 7
        %v984 = vsub.s32 0, %v983
        %v985 = vrot.slane %v980, %v984
        %v986 = vlaneseq
        %v987 = vshrl.u32 %v986, 7
        %v988 = vsub.s32 1, %v987
        %v989 = vrot.slane %v980, %v988
        %v990 = vlaneseq
        %v991 = vshrl.u32 %v990, 7
        %v992 = vsub.s32 2, %v991
        %v993 = vrot.slane %v980, %v992
        %v1009 = vunpack.c.l.b16 %v545
        %v1010 = vunpack.c.l.b16 %v546
        %v1011 = vunpack.c.l.b16 %v547
        %v1012 = vunpack.c.l.b16 %v548
        %v1013 = vunpack.c.l.b16 %v549
        %v1014 = vunpack.c.l.b16 %v550
        %v1015 = vunpack.c.l.b16 %v551
        %v1016 = vunpack.c.l.b16 %v552
        %v1017 = vunpack.c.l.b16 %v553
        %v1018 = vunpack.c.l.b16 %v554
        %v1019 = vunpack.c.l.b16 %v555
        %v1020 = vunpack.c.l.b16 %v556
        %v1021 = vpack.c.b16 %v1010, %v1009
        %v1022 = vpack.c.b16 %v1012, %v1011
        %v1023 = vpack.c.b16 %v1014, %v1013
        %v1024 = vpack.c.b16 %v1016, %v1015
        %v1025 = vpack.c.b16 %v1018, %v1017
        %v1026 = vpack.c.b16 %v1020, %v1019
        %v1065 = vunpack.c.l.b16 %v557
        %v1066 = vunpack.c.h.b16 %v557
        %v1067 = vunpack.c.l.b16 %v558
        %v1068 = vunpack.c.l.b16 %v559
        %v1069 = vunpack.c.h.b16 %v559
        %v1070 = vunpack.c.l.b16 %v560
        %v1071 = vunpack.c.l.b16 %v561
        %v1072 = vunpack.c.h.b16 %v561
        %v1073 = vunpack.c.l.b16 %v562
        %v1074 = vunpack.c.l.b16 %v563
        %v1075 = vunpack.c.h.b16 %v563
        %v1076 = vunpack.c.l.b16 %v564
        %v1077 = vunpack.c.l.b16 %v565
        %v1078 = vunpack.c.h.b16 %v565
        %v1079 = vunpack.c.l.b16 %v566
        %v1080 = vunpack.c.l.b16 %v567
        %v1081 = vunpack.c.h.b16 %v567
        %v1082 = vunpack.c.l.b16 %v568
        %v1083 = vunpack.c.l.b16 %v569
        %v1084 = vunpack.c.h.b16 %v569
        %v1085 = vunpack.c.l.b16 %v570
        %v1086 = vunpack.c.l.b16 %v571
        %v1087 = vunpack.c.h.b16 %v571
        %v1088 = vunpack.c.l.b16 %v572
        %v1089 = vunpack.c.l.b16 %v573
        %v1090 = vunpack.c.h.b16 %v573
        %v1091 = vunpack.c.l.b16 %v574
        %v1092 = vunpack.c.l.b16 %v575
        %v1093 = vunpack.c.h.b16 %v575
        %v1094 = vunpack.c.l.b16 %v576
        %v1095 = vunpack.c.l.b16 %v577
        %v1096 = vunpack.c.h.b16 %v577
        %v1097 = vunpack.c.l.b16 %v578
        %v1098 = vunpack.c.l.b16 %v579
        %v1099 = vunpack.c.h.b16 %v579
        %v1100 = vunpack.c.l.b16 %v580
        %v1101 = vunpack.c.l.b16 %v581
        %v1102 = vunpack.c.h.b16 %v581
        %v1103 = vunpack.c.l.b16 %v582
        %v1104 = vunpack.c.l.b16 %v583
        %v1105 = vunpack.c.h.b16 %v583
        %v1106 = vunpack.c.l.b16 %v584
        %v1107 = vunpack.c.l.b16 %v585
        %v1108 = vunpack.c.h.b16 %v585
        %v1109 = vunpack.c.l.b16 %v586
        %v1110 = vunpack.c.l.b16 %v587
        %v1111 = vunpack.c.h.b16 %v587
        %v1112 = vunpack.c.l.b16 %v588
        %v1113 = vpack.c.b16 %v1068, %v1065
        %v1114 = vpack.c.b16 %v1069, %v1066
        %v1115 = vpack.c.b16 %v1070, %v1067
        %v1116 = vpack.c.b16 %v1074, %v1071
        %v1117 = vpack.c.b16 %v1075, %v1072
        %v1118 = vpack.c.b16 %v1076, %v1073
        %v1119 = vpack.c.b16 %v1080, %v1077
        %v1120 = vpack.c.b16 %v1081, %v1078
        %v1121 = vpack.c.b16 %v1082, %v1079
        %v1122 = vpack.c.b16 %v1086, %v1083
        %v1123 = vpack.c.b16 %v1087, %v1084
        %v1124 = vpack.c.b16 %v1088, %v1085
        %v1125 = vpack.c.b16 %v1092, %v1089
        %v1126 = vpack.c.b16 %v1093, %v1090
        %v1127 = vpack.c.b16 %v1094, %v1091
        %v1128 = vpack.c.b16 %v1098, %v1095
        %v1129 = vpack.c.b16 %v1099, %v1096
        %v1130 = vpack.c.b16 %v1100, %v1097
        %v1131 = vpack.c.b16 %v1104, %v1101
        %v1132 = vpack.c.b16 %v1105, %v1102
        %v1133 = vpack.c.b16 %v1106, %v1103
        %v1134 = vpack.c.b16 %v1110, %v1107
        %v1135 = vpack.c.b16 %v1111, %v1108
        %v1136 = vpack.c.b16 %v1112, %v1109
        %1161 = vmatprep.subr.bf16.mxu0 %v1114
        %1162 = vmatpush1.bf16.msra.mxu0 %v1113
        %1163 = vmatprep.subr.bf16.mxu0 %v1117
        %1164 = vmatpush1.bf16.msra.mxu0 %v1116
        %1165 = vmatprep.subr.bf16.mxu0 %v1120
        %1166 = vmatpush1.bf16.msra.mxu0 %v1119
        %1167 = vmatprep.subr.bf16.mxu0 %v1123
        %1168 = vmatpush1.bf16.msra.mxu0 %v1122
        %1169 = vmatprep.subr.bf16.mxu0 %v1126
        %1170 = vmatpush1.bf16.msra.mxu0 %v1125
        %1171 = vmatprep.subr.bf16.mxu0 %v1129
        %1172 = vmatpush1.bf16.msra.mxu0 %v1128
        %1173 = vmatprep.subr.bf16.mxu0 %v1132
        %1174 = vmatpush1.bf16.msra.mxu0 %v1131
        %1175 = vmatprep.subr.bf16.mxu0 %v1135
        %1176 = vmatpush1.bf16.msra.mxu0 %v1134
        %1177 = vmatprep.subr.bf16.mxu0 0
        %1178 = vmatpush1.bf16.msra.mxu0 0
        %1179 = vmatprep.subr.bf16.mxu0 0
        %1180 = vmatpush1.bf16.msra.mxu0 0
        %1181 = vmatprep.subr.bf16.mxu0 0
        %1182 = vmatpush1.bf16.msra.mxu0 0
        %1183 = vmatprep.subr.bf16.mxu0 0
        %1184 = vmatpush1.bf16.msra.mxu0 0
        %1185 = vmatprep.subr.bf16.mxu0 0
        %1186 = vmatpush1.bf16.msra.mxu0 0
        %1187 = vmatprep.subr.bf16.mxu0 0
        %1188 = vmatpush1.bf16.msra.mxu0 0
        %1189 = vmatprep.subr.bf16.mxu0 0
        %1190 = vmatpush1.bf16.msra.mxu0 0
        %1191 = vmatprep.subr.bf16.mxu0 0
        %1192 = vmatpush1.bf16.msra.mxu0 0
        %1193 = vmatprep.mubr.bf16.mxu0 0
        %1194 = vmatmul.mubr.bf16.gmra.mrb[0].mxu0 %v1021
        %v1195 = vpop.f32.mrb[0].mxu0
        %v1196 = vadd.f32 %v985, %v1195
        %v1197 = vpop.f32.mrb[0].mxu0
        %v1198 = vadd.f32 %v989, %v1197
        %v1199 = vpop.f32.mrb[0].mxu0
        %v1200 = vadd.f32 %v985, %v1199
        %v1201 = vpop.f32.mrb[0].mxu0
        %v1202 = vadd.f32 %v989, %v1201
        %1203 = vmatprep.mubr.bf16.mxu0 0
        %1204 = vmatmul.mubr.bf16.gmra.mrb[0].mxu0 %v1022
        %v1205 = vpop.f32.mrb[0].mxu0
        %v1206 = vadd.f32 %v985, %v1205
        %v1207 = vpop.f32.mrb[0].mxu0
        %v1208 = vadd.f32 %v989, %v1207
        %v1209 = vpop.f32.mrb[0].mxu0
        %v1210 = vadd.f32 %v985, %v1209
        %v1211 = vpop.f32.mrb[0].mxu0
        %v1212 = vadd.f32 %v989, %v1211
        %1213 = vmatprep.mubr.bf16.mxu0 0
        %1214 = vmatmul.mubr.bf16.gmra.mrb[0].mxu0 %v1023
        %v1215 = vpop.f32.mrb[0].mxu0
        %v1216 = vadd.f32 %v985, %v1215
        %v1217 = vpop.f32.mrb[0].mxu0
        %v1218 = vadd.f32 %v989, %v1217
        %v1219 = vpop.f32.mrb[0].mxu0
        %v1220 = vadd.f32 %v985, %v1219
        %v1221 = vpop.f32.mrb[0].mxu0
        %v1222 = vadd.f32 %v989, %v1221
        %1223 = vmatprep.mubr.bf16.mxu0 0
        %1224 = vmatmul.mubr.bf16.gmra.mrb[0].mxu0 %v1024
        %v1225 = vpop.f32.mrb[0].mxu0
        %v1226 = vadd.f32 %v985, %v1225
        %v1227 = vpop.f32.mrb[0].mxu0
        %v1228 = vadd.f32 %v989, %v1227
        %v1229 = vpop.f32.mrb[0].mxu0
        %v1230 = vadd.f32 %v985, %v1229
        %v1231 = vpop.f32.mrb[0].mxu0
        %v1232 = vadd.f32 %v989, %v1231
        %1233 = vmatprep.mubr.bf16.mxu0 0
        %1234 = vmatmul.mubr.bf16.gmra.mrb[0].mxu0 %v1025
        %v1235 = vpop.f32.mrb[0].mxu0
        %v1236 = vadd.f32 %v985, %v1235
        %v1237 = vpop.f32.mrb[0].mxu0
        %v1238 = vadd.f32 %v989, %v1237
        %v1239 = vpop.f32.mrb[0].mxu0
        %v1240 = vadd.f32 %v985, %v1239
        %v1241 = vpop.f32.mrb[0].mxu0
        %v1242 = vadd.f32 %v989, %v1241
        %1243 = vmatprep.mubr.bf16.mxu0 0
        %1244 = vmatmul.mubr.bf16.gmra.mrb[0].mxu0 %v1026
        %v1245 = vpop.f32.mrb[0].mxu0
        %v1246 = vadd.f32 %v985, %v1245
        %v1247 = vpop.f32.mrb[0].mxu0
        %v1248 = vadd.f32 %v989, %v1247
        %v1249 = vpop.f32.mrb[0].mxu0
        %v1250 = vadd.f32 %v985, %v1249
        %v1251 = vpop.f32.mrb[0].mxu0
        %v1252 = vadd.f32 %v989, %v1251
        %1253 = vdwg.mxu0
        %1254 = vmatprep.subr.bf16.mxu0 0
        %1255 = vmatpush1.bf16.msra.mxu0 %v1115
        %1256 = vmatprep.subr.bf16.mxu0 0
        %1257 = vmatpush1.bf16.msra.mxu0 %v1118
        %1258 = vmatprep.subr.bf16.mxu0 0
        %1259 = vmatpush1.bf16.msra.mxu0 %v1121
        %1260 = vmatprep.subr.bf16.mxu0 0
        %1261 = vmatpush1.bf16.msra.mxu0 %v1124
        %1262 = vmatprep.subr.bf16.mxu0 0
        %1263 = vmatpush1.bf16.msra.mxu0 %v1127
        %1264 = vmatprep.subr.bf16.mxu0 0
        %1265 = vmatpush1.bf16.msra.mxu0 %v1130
        %1266 = vmatprep.subr.bf16.mxu0 0
        %1267 = vmatpush1.bf16.msra.mxu0 %v1133
        %1268 = vmatprep.subr.bf16.mxu0 0
        %1269 = vmatpush1.bf16.msra.mxu0 %v1136
        %1270 = vmatprep.subr.bf16.mxu0 0
        %1271 = vmatpush1.bf16.msra.mxu0 0
        %1272 = vmatprep.subr.bf16.mxu0 0
        %1273 = vmatpush1.bf16.msra.mxu0 0
        %1274 = vmatprep.subr.bf16.mxu0 0
        %1275 = vmatpush1.bf16.msra.mxu0 0
        %1276 = vmatprep.subr.bf16.mxu0 0
        %1277 = vmatpush1.bf16.msra.mxu0 0
        %1278 = vmatprep.subr.bf16.mxu0 0
        %1279 = vmatpush1.bf16.msra.mxu0 0
        %1280 = vmatprep.subr.bf16.mxu0 0
        %1281 = vmatpush1.bf16.msra.mxu0 0
        %1282 = vmatprep.subr.bf16.mxu0 0
        %1283 = vmatpush1.bf16.msra.mxu0 0
        %1284 = vmatprep.subr.bf16.mxu0 0
        %1285 = vmatpush1.bf16.msra.mxu0 0
        %1286 = vmatprep.mubr.bf16.mxu0 0
        %1287 = vmatmul.mubr.bf16.gmra.mrb[0].mxu0 %v1021
        %v1288 = vpop.f32.mrb[0].mxu0
        %v1289 = vadd.f32 %v993, %v1288
        %v1290 = vpop.f32.mrb[0].mxu0
        %v1291 = vpop.f32.mrb[0].mxu0
        %v1292 = vadd.f32 %v993, %v1291
        %v1293 = vpop.f32.mrb[0].mxu0
        %1294 = vmatprep.mubr.bf16.mxu0 0
        %1295 = vmatmul.mubr.bf16.gmra.mrb[0].mxu0 %v1022
        %v1296 = vpop.f32.mrb[0].mxu0
        %v1297 = vadd.f32 %v993, %v1296
        %v1298 = vpop.f32.mrb[0].mxu0
        %v1299 = vpop.f32.mrb[0].mxu0
        %v1300 = vadd.f32 %v993, %v1299
        %v1301 = vpop.f32.mrb[0].mxu0
        %1302 = vmatprep.mubr.bf16.mxu0 0
        %1303 = vmatmul.mubr.bf16.gmra.mrb[0].mxu0 %v1023
        %v1304 = vpop.f32.mrb[0].mxu0
        %v1305 = vadd.f32 %v993, %v1304
        %v1306 = vpop.f32.mrb[0].mxu0
        %v1307 = vpop.f32.mrb[0].mxu0
        %v1308 = vadd.f32 %v993, %v1307
        %v1309 = vpop.f32.mrb[0].mxu0
        %1310 = vmatprep.mubr.bf16.mxu0 0
        %1311 = vmatmul.mubr.bf16.gmra.mrb[0].mxu0 %v1024
        %v1312 = vpop.f32.mrb[0].mxu0
        %v1313 = vadd.f32 %v993, %v1312
        %v1314 = vpop.f32.mrb[0].mxu0
        %v1315 = vpop.f32.mrb[0].mxu0
        %v1316 = vadd.f32 %v993, %v1315
        %v1317 = vpop.f32.mrb[0].mxu0
        %1318 = vmatprep.mubr.bf16.mxu0 0
        %1319 = vmatmul.mubr.bf16.gmra.mrb[0].mxu0 %v1025
        %v1320 = vpop.f32.mrb[0].mxu0
        %v1321 = vadd.f32 %v993, %v1320
        %v1322 = vpop.f32.mrb[0].mxu0
        %v1323 = vpop.f32.mrb[0].mxu0
        %v1324 = vadd.f32 %v993, %v1323
        %v1325 = vpop.f32.mrb[0].mxu0
        %1326 = vmatprep.mubr.bf16.mxu0 0
        %1327 = vmatmul.mubr.bf16.gmra.mrb[0].mxu0 %v1026
        %v1328 = vpop.f32.mrb[0].mxu0
        %v1329 = vadd.f32 %v993, %v1328
        %v1330 = vpop.f32.mrb[0].mxu0
        %v1331 = vpop.f32.mrb[0].mxu0
        %v1332 = vadd.f32 %v993, %v1331
        %v1333 = vpop.f32.mrb[0].mxu0
        %1334 = vdwg.mxu0
        %v1335 = vpack.c.bf16 %v1200, %v1196
        %v1336 = vpack.c.bf16 %v1202, %v1198
        %v1337 = vpack.c.bf16 %v1292, %v1289
        %v1338 = vpack.c.bf16 %v1210, %v1206
        %v1339 = vpack.c.bf16 %v1212, %v1208
        %v1340 = vpack.c.bf16 %v1300, %v1297
        %v1341 = vpack.c.bf16 %v1220, %v1216
        %v1342 = vpack.c.bf16 %v1222, %v1218
        %v1343 = vpack.c.bf16 %v1308, %v1305
        %v1344 = vpack.c.bf16 %v1230, %v1226
        %v1345 = vpack.c.bf16 %v1232, %v1228
        %v1346 = vpack.c.bf16 %v1316, %v1313
        %v1347 = vpack.c.bf16 %v1240, %v1236
        %v1348 = vpack.c.bf16 %v1242, %v1238
        %v1349 = vpack.c.bf16 %v1324, %v1321
        %v1350 = vpack.c.bf16 %v1250, %v1246
        %v1351 = vpack.c.bf16 %v1252, %v1248
        %v1352 = vpack.c.bf16 %v1332, %v1329
        %1353 = vst [vmem:[#allocation2 + $0x18] sm:$0xff] %v1335
        %1354 = vst [vmem:[#allocation2 + $0x20] sm:$0xff] %v1336
        %1355 = vst [vmem:[#allocation2 + $0x28] sm:$0xff] %v1337
        %1356 = vst [vmem:[#allocation2 + $0x48] sm:$0xff] %v1338
        %1357 = vst [vmem:[#allocation2 + $0x50] sm:$0xff] %v1339
        %1358 = vst [vmem:[#allocation2 + $0x58] sm:$0xff] %v1340
        %1359 = vst [vmem:[#allocation2 + $0x78] sm:$0xff] %v1341
        %1360 = vst [vmem:[#allocation2 + $0x80] sm:$0xff] %v1342
        %1361 = vst [vmem:[#allocation2 + $0x88] sm:$0xff] %v1343
        %1362 = vst [vmem:[#allocation2 + $0xa8] sm:$0xff] %v1344
        %1363 = vst [vmem:[#allocation2 + $0xb0] sm:$0xff] %v1345
        %1364 = vst [vmem:[#allocation2 + $0xb8] sm:$0xff] %v1346
        %1365 = vst [vmem:[#allocation2 + $0xd8] sm:$0xff] %v1347
        %1366 = vst [vmem:[#allocation2 + $0xe0] sm:$0xff] %v1348
        %1367 = vst [vmem:[#allocation2 + $0xe8] sm:$0xff] %v1349
        %1368 = vst [vmem:[#allocation2 + $0x108] sm:$0xff] %v1350
        %1369 = vst [vmem:[#allocation2 + $0x110] sm:$0xff] %v1351
        %1370 = vst [vmem:[#allocation2 + $0x118] sm:$0xff] %v1352
        %v1371 = vld [vmem:[#allocation13] sm:$0xff]
        %v1372 = vld [vmem:[#allocation13 + $0x8] sm:$0xf]
        %v1373 = vld [vmem:[#allocation13 + $0xc] sm:$0xff]
        %v1374 = vld [vmem:[#allocation13 + $0x14] sm:$0xf]
        %v1375 = vld [vmem:[#allocation13 + $0x18] sm:$0xff]
        %v1376 = vld [vmem:[#allocation13 + $0x20] sm:$0xf]
        %v1377 = vld [vmem:[#allocation13 + $0x24] sm:$0xff]
        %v1378 = vld [vmem:[#allocation13 + $0x2c] sm:$0xf]
        %v1379 = vld [vmem:[#allocation13 + $0x30] sm:$0xff]
        %v1380 = vld [vmem:[#allocation13 + $0x38] sm:$0xf]
        %v1381 = vld [vmem:[#allocation13 + $0x3c] sm:$0xff]
        %v1382 = vld [vmem:[#allocation13 + $0x44] sm:$0xf]
        %v1383 = vld [vmem:[#allocation13 + $0x48] sm:$0xff]
        %v1384 = vld [vmem:[#allocation13 + $0x50] sm:$0xf]
        %v1385 = vld [vmem:[#allocation13 + $0x54] sm:$0xff]
        %v1386 = vld [vmem:[#allocation13 + $0x5c] sm:$0xf]
        %v1387 = vld [vmem:[#allocation13 + $0x60] sm:$0xff]
        %v1388 = vld [vmem:[#allocation13 + $0x68] sm:$0xf]
        %v1389 = vld [vmem:[#allocation13 + $0x6c] sm:$0xff]
        %v1390 = vld [vmem:[#allocation13 + $0x74] sm:$0xf]
        %v1391 = vld [vmem:[#allocation13 + $0x78] sm:$0xff]
        %v1392 = vld [vmem:[#allocation13 + $0x80] sm:$0xf]
        %v1393 = vld [vmem:[#allocation13 + $0x84] sm:$0xff]
        %v1394 = vld [vmem:[#allocation13 + $0x8c] sm:$0xf]
        %v1395 = vld [vmem:[#allocation13 + $0x90] sm:$0xff]
        %v1396 = vld [vmem:[#allocation13 + $0x98] sm:$0xf]
        %v1397 = vld [vmem:[#allocation13 + $0x9c] sm:$0xff]
        %v1398 = vld [vmem:[#allocation13 + $0xa4] sm:$0xf]
        %v1399 = vld [vmem:[#allocation13 + $0xa8] sm:$0xff]
        %v1400 = vld [vmem:[#allocation13 + $0xb0] sm:$0xf]
        %v1401 = vld [vmem:[#allocation13 + $0xb4] sm:$0xff]
        %v1402 = vld [vmem:[#allocation13 + $0xbc] sm:$0xf]
        %v1403 = vld [vmem:[#allocation14] sm:$0xff]
        %v1404 = vld [vmem:[#allocation14 + $0x8] sm:$0xf]
        %v1405 = vld [vmem:[#allocation14 + $0xc] sm:$0xff]
        %v1406 = vld [vmem:[#allocation14 + $0x14] sm:$0xf]
        %v1407 = vld [vmem:[#allocation14 + $0x18] sm:$0xff]
        %v1408 = vld [vmem:[#allocation14 + $0x20] sm:$0xf]
        %v1409 = vld [vmem:[#allocation14 + $0x24] sm:$0xff]
        %v1410 = vld [vmem:[#allocation14 + $0x2c] sm:$0xf]
        %v1411 = vld [vmem:[#allocation14 + $0x30] sm:$0xff]
        %v1412 = vld [vmem:[#allocation14 + $0x38] sm:$0xf]
        %v1413 = vld [vmem:[#allocation14 + $0x3c] sm:$0xff]
        %v1414 = vld [vmem:[#allocation14 + $0x44] sm:$0xf]
        %v1415 = vld [vmem:[#allocation14 + $0x48] sm:$0xff]
        %v1416 = vld [vmem:[#allocation14 + $0x50] sm:$0xf]
        %v1417 = vld [vmem:[#allocation14 + $0x54] sm:$0xff]
        %v1418 = vld [vmem:[#allocation14 + $0x5c] sm:$0xf]
        %v1419 = vld [vmem:[#allocation14 + $0x60] sm:$0xff]
        %v1420 = vld [vmem:[#allocation14 + $0x68] sm:$0xf]
        %v1421 = vld [vmem:[#allocation14 + $0x6c] sm:$0xff]
        %v1422 = vld [vmem:[#allocation14 + $0x74] sm:$0xf]
        %v1423 = vld [vmem:[#allocation14 + $0x78] sm:$0xff]
        %v1424 = vld [vmem:[#allocation14 + $0x80] sm:$0xf]
        %v1425 = vld [vmem:[#allocation14 + $0x84] sm:$0xff]
        %v1426 = vld [vmem:[#allocation14 + $0x8c] sm:$0xf]
        %v1427 = vld [vmem:[#allocation14 + $0x90] sm:$0xff]
        %v1428 = vld [vmem:[#allocation14 + $0x98] sm:$0xf]
        %v1429 = vld [vmem:[#allocation14 + $0x9c] sm:$0xff]
        %v1430 = vld [vmem:[#allocation14 + $0xa4] sm:$0xf]
        %v1431 = vld [vmem:[#allocation14 + $0xa8] sm:$0xff]
        %v1432 = vld [vmem:[#allocation14 + $0xb0] sm:$0xf]
        %v1433 = vld [vmem:[#allocation14 + $0xb4] sm:$0xff]
        %v1434 = vld [vmem:[#allocation14 + $0xbc] sm:$0xf]
        %v1435 = vld [vmem:[%s7] sm:$0x1]
        %v1437 = vlaneseq
        %v1438 = vshrl.u32 %v1437, 7
        %v1439 = vsub.s32 0, %v1438
        %v1440 = vrot.slane %v1435, %v1439
        %v1442 = vld [vmem:[%s7 + $0x1] sm:$0x1]
        %v1444 = vlaneseq
        %v1445 = vshrl.u32 %v1444, 7
        %v1446 = vsub.s32 0, %v1445
        %v1447 = vrot.slane %v1442, %v1446
        %v1449 = vld [vmem:[#allocation3] sm:$0xff]
        %v1450 = vld [vmem:[#allocation3 + $0x8] sm:$0xff]
        %v1451 = vld [vmem:[#allocation4] sm:$0xff]
        %v1452 = vld [vmem:[#allocation4 + $0x8] sm:$0xff]
        %s1453 = smul.u32 0, 6
        %s1454 = smul.addr %s1453, 8
        %s1455 = scalar_lea.vmem [#allocation2], %s1454
        %v1456 = vld [vmem:[%s1455] sm:$0xff]
        %v1457 = vld [vmem:[%s1455 + $0x8] sm:$0xff]
        %v1458 = vld [vmem:[%s1455 + $0x10] sm:$0xff]
        %v1459 = vld [vmem:[%s1455 + $0x18] sm:$0xff]
        %v1460 = vld [vmem:[%s1455 + $0x20] sm:$0xff]
        %v1461 = vld [vmem:[%s1455 + $0x28] sm:$0xff]
        %v1462 = vpack.c.bf16 %v1450, %v1449
        %v1495 = vunpack.c.l.b16 %v1371
        %v1496 = vunpack.c.h.b16 %v1371
        %v1497 = vunpack.c.l.b16 %v1372
        %v1498 = vunpack.c.l.b16 %v1373
        %v1499 = vunpack.c.h.b16 %v1373
        %v1500 = vunpack.c.l.b16 %v1374
        %v1501 = vunpack.c.l.b16 %v1375
        %v1502 = vunpack.c.h.b16 %v1375
        %v1503 = vunpack.c.l.b16 %v1376
        %v1504 = vunpack.c.l.b16 %v1377
        %v1505 = vunpack.c.h.b16 %v1377
        %v1506 = vunpack.c.l.b16 %v1378
        %v1507 = vunpack.c.l.b16 %v1379
        %v1508 = vunpack.c.h.b16 %v1379
        %v1509 = vunpack.c.l.b16 %v1380
        %v1510 = vunpack.c.l.b16 %v1381
        %v1511 = vunpack.c.h.b16 %v1381
        %v1512 = vunpack.c.l.b16 %v1382
        %v1513 = vunpack.c.l.b16 %v1383
        %v1514 = vunpack.c.h.b16 %v1383
        %v1515 = vunpack.c.l.b16 %v1384
        %v1516 = vunpack.c.l.b16 %v1385
        %v1517 = vunpack.c.h.b16 %v1385
        %v1518 = vunpack.c.l.b16 %v1386
        %v1519 = vunpack.c.l.b16 %v1387
        %v1520 = vunpack.c.h.b16 %v1387
        %v1521 = vunpack.c.l.b16 %v1388
        %v1522 = vunpack.c.l.b16 %v1389
        %v1523 = vunpack.c.h.b16 %v1389
        %v1524 = vunpack.c.l.b16 %v1390
        %v1525 = vunpack.c.l.b16 %v1391
        %v1526 = vunpack.c.h.b16 %v1391
        %v1527 = vunpack.c.l.b16 %v1392
        %v1528 = vunpack.c.l.b16 %v1393
        %v1529 = vunpack.c.h.b16 %v1393
        %v1530 = vunpack.c.l.b16 %v1394
        %v1531 = vunpack.c.l.b16 %v1395
        %v1532 = vunpack.c.h.b16 %v1395
        %v1533 = vunpack.c.l.b16 %v1396
        %v1534 = vunpack.c.l.b16 %v1397
        %v1535 = vunpack.c.h.b16 %v1397
        %v1536 = vunpack.c.l.b16 %v1398
        %v1537 = vunpack.c.l.b16 %v1399
        %v1538 = vunpack.c.h.b16 %v1399
        %v1539 = vunpack.c.l.b16 %v1400
        %v1540 = vunpack.c.l.b16 %v1401
        %v1541 = vunpack.c.h.b16 %v1401
        %v1542 = vunpack.c.l.b16 %v1402
        %v1543 = vpack.c.b16 %v1498, %v1495
        %v1544 = vpack.c.b16 %v1499, %v1496
        %v1545 = vpack.c.b16 %v1500, %v1497
        %v1546 = vpack.c.b16 %v1504, %v1501
        %v1547 = vpack.c.b16 %v1505, %v1502
        %v1548 = vpack.c.b16 %v1506, %v1503
        %v1549 = vpack.c.b16 %v1510, %v1507
        %v1550 = vpack.c.b16 %v1511, %v1508
        %v1551 = vpack.c.b16 %v1512, %v1509
        %v1552 = vpack.c.b16 %v1516, %v1513
        %v1553 = vpack.c.b16 %v1517, %v1514
        %v1554 = vpack.c.b16 %v1518, %v1515
        %v1555 = vpack.c.b16 %v1522, %v1519
        %v1556 = vpack.c.b16 %v1523, %v1520
        %v1557 = vpack.c.b16 %v1524, %v1521
        %v1558 = vpack.c.b16 %v1528, %v1525
        %v1559 = vpack.c.b16 %v1529, %v1526
        %v1560 = vpack.c.b16 %v1530, %v1527
        %v1561 = vpack.c.b16 %v1534, %v1531
        %v1562 = vpack.c.b16 %v1535, %v1532
        %v1563 = vpack.c.b16 %v1536, %v1533
        %v1564 = vpack.c.b16 %v1540, %v1537
        %v1565 = vpack.c.b16 %v1541, %v1538
        %v1566 = vpack.c.b16 %v1542, %v1539
        %1591 = vmatprep.subr.bf16.mxu0 %v1544
        %1592 = vmatpush1.bf16.msra.mxu0 %v1543
        %1593 = vmatprep.subr.bf16.mxu0 %v1547
        %1594 = vmatpush1.bf16.msra.mxu0 %v1546
        %1595 = vmatprep.subr.bf16.mxu0 %v1550
        %1596 = vmatpush1.bf16.msra.mxu0 %v1549
        %1597 = vmatprep.subr.bf16.mxu0 %v1553
        %1598 = vmatpush1.bf16.msra.mxu0 %v1552
        %1599 = vmatprep.subr.bf16.mxu0 %v1556
        %1600 = vmatpush1.bf16.msra.mxu0 %v1555
        %1601 = vmatprep.subr.bf16.mxu0 %v1559
        %1602 = vmatpush1.bf16.msra.mxu0 %v1558
        %1603 = vmatprep.subr.bf16.mxu0 %v1562
        %1604 = vmatpush1.bf16.msra.mxu0 %v1561
        %1605 = vmatprep.subr.bf16.mxu0 %v1565
        %1606 = vmatpush1.bf16.msra.mxu0 %v1564
        %1607 = vmatprep.subr.bf16.mxu0 0
        %1608 = vmatpush1.bf16.msra.mxu0 0
        %1609 = vmatprep.subr.bf16.mxu0 0
        %1610 = vmatpush1.bf16.msra.mxu0 0
        %1611 = vmatprep.subr.bf16.mxu0 0
        %1612 = vmatpush1.bf16.msra.mxu0 0
        %1613 = vmatprep.subr.bf16.mxu0 0
        %1614 = vmatpush1.bf16.msra.mxu0 0
        %1615 = vmatprep.subr.bf16.mxu0 0
        %1616 = vmatpush1.bf16.msra.mxu0 0
        %1617 = vmatprep.subr.bf16.mxu0 0
        %1618 = vmatpush1.bf16.msra.mxu0 0
        %1619 = vmatprep.subr.bf16.mxu0 0
        %1620 = vmatpush1.bf16.msra.mxu0 0
        %1621 = vmatprep.subr.bf16.mxu0 0
        %1622 = vmatpush1.bf16.msra.mxu0 0
        %1623 = vmatprep.mubr.bf16.mxu0 0
        %1624 = vmatmul.mubr.bf16.gmra.mrb[0].mxu0 %v1462
        %v1625 = vpop.f32.mrb[0].mxu0
        %v1626 = vadd.f32 0.0, %v1625
        %v1627 = vpop.f32.mrb[0].mxu0
        %v1628 = vadd.f32 0.0, %v1627
        %v1629 = vpop.f32.mrb[0].mxu0
        %v1630 = vadd.f32 0.0, %v1629
        %v1631 = vpop.f32.mrb[0].mxu0
        %v1632 = vadd.f32 0.0, %v1631
        %1633 = vdwg.mxu0
        %1634 = vmatprep.subr.bf16.mxu0 0
        %1635 = vmatpush1.bf16.msra.mxu0 %v1545
        %1636 = vmatprep.subr.bf16.mxu0 0
        %1637 = vmatpush1.bf16.msra.mxu0 %v1548
        %1638 = vmatprep.subr.bf16.mxu0 0
        %1639 = vmatpush1.bf16.msra.mxu0 %v1551
        %1640 = vmatprep.subr.bf16.mxu0 0
        %1641 = vmatpush1.bf16.msra.mxu0 %v1554
        %1642 = vmatprep.subr.bf16.mxu0 0
        %1643 = vmatpush1.bf16.msra.mxu0 %v1557
        %1644 = vmatprep.subr.bf16.mxu0 0
        %1645 = vmatpush1.bf16.msra.mxu0 %v1560
        %1646 = vmatprep.subr.bf16.mxu0 0
        %1647 = vmatpush1.bf16.msra.mxu0 %v1563
        %1648 = vmatprep.subr.bf16.mxu0 0
        %1649 = vmatpush1.bf16.msra.mxu0 %v1566
        %1650 = vmatprep.subr.bf16.mxu0 0
        %1651 = vmatpush1.bf16.msra.mxu0 0
        %1652 = vmatprep.subr.bf16.mxu0 0
        %1653 = vmatpush1.bf16.msra.mxu0 0
        %1654 = vmatprep.subr.bf16.mxu0 0
        %1655 = vmatpush1.bf16.msra.mxu0 0
        %1656 = vmatprep.subr.bf16.mxu0 0
        %1657 = vmatpush1.bf16.msra.mxu0 0
        %1658 = vmatprep.subr.bf16.mxu0 0
        %1659 = vmatpush1.bf16.msra.mxu0 0
        %1660 = vmatprep.subr.bf16.mxu0 0
        %1661 = vmatpush1.bf16.msra.mxu0 0
        %1662 = vmatprep.subr.bf16.mxu0 0
        %1663 = vmatpush1.bf16.msra.mxu0 0
        %1664 = vmatprep.subr.bf16.mxu0 0
        %1665 = vmatpush1.bf16.msra.mxu0 0
        %1666 = vmatprep.mubr.bf16.mxu0 0
        %1667 = vmatmul.mubr.bf16.gmra.mrb[0].mxu0 %v1462
        %v1668 = vpop.f32.mrb[0].mxu0
        %v1669 = vadd.f32 0.0, %v1668
        %v1670 = vpop.f32.mrb[0].mxu0
        %v1671 = vpop.f32.mrb[0].mxu0
        %v1672 = vadd.f32 0.0, %v1671
        %v1673 = vpop.f32.mrb[0].mxu0
        %1674 = vdwg.mxu0
        %v1675 = vpack.c.bf16 %v1452, %v1451
        %v1708 = vunpack.c.l.b16 %v1403
        %v1709 = vunpack.c.h.b16 %v1403
        %v1710 = vunpack.c.l.b16 %v1404
        %v1711 = vunpack.c.l.b16 %v1405
        %v1712 = vunpack.c.h.b16 %v1405
        %v1713 = vunpack.c.l.b16 %v1406
        %v1714 = vunpack.c.l.b16 %v1407
        %v1715 = vunpack.c.h.b16 %v1407
        %v1716 = vunpack.c.l.b16 %v1408
        %v1717 = vunpack.c.l.b16 %v1409
        %v1718 = vunpack.c.h.b16 %v1409
        %v1719 = vunpack.c.l.b16 %v1410
        %v1720 = vunpack.c.l.b16 %v1411
        %v1721 = vunpack.c.h.b16 %v1411
        %v1722 = vunpack.c.l.b16 %v1412
        %v1723 = vunpack.c.l.b16 %v1413
        %v1724 = vunpack.c.h.b16 %v1413
        %v1725 = vunpack.c.l.b16 %v1414
        %v1726 = vunpack.c.l.b16 %v1415
        %v1727 = vunpack.c.h.b16 %v1415
        %v1728 = vunpack.c.l.b16 %v1416
        %v1729 = vunpack.c.l.b16 %v1417
        %v1730 = vunpack.c.h.b16 %v1417
        %v1731 = vunpack.c.l.b16 %v1418
        %v1732 = vunpack.c.l.b16 %v1419
        %v1733 = vunpack.c.h.b16 %v1419
        %v1734 = vunpack.c.l.b16 %v1420
        %v1735 = vunpack.c.l.b16 %v1421
        %v1736 = vunpack.c.h.b16 %v1421
        %v1737 = vunpack.c.l.b16 %v1422
        %v1738 = vunpack.c.l.b16 %v1423
        %v1739 = vunpack.c.h.b16 %v1423
        %v1740 = vunpack.c.l.b16 %v1424
        %v1741 = vunpack.c.l.b16 %v1425
        %v1742 = vunpack.c.h.b16 %v1425
        %v1743 = vunpack.c.l.b16 %v1426
        %v1744 = vunpack.c.l.b16 %v1427
        %v1745 = vunpack.c.h.b16 %v1427
        %v1746 = vunpack.c.l.b16 %v1428
        %v1747 = vunpack.c.l.b16 %v1429
        %v1748 = vunpack.c.h.b16 %v1429
        %v1749 = vunpack.c.l.b16 %v1430
        %v1750 = vunpack.c.l.b16 %v1431
        %v1751 = vunpack.c.h.b16 %v1431
        %v1752 = vunpack.c.l.b16 %v1432
        %v1753 = vunpack.c.l.b16 %v1433
        %v1754 = vunpack.c.h.b16 %v1433
        %v1755 = vunpack.c.l.b16 %v1434
        %v1756 = vpack.c.b16 %v1711, %v1708
        %v1757 = vpack.c.b16 %v1712, %v1709
        %v1758 = vpack.c.b16 %v1713, %v1710
        %v1759 = vpack.c.b16 %v1717, %v1714
        %v1760 = vpack.c.b16 %v1718, %v1715
        %v1761 = vpack.c.b16 %v1719, %v1716
        %v1762 = vpack.c.b16 %v1723, %v1720
        %v1763 = vpack.c.b16 %v1724, %v1721
        %v1764 = vpack.c.b16 %v1725, %v1722
        %v1765 = vpack.c.b16 %v1729, %v1726
        %v1766 = vpack.c.b16 %v1730, %v1727
        %v1767 = vpack.c.b16 %v1731, %v1728
        %v1768 = vpack.c.b16 %v1735, %v1732
        %v1769 = vpack.c.b16 %v1736, %v1733
        %v1770 = vpack.c.b16 %v1737, %v1734
        %v1771 = vpack.c.b16 %v1741, %v1738
        %v1772 = vpack.c.b16 %v1742, %v1739
        %v1773 = vpack.c.b16 %v1743, %v1740
        %v1774 = vpack.c.b16 %v1747, %v1744
        %v1775 = vpack.c.b16 %v1748, %v1745
        %v1776 = vpack.c.b16 %v1749, %v1746
        %v1777 = vpack.c.b16 %v1753, %v1750
        %v1778 = vpack.c.b16 %v1754, %v1751
        %v1779 = vpack.c.b16 %v1755, %v1752
        %1804 = vmatprep.subr.bf16.mxu0 %v1757
        %1805 = vmatpush1.bf16.msra.mxu0 %v1756
        %1806 = vmatprep.subr.bf16.mxu0 %v1760
        %1807 = vmatpush1.bf16.msra.mxu0 %v1759
        %1808 = vmatprep.subr.bf16.mxu0 %v1763
        %1809 = vmatpush1.bf16.msra.mxu0 %v1762
        %1810 = vmatprep.subr.bf16.mxu0 %v1766
        %1811 = vmatpush1.bf16.msra.mxu0 %v1765
        %1812 = vmatprep.subr.bf16.mxu0 %v1769
        %1813 = vmatpush1.bf16.msra.mxu0 %v1768
        %1814 = vmatprep.subr.bf16.mxu0 %v1772
        %1815 = vmatpush1.bf16.msra.mxu0 %v1771
        %1816 = vmatprep.subr.bf16.mxu0 %v1775
        %1817 = vmatpush1.bf16.msra.mxu0 %v1774
        %1818 = vmatprep.subr.bf16.mxu0 %v1778
        %1819 = vmatpush1.bf16.msra.mxu0 %v1777
        %1820 = vmatprep.subr.bf16.mxu0 0
        %1821 = vmatpush1.bf16.msra.mxu0 0
        %1822 = vmatprep.subr.bf16.mxu0 0
        %1823 = vmatpush1.bf16.msra.mxu0 0
        %1824 = vmatprep.subr.bf16.mxu0 0
        %1825 = vmatpush1.bf16.msra.mxu0 0
        %1826 = vmatprep.subr.bf16.mxu0 0
        %1827 = vmatpush1.bf16.msra.mxu0 0
        %1828 = vmatprep.subr.bf16.mxu0 0
        %1829 = vmatpush1.bf16.msra.mxu0 0
        %1830 = vmatprep.subr.bf16.mxu0 0
        %1831 = vmatpush1.bf16.msra.mxu0 0
        %1832 = vmatprep.subr.bf16.mxu0 0
        %1833 = vmatpush1.bf16.msra.mxu0 0
        %1834 = vmatprep.subr.bf16.mxu0 0
        %1835 = vmatpush1.bf16.msra.mxu0 0
        %1836 = vmatprep.mubr.bf16.mxu0 0
        %1837 = vmatmul.mubr.bf16.gmra.mrb[0].mxu0 %v1675
        %v1838 = vpop.f32.mrb[0].mxu0
        %v1839 = vadd.f32 0.0, %v1838
        %v1840 = vpop.f32.mrb[0].mxu0
        %v1841 = vadd.f32 0.0, %v1840
        %v1842 = vpop.f32.mrb[0].mxu0
        %v1843 = vadd.f32 0.0, %v1842
        %v1844 = vpop.f32.mrb[0].mxu0
        %v1845 = vadd.f32 0.0, %v1844
        %1846 = vdwg.mxu0
        %1847 = vmatprep.subr.bf16.mxu0 0
        %1848 = vmatpush1.bf16.msra.mxu0 %v1758
        %1849 = vmatprep.subr.bf16.mxu0 0
        %1850 = vmatpush1.bf16.msra.mxu0 %v1761
        %1851 = vmatprep.subr.bf16.mxu0 0
        %1852 = vmatpush1.bf16.msra.mxu0 %v1764
        %1853 = vmatprep.subr.bf16.mxu0 0
        %1854 = vmatpush1.bf16.msra.mxu0 %v1767
        %1855 = vmatprep.subr.bf16.mxu0 0
        %1856 = vmatpush1.bf16.msra.mxu0 %v1770
        %1857 = vmatprep.subr.bf16.mxu0 0
        %1858 = vmatpush1.bf16.msra.mxu0 %v1773
        %1859 = vmatprep.subr.bf16.mxu0 0
        %1860 = vmatpush1.bf16.msra.mxu0 %v1776
        %1861 = vmatprep.subr.bf16.mxu0 0
        %1862 = vmatpush1.bf16.msra.mxu0 %v1779
        %1863 = vmatprep.subr.bf16.mxu0 0
        %1864 = vmatpush1.bf16.msra.mxu0 0
        %1865 = vmatprep.subr.bf16.mxu0 0
        %1866 = vmatpush1.bf16.msra.mxu0 0
        %1867 = vmatprep.subr.bf16.mxu0 0
        %1868 = vmatpush1.bf16.msra.mxu0 0
        %1869 = vmatprep.subr.bf16.mxu0 0
        %1870 = vmatpush1.bf16.msra.mxu0 0
        %1871 = vmatprep.subr.bf16.mxu0 0
        %1872 = vmatpush1.bf16.msra.mxu0 0
        %1873 = vmatprep.subr.bf16.mxu0 0
        %1874 = vmatpush1.bf16.msra.mxu0 0
        %1875 = vmatprep.subr.bf16.mxu0 0
        %1876 = vmatpush1.bf16.msra.mxu0 0
        %1877 = vmatprep.subr.bf16.mxu0 0
        %1878 = vmatpush1.bf16.msra.mxu0 0
        %1879 = vmatprep.mubr.bf16.mxu0 0
        %1880 = vmatmul.mubr.bf16.gmra.mrb[0].mxu0 %v1675
        %v1881 = vpop.f32.mrb[0].mxu0
        %v1882 = vadd.f32 0.0, %v1881
        %v1883 = vpop.f32.mrb[0].mxu0
        %v1884 = vpop.f32.mrb[0].mxu0
        %v1885 = vadd.f32 0.0, %v1884
        %v1886 = vpop.f32.mrb[0].mxu0
        %1887 = vdwg.mxu0
        %v1888 = vunpack.c.l.bf16 %v1456
        %v1889 = vunpack.c.h.bf16 %v1456
        %v1890 = vadd.f32 %v1888, %v1626
        %v1891 = vadd.f32 %v1889, %v1630
        %v1892 = vxor.u32 %v1890, 2147483648
        %v1893 = vxor.u32 %v1891, 2147483648
        %v1894 = vmul.f32 %v1892, 1.442695
        %v1895 = vpow.pop %v1894
        %v1896 = vmul.f32 %v1893, 1.442695
        %v1897 = vpow.pop %v1896
        %v1898 = vadd.f32 %v1895, 1.0
        %v1899 = vadd.f32 %v1897, 1.0
        %v1900 = vrcp.pop %v1898
        %v1901 = vmul.f32 1.0, %v1900
        %v1902 = vrcp.pop %v1899
        %v1903 = vmul.f32 1.0, %v1902
        %v1904 = vunpack.c.l.bf16 %v1457
        %v1905 = vunpack.c.h.bf16 %v1457
        %v1906 = vadd.f32 %v1904, %v1628
        %v1907 = vadd.f32 %v1905, %v1632
        %v1908 = vxor.u32 %v1906, 2147483648
        %v1909 = vxor.u32 %v1907, 2147483648
        %v1910 = vmul.f32 %v1908, 1.442695
        %v1911 = vpow.pop %v1910
        %v1912 = vmul.f32 %v1909, 1.442695
        %v1913 = vpow.pop %v1912
        %v1914 = vadd.f32 %v1911, 1.0
        %v1915 = vadd.f32 %v1913, 1.0
        %v1916 = vrcp.pop %v1914
        %v1917 = vmul.f32 1.0, %v1916
        %v1918 = vrcp.pop %v1915
        %v1919 = vmul.f32 1.0, %v1918
        %v1920 = vadd.f32 %v1669, %v1440
        %v1921 = vadd.f32 %v1672, %v1440
        %v1922 = vmul.f32 %v1901, %v1920
        %v1923 = vmul.f32 %v1903, %v1921
        %v1924 = vunpack.c.l.bf16 %v1458
        %v1925 = vunpack.c.h.bf16 %v1458
        %v1926 = vadd.f32 %v1924, %v1922
        %v1927 = vadd.f32 %v1925, %v1923
        %v1928 = vtanh.pop %v1926
        %v1929 = vtanh.pop %v1927
        %v1930 = vsub.f32 1.0, %v1917
        %v1931 = vsub.f32 1.0, %v1919
        %v1932 = vmul.f32 %v1930, %v1928
        %v1933 = vmul.f32 %v1931, %v1929
        %v1934 = vmul.f32 %v1917, %v1449
        %v1935 = vmul.f32 %v1919, %v1450
        %v1936 = vadd.f32 %v1932, %v1934
        %v1937 = vadd.f32 %v1933, %v1935
        %v1938 = vunpack.c.l.bf16 %v1459
        %v1939 = vunpack.c.h.bf16 %v1459
        %v1940 = vadd.f32 %v1938, %v1839
        %v1941 = vadd.f32 %v1939, %v1843
        %v1942 = vxor.u32 %v1940, 2147483648
        %v1943 = vxor.u32 %v1941, 2147483648
        %v1944 = vmul.f32 %v1942, 1.442695
        %v1945 = vpow.pop %v1944
        %v1946 = vmul.f32 %v1943, 1.442695
        %v1947 = vpow.pop %v1946
        %v1948 = vadd.f32 %v1945, 1.0
        %v1949 = vadd.f32 %v1947, 1.0
        %v1950 = vrcp.pop %v1948
        %v1951 = vmul.f32 1.0, %v1950
        %v1952 = vrcp.pop %v1949
        %v1953 = vmul.f32 1.0, %v1952
        %v1954 = vunpack.c.l.bf16 %v1460
        %v1955 = vunpack.c.h.bf16 %v1460
        %v1956 = vadd.f32 %v1954, %v1841
        %v1957 = vadd.f32 %v1955, %v1845
        %v1958 = vxor.u32 %v1956, 2147483648
        %v1959 = vxor.u32 %v1957, 2147483648
        %v1960 = vmul.f32 %v1958, 1.442695
        %v1961 = vpow.pop %v1960
        %v1962 = vmul.f32 %v1959, 1.442695
        %v1963 = vpow.pop %v1962
        %v1964 = vadd.f32 %v1961, 1.0
        %v1965 = vadd.f32 %v1963, 1.0
        %v1966 = vrcp.pop %v1964
        %v1967 = vmul.f32 1.0, %v1966
        %v1968 = vrcp.pop %v1965
        %v1969 = vmul.f32 1.0, %v1968
        %v1970 = vadd.f32 %v1882, %v1447
        %v1971 = vadd.f32 %v1885, %v1447
        %v1972 = vmul.f32 %v1951, %v1970
        %v1973 = vmul.f32 %v1953, %v1971
        %v1974 = vunpack.c.l.bf16 %v1461
        %v1975 = vunpack.c.h.bf16 %v1461
        %v1976 = vadd.f32 %v1974, %v1972
        %v1977 = vadd.f32 %v1975, %v1973
        %v1978 = vtanh.pop %v1976
        %v1979 = vtanh.pop %v1977
        %v1980 = vsub.f32 1.0, %v1967
        %v1981 = vsub.f32 1.0, %v1969
        %v1982 = vmul.f32 %v1980, %v1978
        %v1983 = vmul.f32 %v1981, %v1979
        %v1984 = vmul.f32 %v1967, %v1451
        %v1985 = vmul.f32 %v1969, %v1452
        %v1986 = vadd.f32 %v1982, %v1984
        %v1987 = vadd.f32 %v1983, %v1985
        %s1988 = smul.u32 %s34, 6
        %p1989 = scmp.lt.s32.totalorder %s1988, 8
        %s1990 = scalar_select %p1989, 1, 0
        %v1991 = vstv %s1990
        %vm1992 = vcmp.eq.s32.totalorder %v1991, 1
        %v1993 = vsel %vm1992, %v1936, %v1449
        %v1994 = vsel %vm1992, %v1937, %v1450
        %v1995 = vsel %vm1992, %v1986, %v1451
        %v1996 = vsel %vm1992, %v1987, %v1452
        %1997 = vst [vmem:[#allocation3] sm:$0xff] %v1993
        %1998 = vst [vmem:[#allocation3 + $0x8] sm:$0xff] %v1994
        %1999 = vst [vmem:[#allocation4] sm:$0xff] %v1995
        %2000 = vst [vmem:[#allocation4 + $0x8] sm:$0xff] %v1996
        %v2001 = vpack.c.bf16 %v1994, %v1993
        %v2002 = vpack.c.bf16 %v1996, %v1995
        %v2005 = vunpack.c.l.b16 %v2001
        %v2006 = vunpack.c.l.b16 %v2002
        %v2007 = vunpack.c.h.b16 %v2001
        %v2008 = vunpack.c.h.b16 %v2002
        %v2009 = vpack.c.b16 %v2006, %v2005
        %v2010 = vpack.c.b16 %v2008, %v2007
        %2013 = vst [vmem:[%s486] sm:$0xff] %v2009
        %2014 = vst [vmem:[%s486 + $0x8] sm:$0xff] %v2010
        %v2015 = vld [vmem:[#allocation3] sm:$0xff]
        %v2016 = vld [vmem:[#allocation3 + $0x8] sm:$0xff]
        %v2017 = vld [vmem:[#allocation4] sm:$0xff]
        %v2018 = vld [vmem:[#allocation4 + $0x8] sm:$0xff]
        %s2019 = smul.u32 1, 6
        %s2020 = smul.addr %s2019, 8
        %s2021 = scalar_lea.vmem [#allocation2], %s2020
        %v2022 = vld [vmem:[%s2021] sm:$0xff]
        %v2023 = vld [vmem:[%s2021 + $0x8] sm:$0xff]
        %v2024 = vld [vmem:[%s2021 + $0x10] sm:$0xff]
        %v2025 = vld [vmem:[%s2021 + $0x18] sm:$0xff]
        %v2026 = vld [vmem:[%s2021 + $0x20] sm:$0xff]
        %v2027 = vld [vmem:[%s2021 + $0x28] sm:$0xff]
        %v2028 = vpack.c.bf16 %v2016, %v2015
        %2029 = vmatprep.subr.bf16.mxu0 %v1544
        %2030 = vmatpush1.bf16.msra.mxu0 %v1543
        %2031 = vmatprep.subr.bf16.mxu0 %v1547
        %2032 = vmatpush1.bf16.msra.mxu0 %v1546
        %2033 = vmatprep.subr.bf16.mxu0 %v1550
        %2034 = vmatpush1.bf16.msra.mxu0 %v1549
        %2035 = vmatprep.subr.bf16.mxu0 %v1553
        %2036 = vmatpush1.bf16.msra.mxu0 %v1552
        %2037 = vmatprep.subr.bf16.mxu0 %v1556
        %2038 = vmatpush1.bf16.msra.mxu0 %v1555
        %2039 = vmatprep.subr.bf16.mxu0 %v1559
        %2040 = vmatpush1.bf16.msra.mxu0 %v1558
        %2041 = vmatprep.subr.bf16.mxu0 %v1562
        %2042 = vmatpush1.bf16.msra.mxu0 %v1561
        %2043 = vmatprep.subr.bf16.mxu0 %v1565
        %2044 = vmatpush1.bf16.msra.mxu0 %v1564
        %2045 = vmatprep.subr.bf16.mxu0 0
        %2046 = vmatpush1.bf16.msra.mxu0 0
        %2047 = vmatprep.subr.bf16.mxu0 0
        %2048 = vmatpush1.bf16.msra.mxu0 0
        %2049 = vmatprep.subr.bf16.mxu0 0
        %2050 = vmatpush1.bf16.msra.mxu0 0
        %2051 = vmatprep.subr.bf16.mxu0 0
        %2052 = vmatpush1.bf16.msra.mxu0 0
        %2053 = vmatprep.subr.bf16.mxu0 0
        %2054 = vmatpush1.bf16.msra.mxu0 0
        %2055 = vmatprep.subr.bf16.mxu0 0
        %2056 = vmatpush1.bf16.msra.mxu0 0
        %2057 = vmatprep.subr.bf16.mxu0 0
        %2058 = vmatpush1.bf16.msra.mxu0 0
        %2059 = vmatprep.subr.bf16.mxu0 0
        %2060 = vmatpush1.bf16.msra.mxu0 0
        %2061 = vmatprep.mubr.bf16.mxu0 0
        %2062 = vmatmul.mubr.bf16.gmra.mrb[0].mxu0 %v2028
        %v2063 = vpop.f32.mrb[0].mxu0
        %v2064 = vadd.f32 0.0, %v2063
        %v2065 = vpop.f32.mrb[0].mxu0
        %v2066 = vadd.f32 0.0, %v2065
        %v2067 = vpop.f32.mrb[0].mxu0
        %v2068 = vadd.f32 0.0, %v2067
        %v2069 = vpop.f32.mrb[0].mxu0
        %v2070 = vadd.f32 0.0, %v2069
        %2071 = vdwg.mxu0
        %2072 = vmatprep.subr.bf16.mxu0 0
        %2073 = vmatpush1.bf16.msra.mxu0 %v1545
        %2074 = vmatprep.subr.bf16.mxu0 0
        %2075 = vmatpush1.bf16.msra.mxu0 %v1548
        %2076 = vmatprep.subr.bf16.mxu0 0
        %2077 = vmatpush1.bf16.msra.mxu0 %v1551
        %2078 = vmatprep.subr.bf16.mxu0 0
        %2079 = vmatpush1.bf16.msra.mxu0 %v1554
        %2080 = vmatprep.subr.bf16.mxu0 0
        %2081 = vmatpush1.bf16.msra.mxu0 %v1557
        %2082 = vmatprep.subr.bf16.mxu0 0
        %2083 = vmatpush1.bf16.msra.mxu0 %v1560
        %2084 = vmatprep.subr.bf16.mxu0 0
        %2085 = vmatpush1.bf16.msra.mxu0 %v1563
        %2086 = vmatprep.subr.bf16.mxu0 0
        %2087 = vmatpush1.bf16.msra.mxu0 %v1566
        %2088 = vmatprep.subr.bf16.mxu0 0
        %2089 = vmatpush1.bf16.msra.mxu0 0
        %2090 = vmatprep.subr.bf16.mxu0 0
        %2091 = vmatpush1.bf16.msra.mxu0 0
        %2092 = vmatprep.subr.bf16.mxu0 0
        %2093 = vmatpush1.bf16.msra.mxu0 0
        %2094 = vmatprep.subr.bf16.mxu0 0
        %2095 = vmatpush1.bf16.msra.mxu0 0
        %2096 = vmatprep.subr.bf16.mxu0 0
        %2097 = vmatpush1.bf16.msra.mxu0 0
        %2098 = vmatprep.subr.bf16.mxu0 0
        %2099 = vmatpush1.bf16.msra.mxu0 0
        %2100 = vmatprep.subr.bf16.mxu0 0
        %2101 = vmatpush1.bf16.msra.mxu0 0
        %2102 = vmatprep.subr.bf16.mxu0 0
        %2103 = vmatpush1.bf16.msra.mxu0 0
        %2104 = vmatprep.mubr.bf16.mxu0 0
        %2105 = vmatmul.mubr.bf16.gmra.mrb[0].mxu0 %v2028
        %v2106 = vpop.f32.mrb[0].mxu0
        %v2107 = vadd.f32 0.0, %v2106
        %v2108 = vpop.f32.mrb[0].mxu0
        %v2109 = vpop.f32.mrb[0].mxu0
        %v2110 = vadd.f32 0.0, %v2109
        %v2111 = vpop.f32.mrb[0].mxu0
        %2112 = vdwg.mxu0
        %v2113 = vpack.c.bf16 %v2018, %v2017
        %2114 = vmatprep.subr.bf16.mxu0 %v1757
        %2115 = vmatpush1.bf16.msra.mxu0 %v1756
        %2116 = vmatprep.subr.bf16.mxu0 %v1760
        %2117 = vmatpush1.bf16.msra.mxu0 %v1759
        %2118 = vmatprep.subr.bf16.mxu0 %v1763
        %2119 = vmatpush1.bf16.msra.mxu0 %v1762
        %2120 = vmatprep.subr.bf16.mxu0 %v1766
        %2121 = vmatpush1.bf16.msra.mxu0 %v1765
        %2122 = vmatprep.subr.bf16.mxu0 %v1769
        %2123 = vmatpush1.bf16.msra.mxu0 %v1768
        %2124 = vmatprep.subr.bf16.mxu0 %v1772
        %2125 = vmatpush1.bf16.msra.mxu0 %v1771
        %2126 = vmatprep.subr.bf16.mxu0 %v1775
        %2127 = vmatpush1.bf16.msra.mxu0 %v1774
        %2128 = vmatprep.subr.bf16.mxu0 %v1778
        %2129 = vmatpush1.bf16.msra.mxu0 %v1777
        %2130 = vmatprep.subr.bf16.mxu0 0
        %2131 = vmatpush1.bf16.msra.mxu0 0
        %2132 = vmatprep.subr.bf16.mxu0 0
        %2133 = vmatpush1.bf16.msra.mxu0 0
        %2134 = vmatprep.subr.bf16.mxu0 0
        %2135 = vmatpush1.bf16.msra.mxu0 0
        %2136 = vmatprep.subr.bf16.mxu0 0
        %2137 = vmatpush1.bf16.msra.mxu0 0
        %2138 = vmatprep.subr.bf16.mxu0 0
        %2139 = vmatpush1.bf16.msra.mxu0 0
        %2140 = vmatprep.subr.bf16.mxu0 0
        %2141 = vmatpush1.bf16.msra.mxu0 0
        %2142 = vmatprep.subr.bf16.mxu0 0
        %2143 = vmatpush1.bf16.msra.mxu0 0
        %2144 = vmatprep.subr.bf16.mxu0 0
        %2145 = vmatpush1.bf16.msra.mxu0 0
        %2146 = vmatprep.mubr.bf16.mxu0 0
        %2147 = vmatmul.mubr.bf16.gmra.mrb[0].mxu0 %v2113
        %v2148 = vpop.f32.mrb[0].mxu0
        %v2149 = vadd.f32 0.0, %v2148
        %v2150 = vpop.f32.mrb[0].mxu0
        %v2151 = vadd.f32 0.0, %v2150
        %v2152 = vpop.f32.mrb[0].mxu0
        %v2153 = vadd.f32 0.0, %v2152
        %v2154 = vpop.f32.mrb[0].mxu0
        %v2155 = vadd.f32 0.0, %v2154
        %2156 = vdwg.mxu0
        %2157 = vmatprep.subr.bf16.mxu0 0
        %2158 = vmatpush1.bf16.msra.mxu0 %v1758
        %2159 = vmatprep.subr.bf16.mxu0 0
        %2160 = vmatpush1.bf16.msra.mxu0 %v1761
        %2161 = vmatprep.subr.bf16.mxu0 0
        %2162 = vmatpush1.bf16.msra.mxu0 %v1764
        %2163 = vmatprep.subr.bf16.mxu0 0
        %2164 = vmatpush1.bf16.msra.mxu0 %v1767
        %2165 = vmatprep.subr.bf16.mxu0 0
        %2166 = vmatpush1.bf16.msra.mxu0 %v1770
        %2167 = vmatprep.subr.bf16.mxu0 0
        %2168 = vmatpush1.bf16.msra.mxu0 %v1773
        %2169 = vmatprep.subr.bf16.mxu0 0
        %2170 = vmatpush1.bf16.msra.mxu0 %v1776
        %2171 = vmatprep.subr.bf16.mxu0 0
        %2172 = vmatpush1.bf16.msra.mxu0 %v1779
        %2173 = vmatprep.subr.bf16.mxu0 0
        %2174 = vmatpush1.bf16.msra.mxu0 0
        %2175 = vmatprep.subr.bf16.mxu0 0
        %2176 = vmatpush1.bf16.msra.mxu0 0
        %2177 = vmatprep.subr.bf16.mxu0 0
        %2178 = vmatpush1.bf16.msra.mxu0 0
        %2179 = vmatprep.subr.bf16.mxu0 0
        %2180 = vmatpush1.bf16.msra.mxu0 0
        %2181 = vmatprep.subr.bf16.mxu0 0
        %2182 = vmatpush1.bf16.msra.mxu0 0
        %2183 = vmatprep.subr.bf16.mxu0 0
        %2184 = vmatpush1.bf16.msra.mxu0 0
        %2185 = vmatprep.subr.bf16.mxu0 0
        %2186 = vmatpush1.bf16.msra.mxu0 0
        %2187 = vmatprep.subr.bf16.mxu0 0
        %2188 = vmatpush1.bf16.msra.mxu0 0
        %2189 = vmatprep.mubr.bf16.mxu0 0
        %2190 = vmatmul.mubr.bf16.gmra.mrb[0].mxu0 %v2113
        %v2191 = vpop.f32.mrb[0].mxu0
        %v2192 = vadd.f32 0.0, %v2191
        %v2193 = vpop.f32.mrb[0].mxu0
        %v2194 = vpop.f32.mrb[0].mxu0
        %v2195 = vadd.f32 0.0, %v2194
        %v2196 = vpop.f32.mrb[0].mxu0
        %2197 = vdwg.mxu0
        %v2198 = vunpack.c.l.bf16 %v2022
        %v2199 = vunpack.c.h.bf16 %v2022
        %v2200 = vadd.f32 %v2198, %v2064
        %v2201 = vadd.f32 %v2199, %v2068
        %v2202 = vxor.u32 %v2200, 2147483648
        %v2203 = vxor.u32 %v2201, 2147483648
        %v2204 = vmul.f32 %v2202, 1.442695
        %v2205 = vpow.pop %v2204
        %v2206 = vmul.f32 %v2203, 1.442695
        %v2207 = vpow.pop %v2206
        %v2208 = vadd.f32 %v2205, 1.0
        %v2209 = vadd.f32 %v2207, 1.0
        %v2210 = vrcp.pop %v2208
        %v2211 = vmul.f32 1.0, %v2210
        %v2212 = vrcp.pop %v2209
        %v2213 = vmul.f32 1.0, %v2212
        %v2214 = vunpack.c.l.bf16 %v2023
        %v2215 = vunpack.c.h.bf16 %v2023
        %v2216 = vadd.f32 %v2214, %v2066
        %v2217 = vadd.f32 %v2215, %v2070
        %v2218 = vxor.u32 %v2216, 2147483648
        %v2219 = vxor.u32 %v2217, 2147483648
        %v2220 = vmul.f32 %v2218, 1.442695
        %v2221 = vpow.pop %v2220
        %v2222 = vmul.f32 %v2219, 1.442695
        %v2223 = vpow.pop %v2222
        %v2224 = vadd.f32 %v2221, 1.0
        %v2225 = vadd.f32 %v2223, 1.0
        %v2226 = vrcp.pop %v2224
        %v2227 = vmul.f32 1.0, %v2226
        %v2228 = vrcp.pop %v2225
        %v2229 = vmul.f32 1.0, %v2228
        %v2230 = vadd.f32 %v2107, %v1440
        %v2231 = vadd.f32 %v2110, %v1440
        %v2232 = vmul.f32 %v2211, %v2230
        %v2233 = vmul.f32 %v2213, %v2231
        %v2234 = vunpack.c.l.bf16 %v2024
        %v2235 = vunpack.c.h.bf16 %v2024
        %v2236 = vadd.f32 %v2234, %v2232
        %v2237 = vadd.f32 %v2235, %v2233
        %v2238 = vtanh.pop %v2236
        %v2239 = vtanh.pop %v2237
        %v2240 = vsub.f32 1.0, %v2227
        %v2241 = vsub.f32 1.0, %v2229
        %v2242 = vmul.f32 %v2240, %v2238
        %v2243 = vmul.f32 %v2241, %v2239
        %v2244 = vmul.f32 %v2227, %v2015
        %v2245 = vmul.f32 %v2229, %v2016
        %v2246 = vadd.f32 %v2242, %v2244
        %v2247 = vadd.f32 %v2243, %v2245
        %v2248 = vunpack.c.l.bf16 %v2025
        %v2249 = vunpack.c.h.bf16 %v2025
        %v2250 = vadd.f32 %v2248, %v2149
        %v2251 = vadd.f32 %v2249, %v2153
        %v2252 = vxor.u32 %v2250, 2147483648
        %v2253 = vxor.u32 %v2251, 2147483648
        %v2254 = vmul.f32 %v2252, 1.442695
        %v2255 = vpow.pop %v2254
        %v2256 = vmul.f32 %v2253, 1.442695
        %v2257 = vpow.pop %v2256
        %v2258 = vadd.f32 %v2255, 1.0
        %v2259 = vadd.f32 %v2257, 1.0
        %v2260 = vrcp.pop %v2258
        %v2261 = vmul.f32 1.0, %v2260
        %v2262 = vrcp.pop %v2259
        %v2263 = vmul.f32 1.0, %v2262
        %v2264 = vunpack.c.l.bf16 %v2026
        %v2265 = vunpack.c.h.bf16 %v2026
        %v2266 = vadd.f32 %v2264, %v2151
        %v2267 = vadd.f32 %v2265, %v2155
        %v2268 = vxor.u32 %v2266, 2147483648
        %v2269 = vxor.u32 %v2267, 2147483648
        %v2270 = vmul.f32 %v2268, 1.442695
        %v2271 = vpow.pop %v2270
        %v2272 = vmul.f32 %v2269, 1.442695
        %v2273 = vpow.pop %v2272
        %v2274 = vadd.f32 %v2271, 1.0
        %v2275 = vadd.f32 %v2273, 1.0
        %v2276 = vrcp.pop %v2274
        %v2277 = vmul.f32 1.0, %v2276
        %v2278 = vrcp.pop %v2275
        %v2279 = vmul.f32 1.0, %v2278
        %v2280 = vadd.f32 %v2192, %v1447
        %v2281 = vadd.f32 %v2195, %v1447
        %v2282 = vmul.f32 %v2261, %v2280
        %v2283 = vmul.f32 %v2263, %v2281
        %v2284 = vunpack.c.l.bf16 %v2027
        %v2285 = vunpack.c.h.bf16 %v2027
        %v2286 = vadd.f32 %v2284, %v2282
        %v2287 = vadd.f32 %v2285, %v2283
        %v2288 = vtanh.pop %v2286
        %v2289 = vtanh.pop %v2287
        %v2290 = vsub.f32 1.0, %v2277
        %v2291 = vsub.f32 1.0, %v2279
        %v2292 = vmul.f32 %v2290, %v2288
        %v2293 = vmul.f32 %v2291, %v2289
        %v2294 = vmul.f32 %v2277, %v2017
        %v2295 = vmul.f32 %v2279, %v2018
        %v2296 = vadd.f32 %v2292, %v2294
        %v2297 = vadd.f32 %v2293, %v2295
        %s2298 = sadd.s32 %s1988, 1
        %p2299 = scmp.lt.s32.totalorder %s2298, 8
        %s2300 = scalar_select %p2299, 1, 0
        %v2301 = vstv %s2300
        %vm2302 = vcmp.eq.s32.totalorder %v2301, 1
        %v2303 = vsel %vm2302, %v2246, %v2015
        %v2304 = vsel %vm2302, %v2247, %v2016
        %v2305 = vsel %vm2302, %v2296, %v2017
        %v2306 = vsel %vm2302, %v2297, %v2018
        %2307 = vst [vmem:[#allocation3] sm:$0xff] %v2303
        %2308 = vst [vmem:[#allocation3 + $0x8] sm:$0xff] %v2304
        %2309 = vst [vmem:[#allocation4] sm:$0xff] %v2305
        %2310 = vst [vmem:[#allocation4 + $0x8] sm:$0xff] %v2306
        %v2311 = vpack.c.bf16 %v2304, %v2303
        %v2312 = vpack.c.bf16 %v2306, %v2305
        %v2315 = vunpack.c.l.b16 %v2311
        %v2316 = vunpack.c.l.b16 %v2312
        %v2317 = vunpack.c.h.b16 %v2311
        %v2318 = vunpack.c.h.b16 %v2312
        %v2319 = vpack.c.b16 %v2316, %v2315
        %v2320 = vpack.c.b16 %v2318, %v2317
        %s2323 = scalar_lea.vmem %s486, 16 [#allocation17]
        %2324 = vst [vmem:[%s2323] sm:$0xff] %v2319
        %2325 = vst [vmem:[%s2323 + $0x8] sm:$0xff] %v2320
        %v2326 = vld [vmem:[#allocation3] sm:$0xff]
        %v2327 = vld [vmem:[#allocation3 + $0x8] sm:$0xff]
        %v2328 = vld [vmem:[#allocation4] sm:$0xff]
        %v2329 = vld [vmem:[#allocation4 + $0x8] sm:$0xff]
        %s2330 = smul.u32 2, 6
        %s2331 = smul.addr %s2330, 8
        %s2332 = scalar_lea.vmem [#allocation2], %s2331
        %v2333 = vld [vmem:[%s2332] sm:$0xff]
        %v2334 = vld [vmem:[%s2332 + $0x8] sm:$0xff]
        %v2335 = vld [vmem:[%s2332 + $0x10] sm:$0xff]
        %v2336 = vld [vmem:[%s2332 + $0x18] sm:$0xff]
        %v2337 = vld [vmem:[%s2332 + $0x20] sm:$0xff]
        %v2338 = vld [vmem:[%s2332 + $0x28] sm:$0xff]
        %v2339 = vpack.c.bf16 %v2327, %v2326
        %2340 = vmatprep.subr.bf16.mxu0 %v1544
        %2341 = vmatpush1.bf16.msra.mxu0 %v1543
        %2342 = vmatprep.subr.bf16.mxu0 %v1547
        %2343 = vmatpush1.bf16.msra.mxu0 %v1546
        %2344 = vmatprep.subr.bf16.mxu0 %v1550
        %2345 = vmatpush1.bf16.msra.mxu0 %v1549
        %2346 = vmatprep.subr.bf16.mxu0 %v1553
        %2347 = vmatpush1.bf16.msra.mxu0 %v1552
        %2348 = vmatprep.subr.bf16.mxu0 %v1556
        %2349 = vmatpush1.bf16.msra.mxu0 %v1555
        %2350 = vmatprep.subr.bf16.mxu0 %v1559
        %2351 = vmatpush1.bf16.msra.mxu0 %v1558
        %2352 = vmatprep.subr.bf16.mxu0 %v1562
        %2353 = vmatpush1.bf16.msra.mxu0 %v1561
        %2354 = vmatprep.subr.bf16.mxu0 %v1565
        %2355 = vmatpush1.bf16.msra.mxu0 %v1564
        %2356 = vmatprep.subr.bf16.mxu0 0
        %2357 = vmatpush1.bf16.msra.mxu0 0
        %2358 = vmatprep.subr.bf16.mxu0 0
        %2359 = vmatpush1.bf16.msra.mxu0 0
        %2360 = vmatprep.subr.bf16.mxu0 0
        %2361 = vmatpush1.bf16.msra.mxu0 0
        %2362 = vmatprep.subr.bf16.mxu0 0
        %2363 = vmatpush1.bf16.msra.mxu0 0
        %2364 = vmatprep.subr.bf16.mxu0 0
        %2365 = vmatpush1.bf16.msra.mxu0 0
        %2366 = vmatprep.subr.bf16.mxu0 0
        %2367 = vmatpush1.bf16.msra.mxu0 0
        %2368 = vmatprep.subr.bf16.mxu0 0
        %2369 = vmatpush1.bf16.msra.mxu0 0
        %2370 = vmatprep.subr.bf16.mxu0 0
        %2371 = vmatpush1.bf16.msra.mxu0 0
        %2372 = vmatprep.mubr.bf16.mxu0 0
        %2373 = vmatmul.mubr.bf16.gmra.mrb[0].mxu0 %v2339
        %v2374 = vpop.f32.mrb[0].mxu0
        %v2375 = vadd.f32 0.0, %v2374
        %v2376 = vpop.f32.mrb[0].mxu0
        %v2377 = vadd.f32 0.0, %v2376
        %v2378 = vpop.f32.mrb[0].mxu0
        %v2379 = vadd.f32 0.0, %v2378
        %v2380 = vpop.f32.mrb[0].mxu0
        %v2381 = vadd.f32 0.0, %v2380
        %2382 = vdwg.mxu0
        %2383 = vmatprep.subr.bf16.mxu0 0
        %2384 = vmatpush1.bf16.msra.mxu0 %v1545
        %2385 = vmatprep.subr.bf16.mxu0 0
        %2386 = vmatpush1.bf16.msra.mxu0 %v1548
        %2387 = vmatprep.subr.bf16.mxu0 0
        %2388 = vmatpush1.bf16.msra.mxu0 %v1551
        %2389 = vmatprep.subr.bf16.mxu0 0
        %2390 = vmatpush1.bf16.msra.mxu0 %v1554
        %2391 = vmatprep.subr.bf16.mxu0 0
        %2392 = vmatpush1.bf16.msra.mxu0 %v1557
        %2393 = vmatprep.subr.bf16.mxu0 0
        %2394 = vmatpush1.bf16.msra.mxu0 %v1560
        %2395 = vmatprep.subr.bf16.mxu0 0
        %2396 = vmatpush1.bf16.msra.mxu0 %v1563
        %2397 = vmatprep.subr.bf16.mxu0 0
        %2398 = vmatpush1.bf16.msra.mxu0 %v1566
        %2399 = vmatprep.subr.bf16.mxu0 0
        %2400 = vmatpush1.bf16.msra.mxu0 0
        %2401 = vmatprep.subr.bf16.mxu0 0
        %2402 = vmatpush1.bf16.msra.mxu0 0
        %2403 = vmatprep.subr.bf16.mxu0 0
        %2404 = vmatpush1.bf16.msra.mxu0 0
        %2405 = vmatprep.subr.bf16.mxu0 0
        %2406 = vmatpush1.bf16.msra.mxu0 0
        %2407 = vmatprep.subr.bf16.mxu0 0
        %2408 = vmatpush1.bf16.msra.mxu0 0
        %2409 = vmatprep.subr.bf16.mxu0 0
        %2410 = vmatpush1.bf16.msra.mxu0 0
        %2411 = vmatprep.subr.bf16.mxu0 0
        %2412 = vmatpush1.bf16.msra.mxu0 0
        %2413 = vmatprep.subr.bf16.mxu0 0
        %2414 = vmatpush1.bf16.msra.mxu0 0
        %2415 = vmatprep.mubr.bf16.mxu0 0
        %2416 = vmatmul.mubr.bf16.gmra.mrb[0].mxu0 %v2339
        %v2417 = vpop.f32.mrb[0].mxu0
        %v2418 = vadd.f32 0.0, %v2417
        %v2419 = vpop.f32.mrb[0].mxu0
        %v2420 = vpop.f32.mrb[0].mxu0
        %v2421 = vadd.f32 0.0, %v2420
        %v2422 = vpop.f32.mrb[0].mxu0
        %2423 = vdwg.mxu0
        %v2424 = vpack.c.bf16 %v2329, %v2328
        %2425 = vmatprep.subr.bf16.mxu0 %v1757
        %2426 = vmatpush1.bf16.msra.mxu0 %v1756
        %2427 = vmatprep.subr.bf16.mxu0 %v1760
        %2428 = vmatpush1.bf16.msra.mxu0 %v1759
        %2429 = vmatprep.subr.bf16.mxu0 %v1763
        %2430 = vmatpush1.bf16.msra.mxu0 %v1762
        %2431 = vmatprep.subr.bf16.mxu0 %v1766
        %2432 = vmatpush1.bf16.msra.mxu0 %v1765
        %2433 = vmatprep.subr.bf16.mxu0 %v1769
        %2434 = vmatpush1.bf16.msra.mxu0 %v1768
        %2435 = vmatprep.subr.bf16.mxu0 %v1772
        %2436 = vmatpush1.bf16.msra.mxu0 %v1771
        %2437 = vmatprep.subr.bf16.mxu0 %v1775
        %2438 = vmatpush1.bf16.msra.mxu0 %v1774
        %2439 = vmatprep.subr.bf16.mxu0 %v1778
        %2440 = vmatpush1.bf16.msra.mxu0 %v1777
        %2441 = vmatprep.subr.bf16.mxu0 0
        %2442 = vmatpush1.bf16.msra.mxu0 0
        %2443 = vmatprep.subr.bf16.mxu0 0
        %2444 = vmatpush1.bf16.msra.mxu0 0
        %2445 = vmatprep.subr.bf16.mxu0 0
        %2446 = vmatpush1.bf16.msra.mxu0 0
        %2447 = vmatprep.subr.bf16.mxu0 0
        %2448 = vmatpush1.bf16.msra.mxu0 0
        %2449 = vmatprep.subr.bf16.mxu0 0
        %2450 = vmatpush1.bf16.msra.mxu0 0
        %2451 = vmatprep.subr.bf16.mxu0 0
        %2452 = vmatpush1.bf16.msra.mxu0 0
        %2453 = vmatprep.subr.bf16.mxu0 0
        %2454 = vmatpush1.bf16.msra.mxu0 0
        %2455 = vmatprep.subr.bf16.mxu0 0
        %2456 = vmatpush1.bf16.msra.mxu0 0
        %2457 = vmatprep.mubr.bf16.mxu0 0
        %2458 = vmatmul.mubr.bf16.gmra.mrb[0].mxu0 %v2424
        %v2459 = vpop.f32.mrb[0].mxu0
        %v2460 = vadd.f32 0.0, %v2459
        %v2461 = vpop.f32.mrb[0].mxu0
        %v2462 = vadd.f32 0.0, %v2461
        %v2463 = vpop.f32.mrb[0].mxu0
        %v2464 = vadd.f32 0.0, %v2463
        %v2465 = vpop.f32.mrb[0].mxu0
        %v2466 = vadd.f32 0.0, %v2465
        %2467 = vdwg.mxu0
        %2468 = vmatprep.subr.bf16.mxu0 0
        %2469 = vmatpush1.bf16.msra.mxu0 %v1758
        %2470 = vmatprep.subr.bf16.mxu0 0
        %2471 = vmatpush1.bf16.msra.mxu0 %v1761
        %2472 = vmatprep.subr.bf16.mxu0 0
        %2473 = vmatpush1.bf16.msra.mxu0 %v1764
        %2474 = vmatprep.subr.bf16.mxu0 0
        %2475 = vmatpush1.bf16.msra.mxu0 %v1767
        %2476 = vmatprep.subr.bf16.mxu0 0
        %2477 = vmatpush1.bf16.msra.mxu0 %v1770
        %2478 = vmatprep.subr.bf16.mxu0 0
        %2479 = vmatpush1.bf16.msra.mxu0 %v1773
        %2480 = vmatprep.subr.bf16.mxu0 0
        %2481 = vmatpush1.bf16.msra.mxu0 %v1776
        %2482 = vmatprep.subr.bf16.mxu0 0
        %2483 = vmatpush1.bf16.msra.mxu0 %v1779
        %2484 = vmatprep.subr.bf16.mxu0 0
        %2485 = vmatpush1.bf16.msra.mxu0 0
        %2486 = vmatprep.subr.bf16.mxu0 0
        %2487 = vmatpush1.bf16.msra.mxu0 0
        %2488 = vmatprep.subr.bf16.mxu0 0
        %2489 = vmatpush1.bf16.msra.mxu0 0
        %2490 = vmatprep.subr.bf16.mxu0 0
        %2491 = vmatpush1.bf16.msra.mxu0 0
        %2492 = vmatprep.subr.bf16.mxu0 0
        %2493 = vmatpush1.bf16.msra.mxu0 0
        %2494 = vmatprep.subr.bf16.mxu0 0
        %2495 = vmatpush1.bf16.msra.mxu0 0
        %2496 = vmatprep.subr.bf16.mxu0 0
        %2497 = vmatpush1.bf16.msra.mxu0 0
        %2498 = vmatprep.subr.bf16.mxu0 0
        %2499 = vmatpush1.bf16.msra.mxu0 0
        %2500 = vmatprep.mubr.bf16.mxu0 0
        %2501 = vmatmul.mubr.bf16.gmra.mrb[0].mxu0 %v2424
        %v2502 = vpop.f32.mrb[0].mxu0
        %v2503 = vadd.f32 0.0, %v2502
        %v2504 = vpop.f32.mrb[0].mxu0
        %v2505 = vpop.f32.mrb[0].mxu0
        %v2506 = vadd.f32 0.0, %v2505
        %v2507 = vpop.f32.mrb[0].mxu0
        %2508 = vdwg.mxu0
        %v2509 = vunpack.c.l.bf16 %v2333
        %v2510 = vunpack.c.h.bf16 %v2333
        %v2511 = vadd.f32 %v2509, %v2375
        %v2512 = vadd.f32 %v2510, %v2379
        %v2513 = vxor.u32 %v2511, 2147483648
        %v2514 = vxor.u32 %v2512, 2147483648
        %v2515 = vmul.f32 %v2513, 1.442695
        %v2516 = vpow.pop %v2515
        %v2517 = vmul.f32 %v2514, 1.442695
        %v2518 = vpow.pop %v2517
        %v2519 = vadd.f32 %v2516, 1.0
        %v2520 = vadd.f32 %v2518, 1.0
        %v2521 = vrcp.pop %v2519
        %v2522 = vmul.f32 1.0, %v2521
        %v2523 = vrcp.pop %v2520
        %v2524 = vmul.f32 1.0, %v2523
        %v2525 = vunpack.c.l.bf16 %v2334
        %v2526 = vunpack.c.h.bf16 %v2334
        %v2527 = vadd.f32 %v2525, %v2377
        %v2528 = vadd.f32 %v2526, %v2381
        %v2529 = vxor.u32 %v2527, 2147483648
        %v2530 = vxor.u32 %v2528, 2147483648
        %v2531 = vmul.f32 %v2529, 1.442695
        %v2532 = vpow.pop %v2531
        %v2533 = vmul.f32 %v2530, 1.442695
        %v2534 = vpow.pop %v2533
        %v2535 = vadd.f32 %v2532, 1.0
        %v2536 = vadd.f32 %v2534, 1.0
        %v2537 = vrcp.pop %v2535
        %v2538 = vmul.f32 1.0, %v2537
        %v2539 = vrcp.pop %v2536
        %v2540 = vmul.f32 1.0, %v2539
        %v2541 = vadd.f32 %v2418, %v1440
        %v2542 = vadd.f32 %v2421, %v1440
        %v2543 = vmul.f32 %v2522, %v2541
        %v2544 = vmul.f32 %v2524, %v2542
        %v2545 = vunpack.c.l.bf16 %v2335
        %v2546 = vunpack.c.h.bf16 %v2335
        %v2547 = vadd.f32 %v2545, %v2543
        %v2548 = vadd.f32 %v2546, %v2544
        %v2549 = vtanh.pop %v2547
        %v2550 = vtanh.pop %v2548
        %v2551 = vsub.f32 1.0, %v2538
        %v2552 = vsub.f32 1.0, %v2540
        %v2553 = vmul.f32 %v2551, %v2549
        %v2554 = vmul.f32 %v2552, %v2550
        %v2555 = vmul.f32 %v2538, %v2326
        %v2556 = vmul.f32 %v2540, %v2327
        %v2557 = vadd.f32 %v2553, %v2555
        %v2558 = vadd.f32 %v2554, %v2556
        %v2559 = vunpack.c.l.bf16 %v2336
        %v2560 = vunpack.c.h.bf16 %v2336
        %v2561 = vadd.f32 %v2559, %v2460
        %v2562 = vadd.f32 %v2560, %v2464
        %v2563 = vxor.u32 %v2561, 2147483648
        %v2564 = vxor.u32 %v2562, 2147483648
        %v2565 = vmul.f32 %v2563, 1.442695
        %v2566 = vpow.pop %v2565
        %v2567 = vmul.f32 %v2564, 1.442695
        %v2568 = vpow.pop %v2567
        %v2569 = vadd.f32 %v2566, 1.0
        %v2570 = vadd.f32 %v2568, 1.0
        %v2571 = vrcp.pop %v2569
        %v2572 = vmul.f32 1.0, %v2571
        %v2573 = vrcp.pop %v2570
        %v2574 = vmul.f32 1.0, %v2573
        %v2575 = vunpack.c.l.bf16 %v2337
        %v2576 = vunpack.c.h.bf16 %v2337
        %v2577 = vadd.f32 %v2575, %v2462
        %v2578 = vadd.f32 %v2576, %v2466
        %v2579 = vxor.u32 %v2577, 2147483648
        %v2580 = vxor.u32 %v2578, 2147483648
        %v2581 = vmul.f32 %v2579, 1.442695
        %v2582 = vpow.pop %v2581
        %v2583 = vmul.f32 %v2580, 1.442695
        %v2584 = vpow.pop %v2583
        %v2585 = vadd.f32 %v2582, 1.0
        %v2586 = vadd.f32 %v2584, 1.0
        %v2587 = vrcp.pop %v2585
        %v2588 = vmul.f32 1.0, %v2587
        %v2589 = vrcp.pop %v2586
        %v2590 = vmul.f32 1.0, %v2589
        %v2591 = vadd.f32 %v2503, %v1447
        %v2592 = vadd.f32 %v2506, %v1447
        %v2593 = vmul.f32 %v2572, %v2591
        %v2594 = vmul.f32 %v2574, %v2592
        %v2595 = vunpack.c.l.bf16 %v2338
        %v2596 = vunpack.c.h.bf16 %v2338
        %v2597 = vadd.f32 %v2595, %v2593
        %v2598 = vadd.f32 %v2596, %v2594
        %v2599 = vtanh.pop %v2597
        %v2600 = vtanh.pop %v2598
        %v2601 = vsub.f32 1.0, %v2588
        %v2602 = vsub.f32 1.0, %v2590
        %v2603 = vmul.f32 %v2601, %v2599
        %v2604 = vmul.f32 %v2602, %v2600
        %v2605 = vmul.f32 %v2588, %v2328
        %v2606 = vmul.f32 %v2590, %v2329
        %v2607 = vadd.f32 %v2603, %v2605
        %v2608 = vadd.f32 %v2604, %v2606
        %s2609 = sadd.s32 %s1988, 2
        %p2610 = scmp.lt.s32.totalorder %s2609, 8
        %s2611 = scalar_select %p2610, 1, 0
        %v2612 = vstv %s2611
        %vm2613 = vcmp.eq.s32.totalorder %v2612, 1
        %v2614 = vsel %vm2613, %v2557, %v2326
        %v2615 = vsel %vm2613, %v2558, %v2327
        %v2616 = vsel %vm2613, %v2607, %v2328
        %v2617 = vsel %vm2613, %v2608, %v2329
        %2618 = vst [vmem:[#allocation3] sm:$0xff] %v2614
        %2619 = vst [vmem:[#allocation3 + $0x8] sm:$0xff] %v2615
        %2620 = vst [vmem:[#allocation4] sm:$0xff] %v2616
        %2621 = vst [vmem:[#allocation4 + $0x8] sm:$0xff] %v2617
        %v2622 = vpack.c.bf16 %v2615, %v2614
        %v2623 = vpack.c.bf16 %v2617, %v2616
        %v2626 = vunpack.c.l.b16 %v2622
        %v2627 = vunpack.c.l.b16 %v2623
        %v2628 = vunpack.c.h.b16 %v2622
        %v2629 = vunpack.c.h.b16 %v2623
        %v2630 = vpack.c.b16 %v2627, %v2626
        %v2631 = vpack.c.b16 %v2629, %v2628
        %s2634 = scalar_lea.vmem %s486, 32 [#allocation17]
        %2635 = vst [vmem:[%s2634] sm:$0xff] %v2630
        %2636 = vst [vmem:[%s2634 + $0x8] sm:$0xff] %v2631
        %v2637 = vld [vmem:[#allocation3] sm:$0xff]
        %v2638 = vld [vmem:[#allocation3 + $0x8] sm:$0xff]
        %v2639 = vld [vmem:[#allocation4] sm:$0xff]
        %v2640 = vld [vmem:[#allocation4 + $0x8] sm:$0xff]
        %s2641 = smul.u32 3, 6
        %s2642 = smul.addr %s2641, 8
        %s2643 = scalar_lea.vmem [#allocation2], %s2642
        %v2644 = vld [vmem:[%s2643] sm:$0xff]
        %v2645 = vld [vmem:[%s2643 + $0x8] sm:$0xff]
        %v2646 = vld [vmem:[%s2643 + $0x10] sm:$0xff]
        %v2647 = vld [vmem:[%s2643 + $0x18] sm:$0xff]
        %v2648 = vld [vmem:[%s2643 + $0x20] sm:$0xff]
        %v2649 = vld [vmem:[%s2643 + $0x28] sm:$0xff]
        %v2650 = vpack.c.bf16 %v2638, %v2637
        %2651 = vmatprep.subr.bf16.mxu0 %v1544
        %2652 = vmatpush1.bf16.msra.mxu0 %v1543
        %2653 = vmatprep.subr.bf16.mxu0 %v1547
        %2654 = vmatpush1.bf16.msra.mxu0 %v1546
        %2655 = vmatprep.subr.bf16.mxu0 %v1550
        %2656 = vmatpush1.bf16.msra.mxu0 %v1549
        %2657 = vmatprep.subr.bf16.mxu0 %v1553
        %2658 = vmatpush1.bf16.msra.mxu0 %v1552
        %2659 = vmatprep.subr.bf16.mxu0 %v1556
        %2660 = vmatpush1.bf16.msra.mxu0 %v1555
        %2661 = vmatprep.subr.bf16.mxu0 %v1559
        %2662 = vmatpush1.bf16.msra.mxu0 %v1558
        %2663 = vmatprep.subr.bf16.mxu0 %v1562
        %2664 = vmatpush1.bf16.msra.mxu0 %v1561
        %2665 = vmatprep.subr.bf16.mxu0 %v1565
        %2666 = vmatpush1.bf16.msra.mxu0 %v1564
        %2667 = vmatprep.subr.bf16.mxu0 0
        %2668 = vmatpush1.bf16.msra.mxu0 0
        %2669 = vmatprep.subr.bf16.mxu0 0
        %2670 = vmatpush1.bf16.msra.mxu0 0
        %2671 = vmatprep.subr.bf16.mxu0 0
        %2672 = vmatpush1.bf16.msra.mxu0 0
        %2673 = vmatprep.subr.bf16.mxu0 0
        %2674 = vmatpush1.bf16.msra.mxu0 0
        %2675 = vmatprep.subr.bf16.mxu0 0
        %2676 = vmatpush1.bf16.msra.mxu0 0
        %2677 = vmatprep.subr.bf16.mxu0 0
        %2678 = vmatpush1.bf16.msra.mxu0 0
        %2679 = vmatprep.subr.bf16.mxu0 0
        %2680 = vmatpush1.bf16.msra.mxu0 0
        %2681 = vmatprep.subr.bf16.mxu0 0
        %2682 = vmatpush1.bf16.msra.mxu0 0
        %2683 = vmatprep.mubr.bf16.mxu0 0
        %2684 = vmatmul.mubr.bf16.gmra.mrb[0].mxu0 %v2650
        %v2685 = vpop.f32.mrb[0].mxu0
        %v2686 = vadd.f32 0.0, %v2685
        %v2687 = vpop.f32.mrb[0].mxu0
        %v2688 = vadd.f32 0.0, %v2687
        %v2689 = vpop.f32.mrb[0].mxu0
        %v2690 = vadd.f32 0.0, %v2689
        %v2691 = vpop.f32.mrb[0].mxu0
        %v2692 = vadd.f32 0.0, %v2691
        %2693 = vdwg.mxu0
        %2694 = vmatprep.subr.bf16.mxu0 0
        %2695 = vmatpush1.bf16.msra.mxu0 %v1545
        %2696 = vmatprep.subr.bf16.mxu0 0
        %2697 = vmatpush1.bf16.msra.mxu0 %v1548
        %2698 = vmatprep.subr.bf16.mxu0 0
        %2699 = vmatpush1.bf16.msra.mxu0 %v1551
        %2700 = vmatprep.subr.bf16.mxu0 0
        %2701 = vmatpush1.bf16.msra.mxu0 %v1554
        %2702 = vmatprep.subr.bf16.mxu0 0
        %2703 = vmatpush1.bf16.msra.mxu0 %v1557
        %2704 = vmatprep.subr.bf16.mxu0 0
        %2705 = vmatpush1.bf16.msra.mxu0 %v1560
        %2706 = vmatprep.subr.bf16.mxu0 0
        %2707 = vmatpush1.bf16.msra.mxu0 %v1563
        %2708 = vmatprep.subr.bf16.mxu0 0
        %2709 = vmatpush1.bf16.msra.mxu0 %v1566
        %2710 = vmatprep.subr.bf16.mxu0 0
        %2711 = vmatpush1.bf16.msra.mxu0 0
        %2712 = vmatprep.subr.bf16.mxu0 0
        %2713 = vmatpush1.bf16.msra.mxu0 0
        %2714 = vmatprep.subr.bf16.mxu0 0
        %2715 = vmatpush1.bf16.msra.mxu0 0
        %2716 = vmatprep.subr.bf16.mxu0 0
        %2717 = vmatpush1.bf16.msra.mxu0 0
        %2718 = vmatprep.subr.bf16.mxu0 0
        %2719 = vmatpush1.bf16.msra.mxu0 0
        %2720 = vmatprep.subr.bf16.mxu0 0
        %2721 = vmatpush1.bf16.msra.mxu0 0
        %2722 = vmatprep.subr.bf16.mxu0 0
        %2723 = vmatpush1.bf16.msra.mxu0 0
        %2724 = vmatprep.subr.bf16.mxu0 0
        %2725 = vmatpush1.bf16.msra.mxu0 0
        %2726 = vmatprep.mubr.bf16.mxu0 0
        %2727 = vmatmul.mubr.bf16.gmra.mrb[0].mxu0 %v2650
        %v2728 = vpop.f32.mrb[0].mxu0
        %v2729 = vadd.f32 0.0, %v2728
        %v2730 = vpop.f32.mrb[0].mxu0
        %v2731 = vpop.f32.mrb[0].mxu0
        %v2732 = vadd.f32 0.0, %v2731
        %v2733 = vpop.f32.mrb[0].mxu0
        %2734 = vdwg.mxu0
        %v2735 = vpack.c.bf16 %v2640, %v2639
        %2736 = vmatprep.subr.bf16.mxu0 %v1757
        %2737 = vmatpush1.bf16.msra.mxu0 %v1756
        %2738 = vmatprep.subr.bf16.mxu0 %v1760
        %2739 = vmatpush1.bf16.msra.mxu0 %v1759
        %2740 = vmatprep.subr.bf16.mxu0 %v1763
        %2741 = vmatpush1.bf16.msra.mxu0 %v1762
        %2742 = vmatprep.subr.bf16.mxu0 %v1766
        %2743 = vmatpush1.bf16.msra.mxu0 %v1765
        %2744 = vmatprep.subr.bf16.mxu0 %v1769
        %2745 = vmatpush1.bf16.msra.mxu0 %v1768
        %2746 = vmatprep.subr.bf16.mxu0 %v1772
        %2747 = vmatpush1.bf16.msra.mxu0 %v1771
        %2748 = vmatprep.subr.bf16.mxu0 %v1775
        %2749 = vmatpush1.bf16.msra.mxu0 %v1774
        %2750 = vmatprep.subr.bf16.mxu0 %v1778
        %2751 = vmatpush1.bf16.msra.mxu0 %v1777
        %2752 = vmatprep.subr.bf16.mxu0 0
        %2753 = vmatpush1.bf16.msra.mxu0 0
        %2754 = vmatprep.subr.bf16.mxu0 0
        %2755 = vmatpush1.bf16.msra.mxu0 0
        %2756 = vmatprep.subr.bf16.mxu0 0
        %2757 = vmatpush1.bf16.msra.mxu0 0
        %2758 = vmatprep.subr.bf16.mxu0 0
        %2759 = vmatpush1.bf16.msra.mxu0 0
        %2760 = vmatprep.subr.bf16.mxu0 0
        %2761 = vmatpush1.bf16.msra.mxu0 0
        %2762 = vmatprep.subr.bf16.mxu0 0
        %2763 = vmatpush1.bf16.msra.mxu0 0
        %2764 = vmatprep.subr.bf16.mxu0 0
        %2765 = vmatpush1.bf16.msra.mxu0 0
        %2766 = vmatprep.subr.bf16.mxu0 0
        %2767 = vmatpush1.bf16.msra.mxu0 0
        %2768 = vmatprep.mubr.bf16.mxu0 0
        %2769 = vmatmul.mubr.bf16.gmra.mrb[0].mxu0 %v2735
        %v2770 = vpop.f32.mrb[0].mxu0
        %v2771 = vadd.f32 0.0, %v2770
        %v2772 = vpop.f32.mrb[0].mxu0
        %v2773 = vadd.f32 0.0, %v2772
        %v2774 = vpop.f32.mrb[0].mxu0
        %v2775 = vadd.f32 0.0, %v2774
        %v2776 = vpop.f32.mrb[0].mxu0
        %v2777 = vadd.f32 0.0, %v2776
        %2778 = vdwg.mxu0
        %2779 = vmatprep.subr.bf16.mxu0 0
        %2780 = vmatpush1.bf16.msra.mxu0 %v1758
        %2781 = vmatprep.subr.bf16.mxu0 0
        %2782 = vmatpush1.bf16.msra.mxu0 %v1761
        %2783 = vmatprep.subr.bf16.mxu0 0
        %2784 = vmatpush1.bf16.msra.mxu0 %v1764
        %2785 = vmatprep.subr.bf16.mxu0 0
        %2786 = vmatpush1.bf16.msra.mxu0 %v1767
        %2787 = vmatprep.subr.bf16.mxu0 0
        %2788 = vmatpush1.bf16.msra.mxu0 %v1770
        %2789 = vmatprep.subr.bf16.mxu0 0
        %2790 = vmatpush1.bf16.msra.mxu0 %v1773
        %2791 = vmatprep.subr.bf16.mxu0 0
        %2792 = vmatpush1.bf16.msra.mxu0 %v1776
        %2793 = vmatprep.subr.bf16.mxu0 0
        %2794 = vmatpush1.bf16.msra.mxu0 %v1779
        %2795 = vmatprep.subr.bf16.mxu0 0
        %2796 = vmatpush1.bf16.msra.mxu0 0
        %2797 = vmatprep.subr.bf16.mxu0 0
        %2798 = vmatpush1.bf16.msra.mxu0 0
        %2799 = vmatprep.subr.bf16.mxu0 0
        %2800 = vmatpush1.bf16.msra.mxu0 0
        %2801 = vmatprep.subr.bf16.mxu0 0
        %2802 = vmatpush1.bf16.msra.mxu0 0
        %2803 = vmatprep.subr.bf16.mxu0 0
        %2804 = vmatpush1.bf16.msra.mxu0 0
        %2805 = vmatprep.subr.bf16.mxu0 0
        %2806 = vmatpush1.bf16.msra.mxu0 0
        %2807 = vmatprep.subr.bf16.mxu0 0
        %2808 = vmatpush1.bf16.msra.mxu0 0
        %2809 = vmatprep.subr.bf16.mxu0 0
        %2810 = vmatpush1.bf16.msra.mxu0 0
        %2811 = vmatprep.mubr.bf16.mxu0 0
        %2812 = vmatmul.mubr.bf16.gmra.mrb[0].mxu0 %v2735
        %v2813 = vpop.f32.mrb[0].mxu0
        %v2814 = vadd.f32 0.0, %v2813
        %v2815 = vpop.f32.mrb[0].mxu0
        %v2816 = vpop.f32.mrb[0].mxu0
        %v2817 = vadd.f32 0.0, %v2816
        %v2818 = vpop.f32.mrb[0].mxu0
        %2819 = vdwg.mxu0
        %v2820 = vunpack.c.l.bf16 %v2644
        %v2821 = vunpack.c.h.bf16 %v2644
        %v2822 = vadd.f32 %v2820, %v2686
        %v2823 = vadd.f32 %v2821, %v2690
        %v2824 = vxor.u32 %v2822, 2147483648
        %v2825 = vxor.u32 %v2823, 2147483648
        %v2826 = vmul.f32 %v2824, 1.442695
        %v2827 = vpow.pop %v2826
        %v2828 = vmul.f32 %v2825, 1.442695
        %v2829 = vpow.pop %v2828
        %v2830 = vadd.f32 %v2827, 1.0
        %v2831 = vadd.f32 %v2829, 1.0
        %v2832 = vrcp.pop %v2830
        %v2833 = vmul.f32 1.0, %v2832
        %v2834 = vrcp.pop %v2831
        %v2835 = vmul.f32 1.0, %v2834
        %v2836 = vunpack.c.l.bf16 %v2645
        %v2837 = vunpack.c.h.bf16 %v2645
        %v2838 = vadd.f32 %v2836, %v2688
        %v2839 = vadd.f32 %v2837, %v2692
        %v2840 = vxor.u32 %v2838, 2147483648
        %v2841 = vxor.u32 %v2839, 2147483648
        %v2842 = vmul.f32 %v2840, 1.442695
        %v2843 = vpow.pop %v2842
        %v2844 = vmul.f32 %v2841, 1.442695
        %v2845 = vpow.pop %v2844
        %v2846 = vadd.f32 %v2843, 1.0
        %v2847 = vadd.f32 %v2845, 1.0
        %v2848 = vrcp.pop %v2846
        %v2849 = vmul.f32 1.0, %v2848
        %v2850 = vrcp.pop %v2847
        %v2851 = vmul.f32 1.0, %v2850
        %v2852 = vadd.f32 %v2729, %v1440
        %v2853 = vadd.f32 %v2732, %v1440
        %v2854 = vmul.f32 %v2833, %v2852
        %v2855 = vmul.f32 %v2835, %v2853
        %v2856 = vunpack.c.l.bf16 %v2646
        %v2857 = vunpack.c.h.bf16 %v2646
        %v2858 = vadd.f32 %v2856, %v2854
        %v2859 = vadd.f32 %v2857, %v2855
        %v2860 = vtanh.pop %v2858
        %v2861 = vtanh.pop %v2859
        %v2862 = vsub.f32 1.0, %v2849
        %v2863 = vsub.f32 1.0, %v2851
        %v2864 = vmul.f32 %v2862, %v2860
        %v2865 = vmul.f32 %v2863, %v2861
        %v2866 = vmul.f32 %v2849, %v2637
        %v2867 = vmul.f32 %v2851, %v2638
        %v2868 = vadd.f32 %v2864, %v2866
        %v2869 = vadd.f32 %v2865, %v2867
        %v2870 = vunpack.c.l.bf16 %v2647
        %v2871 = vunpack.c.h.bf16 %v2647
        %v2872 = vadd.f32 %v2870, %v2771
        %v2873 = vadd.f32 %v2871, %v2775
        %v2874 = vxor.u32 %v2872, 2147483648
        %v2875 = vxor.u32 %v2873, 2147483648
        %v2876 = vmul.f32 %v2874, 1.442695
        %v2877 = vpow.pop %v2876
        %v2878 = vmul.f32 %v2875, 1.442695
        %v2879 = vpow.pop %v2878
        %v2880 = vadd.f32 %v2877, 1.0
        %v2881 = vadd.f32 %v2879, 1.0
        %v2882 = vrcp.pop %v2880
        %v2883 = vmul.f32 1.0, %v2882
        %v2884 = vrcp.pop %v2881
        %v2885 = vmul.f32 1.0, %v2884
        %v2886 = vunpack.c.l.bf16 %v2648
        %v2887 = vunpack.c.h.bf16 %v2648
        %v2888 = vadd.f32 %v2886, %v2773
        %v2889 = vadd.f32 %v2887, %v2777
        %v2890 = vxor.u32 %v2888, 2147483648
        %v2891 = vxor.u32 %v2889, 2147483648
        %v2892 = vmul.f32 %v2890, 1.442695
        %v2893 = vpow.pop %v2892
        %v2894 = vmul.f32 %v2891, 1.442695
        %v2895 = vpow.pop %v2894
        %v2896 = vadd.f32 %v2893, 1.0
        %v2897 = vadd.f32 %v2895, 1.0
        %v2898 = vrcp.pop %v2896
        %v2899 = vmul.f32 1.0, %v2898
        %v2900 = vrcp.pop %v2897
        %v2901 = vmul.f32 1.0, %v2900
        %v2902 = vadd.f32 %v2814, %v1447
        %v2903 = vadd.f32 %v2817, %v1447
        %v2904 = vmul.f32 %v2883, %v2902
        %v2905 = vmul.f32 %v2885, %v2903
        %v2906 = vunpack.c.l.bf16 %v2649
        %v2907 = vunpack.c.h.bf16 %v2649
        %v2908 = vadd.f32 %v2906, %v2904
        %v2909 = vadd.f32 %v2907, %v2905
        %v2910 = vtanh.pop %v2908
        %v2911 = vtanh.pop %v2909
        %v2912 = vsub.f32 1.0, %v2899
        %v2913 = vsub.f32 1.0, %v2901
        %v2914 = vmul.f32 %v2912, %v2910
        %v2915 = vmul.f32 %v2913, %v2911
        %v2916 = vmul.f32 %v2899, %v2639
        %v2917 = vmul.f32 %v2901, %v2640
        %v2918 = vadd.f32 %v2914, %v2916
        %v2919 = vadd.f32 %v2915, %v2917
        %s2920 = sadd.s32 %s1988, 3
        %p2921 = scmp.lt.s32.totalorder %s2920, 8
        %s2922 = scalar_select %p2921, 1, 0
        %v2923 = vstv %s2922
        %vm2924 = vcmp.eq.s32.totalorder %v2923, 1
        %v2925 = vsel %vm2924, %v2868, %v2637
        %v2926 = vsel %vm2924, %v2869, %v2638
        %v2927 = vsel %vm2924, %v2918, %v2639
        %v2928 = vsel %vm2924, %v2919, %v2640
        %2929 = vst [vmem:[#allocation3] sm:$0xff] %v2925
        %2930 = vst [vmem:[#allocation3 + $0x8] sm:$0xff] %v2926
        %2931 = vst [vmem:[#allocation4] sm:$0xff] %v2927
        %2932 = vst [vmem:[#allocation4 + $0x8] sm:$0xff] %v2928
        %v2933 = vpack.c.bf16 %v2926, %v2925
        %v2934 = vpack.c.bf16 %v2928, %v2927
        %v2937 = vunpack.c.l.b16 %v2933
        %v2938 = vunpack.c.l.b16 %v2934
        %v2939 = vunpack.c.h.b16 %v2933
        %v2940 = vunpack.c.h.b16 %v2934
        %v2941 = vpack.c.b16 %v2938, %v2937
        %v2942 = vpack.c.b16 %v2940, %v2939
        %s2945 = scalar_lea.vmem %s486, 48 [#allocation17]
        %2946 = vst [vmem:[%s2945] sm:$0xff] %v2941
        %2947 = vst [vmem:[%s2945 + $0x8] sm:$0xff] %v2942
        %v2948 = vld [vmem:[#allocation3] sm:$0xff]
        %v2949 = vld [vmem:[#allocation3 + $0x8] sm:$0xff]
        %v2950 = vld [vmem:[#allocation4] sm:$0xff]
        %v2951 = vld [vmem:[#allocation4 + $0x8] sm:$0xff]
        %s2952 = smul.u32 4, 6
        %s2953 = smul.addr %s2952, 8
        %s2954 = scalar_lea.vmem [#allocation2], %s2953
        %v2955 = vld [vmem:[%s2954] sm:$0xff]
        %v2956 = vld [vmem:[%s2954 + $0x8] sm:$0xff]
        %v2957 = vld [vmem:[%s2954 + $0x10] sm:$0xff]
        %v2958 = vld [vmem:[%s2954 + $0x18] sm:$0xff]
        %v2959 = vld [vmem:[%s2954 + $0x20] sm:$0xff]
        %v2960 = vld [vmem:[%s2954 + $0x28] sm:$0xff]
        %v2961 = vpack.c.bf16 %v2949, %v2948
        %2962 = vmatprep.subr.bf16.mxu0 %v1544
        %2963 = vmatpush1.bf16.msra.mxu0 %v1543
        %2964 = vmatprep.subr.bf16.mxu0 %v1547
        %2965 = vmatpush1.bf16.msra.mxu0 %v1546
        %2966 = vmatprep.subr.bf16.mxu0 %v1550
        %2967 = vmatpush1.bf16.msra.mxu0 %v1549
        %2968 = vmatprep.subr.bf16.mxu0 %v1553
        %2969 = vmatpush1.bf16.msra.mxu0 %v1552
        %2970 = vmatprep.subr.bf16.mxu0 %v1556
        %2971 = vmatpush1.bf16.msra.mxu0 %v1555
        %2972 = vmatprep.subr.bf16.mxu0 %v1559
        %2973 = vmatpush1.bf16.msra.mxu0 %v1558
        %2974 = vmatprep.subr.bf16.mxu0 %v1562
        %2975 = vmatpush1.bf16.msra.mxu0 %v1561
        %2976 = vmatprep.subr.bf16.mxu0 %v1565
        %2977 = vmatpush1.bf16.msra.mxu0 %v1564
        %2978 = vmatprep.subr.bf16.mxu0 0
        %2979 = vmatpush1.bf16.msra.mxu0 0
        %2980 = vmatprep.subr.bf16.mxu0 0
        %2981 = vmatpush1.bf16.msra.mxu0 0
        %2982 = vmatprep.subr.bf16.mxu0 0
        %2983 = vmatpush1.bf16.msra.mxu0 0
        %2984 = vmatprep.subr.bf16.mxu0 0
        %2985 = vmatpush1.bf16.msra.mxu0 0
        %2986 = vmatprep.subr.bf16.mxu0 0
        %2987 = vmatpush1.bf16.msra.mxu0 0
        %2988 = vmatprep.subr.bf16.mxu0 0
        %2989 = vmatpush1.bf16.msra.mxu0 0
        %2990 = vmatprep.subr.bf16.mxu0 0
        %2991 = vmatpush1.bf16.msra.mxu0 0
        %2992 = vmatprep.subr.bf16.mxu0 0
        %2993 = vmatpush1.bf16.msra.mxu0 0
        %2994 = vmatprep.mubr.bf16.mxu0 0
        %2995 = vmatmul.mubr.bf16.gmra.mrb[0].mxu0 %v2961
        %v2996 = vpop.f32.mrb[0].mxu0
        %v2997 = vadd.f32 0.0, %v2996
        %v2998 = vpop.f32.mrb[0].mxu0
        %v2999 = vadd.f32 0.0, %v2998
        %v3000 = vpop.f32.mrb[0].mxu0
        %v3001 = vadd.f32 0.0, %v3000
        %v3002 = vpop.f32.mrb[0].mxu0
        %v3003 = vadd.f32 0.0, %v3002
        %3004 = vdwg.mxu0
        %3005 = vmatprep.subr.bf16.mxu0 0
        %3006 = vmatpush1.bf16.msra.mxu0 %v1545
        %3007 = vmatprep.subr.bf16.mxu0 0
        %3008 = vmatpush1.bf16.msra.mxu0 %v1548
        %3009 = vmatprep.subr.bf16.mxu0 0
        %3010 = vmatpush1.bf16.msra.mxu0 %v1551
        %3011 = vmatprep.subr.bf16.mxu0 0
        %3012 = vmatpush1.bf16.msra.mxu0 %v1554
        %3013 = vmatprep.subr.bf16.mxu0 0
        %3014 = vmatpush1.bf16.msra.mxu0 %v1557
        %3015 = vmatprep.subr.bf16.mxu0 0
        %3016 = vmatpush1.bf16.msra.mxu0 %v1560
        %3017 = vmatprep.subr.bf16.mxu0 0
        %3018 = vmatpush1.bf16.msra.mxu0 %v1563
        %3019 = vmatprep.subr.bf16.mxu0 0
        %3020 = vmatpush1.bf16.msra.mxu0 %v1566
        %3021 = vmatprep.subr.bf16.mxu0 0
        %3022 = vmatpush1.bf16.msra.mxu0 0
        %3023 = vmatprep.subr.bf16.mxu0 0
        %3024 = vmatpush1.bf16.msra.mxu0 0
        %3025 = vmatprep.subr.bf16.mxu0 0
        %3026 = vmatpush1.bf16.msra.mxu0 0
        %3027 = vmatprep.subr.bf16.mxu0 0
        %3028 = vmatpush1.bf16.msra.mxu0 0
        %3029 = vmatprep.subr.bf16.mxu0 0
        %3030 = vmatpush1.bf16.msra.mxu0 0
        %3031 = vmatprep.subr.bf16.mxu0 0
        %3032 = vmatpush1.bf16.msra.mxu0 0
        %3033 = vmatprep.subr.bf16.mxu0 0
        %3034 = vmatpush1.bf16.msra.mxu0 0
        %3035 = vmatprep.subr.bf16.mxu0 0
        %3036 = vmatpush1.bf16.msra.mxu0 0
        %3037 = vmatprep.mubr.bf16.mxu0 0
        %3038 = vmatmul.mubr.bf16.gmra.mrb[0].mxu0 %v2961
        %v3039 = vpop.f32.mrb[0].mxu0
        %v3040 = vadd.f32 0.0, %v3039
        %v3041 = vpop.f32.mrb[0].mxu0
        %v3042 = vpop.f32.mrb[0].mxu0
        %v3043 = vadd.f32 0.0, %v3042
        %v3044 = vpop.f32.mrb[0].mxu0
        %3045 = vdwg.mxu0
        %v3046 = vpack.c.bf16 %v2951, %v2950
        %3047 = vmatprep.subr.bf16.mxu0 %v1757
        %3048 = vmatpush1.bf16.msra.mxu0 %v1756
        %3049 = vmatprep.subr.bf16.mxu0 %v1760
        %3050 = vmatpush1.bf16.msra.mxu0 %v1759
        %3051 = vmatprep.subr.bf16.mxu0 %v1763
        %3052 = vmatpush1.bf16.msra.mxu0 %v1762
        %3053 = vmatprep.subr.bf16.mxu0 %v1766
        %3054 = vmatpush1.bf16.msra.mxu0 %v1765
        %3055 = vmatprep.subr.bf16.mxu0 %v1769
        %3056 = vmatpush1.bf16.msra.mxu0 %v1768
        %3057 = vmatprep.subr.bf16.mxu0 %v1772
        %3058 = vmatpush1.bf16.msra.mxu0 %v1771
        %3059 = vmatprep.subr.bf16.mxu0 %v1775
        %3060 = vmatpush1.bf16.msra.mxu0 %v1774
        %3061 = vmatprep.subr.bf16.mxu0 %v1778
        %3062 = vmatpush1.bf16.msra.mxu0 %v1777
        %3063 = vmatprep.subr.bf16.mxu0 0
        %3064 = vmatpush1.bf16.msra.mxu0 0
        %3065 = vmatprep.subr.bf16.mxu0 0
        %3066 = vmatpush1.bf16.msra.mxu0 0
        %3067 = vmatprep.subr.bf16.mxu0 0
        %3068 = vmatpush1.bf16.msra.mxu0 0
        %3069 = vmatprep.subr.bf16.mxu0 0
        %3070 = vmatpush1.bf16.msra.mxu0 0
        %3071 = vmatprep.subr.bf16.mxu0 0
        %3072 = vmatpush1.bf16.msra.mxu0 0
        %3073 = vmatprep.subr.bf16.mxu0 0
        %3074 = vmatpush1.bf16.msra.mxu0 0
        %3075 = vmatprep.subr.bf16.mxu0 0
        %3076 = vmatpush1.bf16.msra.mxu0 0
        %3077 = vmatprep.subr.bf16.mxu0 0
        %3078 = vmatpush1.bf16.msra.mxu0 0
        %3079 = vmatprep.mubr.bf16.mxu0 0
        %3080 = vmatmul.mubr.bf16.gmra.mrb[0].mxu0 %v3046
        %v3081 = vpop.f32.mrb[0].mxu0
        %v3082 = vadd.f32 0.0, %v3081
        %v3083 = vpop.f32.mrb[0].mxu0
        %v3084 = vadd.f32 0.0, %v3083
        %v3085 = vpop.f32.mrb[0].mxu0
        %v3086 = vadd.f32 0.0, %v3085
        %v3087 = vpop.f32.mrb[0].mxu0
        %v3088 = vadd.f32 0.0, %v3087
        %3089 = vdwg.mxu0
        %3090 = vmatprep.subr.bf16.mxu0 0
        %3091 = vmatpush1.bf16.msra.mxu0 %v1758
        %3092 = vmatprep.subr.bf16.mxu0 0
        %3093 = vmatpush1.bf16.msra.mxu0 %v1761
        %3094 = vmatprep.subr.bf16.mxu0 0
        %3095 = vmatpush1.bf16.msra.mxu0 %v1764
        %3096 = vmatprep.subr.bf16.mxu0 0
        %3097 = vmatpush1.bf16.msra.mxu0 %v1767
        %3098 = vmatprep.subr.bf16.mxu0 0
        %3099 = vmatpush1.bf16.msra.mxu0 %v1770
        %3100 = vmatprep.subr.bf16.mxu0 0
        %3101 = vmatpush1.bf16.msra.mxu0 %v1773
        %3102 = vmatprep.subr.bf16.mxu0 0
        %3103 = vmatpush1.bf16.msra.mxu0 %v1776
        %3104 = vmatprep.subr.bf16.mxu0 0
        %3105 = vmatpush1.bf16.msra.mxu0 %v1779
        %3106 = vmatprep.subr.bf16.mxu0 0
        %3107 = vmatpush1.bf16.msra.mxu0 0
        %3108 = vmatprep.subr.bf16.mxu0 0
        %3109 = vmatpush1.bf16.msra.mxu0 0
        %3110 = vmatprep.subr.bf16.mxu0 0
        %3111 = vmatpush1.bf16.msra.mxu0 0
        %3112 = vmatprep.subr.bf16.mxu0 0
        %3113 = vmatpush1.bf16.msra.mxu0 0
        %3114 = vmatprep.subr.bf16.mxu0 0
        %3115 = vmatpush1.bf16.msra.mxu0 0
        %3116 = vmatprep.subr.bf16.mxu0 0
        %3117 = vmatpush1.bf16.msra.mxu0 0
        %3118 = vmatprep.subr.bf16.mxu0 0
        %3119 = vmatpush1.bf16.msra.mxu0 0
        %3120 = vmatprep.subr.bf16.mxu0 0
        %3121 = vmatpush1.bf16.msra.mxu0 0
        %3122 = vmatprep.mubr.bf16.mxu0 0
        %3123 = vmatmul.mubr.bf16.gmra.mrb[0].mxu0 %v3046
        %v3124 = vpop.f32.mrb[0].mxu0
        %v3125 = vadd.f32 0.0, %v3124
        %v3126 = vpop.f32.mrb[0].mxu0
        %v3127 = vpop.f32.mrb[0].mxu0
        %v3128 = vadd.f32 0.0, %v3127
        %v3129 = vpop.f32.mrb[0].mxu0
        %3130 = vdwg.mxu0
        %v3131 = vunpack.c.l.bf16 %v2955
        %v3132 = vunpack.c.h.bf16 %v2955
        %v3133 = vadd.f32 %v3131, %v2997
        %v3134 = vadd.f32 %v3132, %v3001
        %v3135 = vxor.u32 %v3133, 2147483648
        %v3136 = vxor.u32 %v3134, 2147483648
        %v3137 = vmul.f32 %v3135, 1.442695
        %v3138 = vpow.pop %v3137
        %v3139 = vmul.f32 %v3136, 1.442695
        %v3140 = vpow.pop %v3139
        %v3141 = vadd.f32 %v3138, 1.0
        %v3142 = vadd.f32 %v3140, 1.0
        %v3143 = vrcp.pop %v3141
        %v3144 = vmul.f32 1.0, %v3143
        %v3145 = vrcp.pop %v3142
        %v3146 = vmul.f32 1.0, %v3145
        %v3147 = vunpack.c.l.bf16 %v2956
        %v3148 = vunpack.c.h.bf16 %v2956
        %v3149 = vadd.f32 %v3147, %v2999
        %v3150 = vadd.f32 %v3148, %v3003
        %v3151 = vxor.u32 %v3149, 2147483648
        %v3152 = vxor.u32 %v3150, 2147483648
        %v3153 = vmul.f32 %v3151, 1.442695
        %v3154 = vpow.pop %v3153
        %v3155 = vmul.f32 %v3152, 1.442695
        %v3156 = vpow.pop %v3155
        %v3157 = vadd.f32 %v3154, 1.0
        %v3158 = vadd.f32 %v3156, 1.0
        %v3159 = vrcp.pop %v3157
        %v3160 = vmul.f32 1.0, %v3159
        %v3161 = vrcp.pop %v3158
        %v3162 = vmul.f32 1.0, %v3161
        %v3163 = vadd.f32 %v3040, %v1440
        %v3164 = vadd.f32 %v3043, %v1440
        %v3165 = vmul.f32 %v3144, %v3163
        %v3166 = vmul.f32 %v3146, %v3164
        %v3167 = vunpack.c.l.bf16 %v2957
        %v3168 = vunpack.c.h.bf16 %v2957
        %v3169 = vadd.f32 %v3167, %v3165
        %v3170 = vadd.f32 %v3168, %v3166
        %v3171 = vtanh.pop %v3169
        %v3172 = vtanh.pop %v3170
        %v3173 = vsub.f32 1.0, %v3160
        %v3174 = vsub.f32 1.0, %v3162
        %v3175 = vmul.f32 %v3173, %v3171
        %v3176 = vmul.f32 %v3174, %v3172
        %v3177 = vmul.f32 %v3160, %v2948
        %v3178 = vmul.f32 %v3162, %v2949
        %v3179 = vadd.f32 %v3175, %v3177
        %v3180 = vadd.f32 %v3176, %v3178
        %v3181 = vunpack.c.l.bf16 %v2958
        %v3182 = vunpack.c.h.bf16 %v2958
        %v3183 = vadd.f32 %v3181, %v3082
        %v3184 = vadd.f32 %v3182, %v3086
        %v3185 = vxor.u32 %v3183, 2147483648
        %v3186 = vxor.u32 %v3184, 2147483648
        %v3187 = vmul.f32 %v3185, 1.442695
        %v3188 = vpow.pop %v3187
        %v3189 = vmul.f32 %v3186, 1.442695
        %v3190 = vpow.pop %v3189
        %v3191 = vadd.f32 %v3188, 1.0
        %v3192 = vadd.f32 %v3190, 1.0
        %v3193 = vrcp.pop %v3191
        %v3194 = vmul.f32 1.0, %v3193
        %v3195 = vrcp.pop %v3192
        %v3196 = vmul.f32 1.0, %v3195
        %v3197 = vunpack.c.l.bf16 %v2959
        %v3198 = vunpack.c.h.bf16 %v2959
        %v3199 = vadd.f32 %v3197, %v3084
        %v3200 = vadd.f32 %v3198, %v3088
        %v3201 = vxor.u32 %v3199, 2147483648
        %v3202 = vxor.u32 %v3200, 2147483648
        %v3203 = vmul.f32 %v3201, 1.442695
        %v3204 = vpow.pop %v3203
        %v3205 = vmul.f32 %v3202, 1.442695
        %v3206 = vpow.pop %v3205
        %v3207 = vadd.f32 %v3204, 1.0
        %v3208 = vadd.f32 %v3206, 1.0
        %v3209 = vrcp.pop %v3207
        %v3210 = vmul.f32 1.0, %v3209
        %v3211 = vrcp.pop %v3208
        %v3212 = vmul.f32 1.0, %v3211
        %v3213 = vadd.f32 %v3125, %v1447
        %v3214 = vadd.f32 %v3128, %v1447
        %v3215 = vmul.f32 %v3194, %v3213
        %v3216 = vmul.f32 %v3196, %v3214
        %v3217 = vunpack.c.l.bf16 %v2960
        %v3218 = vunpack.c.h.bf16 %v2960
        %v3219 = vadd.f32 %v3217, %v3215
        %v3220 = vadd.f32 %v3218, %v3216
        %v3221 = vtanh.pop %v3219
        %v3222 = vtanh.pop %v3220
        %v3223 = vsub.f32 1.0, %v3210
        %v3224 = vsub.f32 1.0, %v3212
        %v3225 = vmul.f32 %v3223, %v3221
        %v3226 = vmul.f32 %v3224, %v3222
        %v3227 = vmul.f32 %v3210, %v2950
        %v3228 = vmul.f32 %v3212, %v2951
        %v3229 = vadd.f32 %v3225, %v3227
        %v3230 = vadd.f32 %v3226, %v3228
        %s3231 = sadd.s32 %s1988, 4
        %p3232 = scmp.lt.s32.totalorder %s3231, 8
        %s3233 = scalar_select %p3232, 1, 0
        %v3234 = vstv %s3233
        %vm3235 = vcmp.eq.s32.totalorder %v3234, 1
        %v3236 = vsel %vm3235, %v3179, %v2948
        %v3237 = vsel %vm3235, %v3180, %v2949
        %v3238 = vsel %vm3235, %v3229, %v2950
        %v3239 = vsel %vm3235, %v3230, %v2951
        %3240 = vst [vmem:[#allocation3] sm:$0xff] %v3236
        %3241 = vst [vmem:[#allocation3 + $0x8] sm:$0xff] %v3237
        %3242 = vst [vmem:[#allocation4] sm:$0xff] %v3238
        %3243 = vst [vmem:[#allocation4 + $0x8] sm:$0xff] %v3239
        %v3244 = vpack.c.bf16 %v3237, %v3236
        %v3245 = vpack.c.bf16 %v3239, %v3238
        %v3248 = vunpack.c.l.b16 %v3244
        %v3249 = vunpack.c.l.b16 %v3245
        %v3250 = vunpack.c.h.b16 %v3244
        %v3251 = vunpack.c.h.b16 %v3245
        %v3252 = vpack.c.b16 %v3249, %v3248
        %v3253 = vpack.c.b16 %v3251, %v3250
        %s3256 = scalar_lea.vmem %s486, 64 [#allocation17]
        %3257 = vst [vmem:[%s3256] sm:$0xff] %v3252
        %3258 = vst [vmem:[%s3256 + $0x8] sm:$0xff] %v3253
        %v3259 = vld [vmem:[#allocation3] sm:$0xff]
        %v3260 = vld [vmem:[#allocation3 + $0x8] sm:$0xff]
        %v3261 = vld [vmem:[#allocation4] sm:$0xff]
        %v3262 = vld [vmem:[#allocation4 + $0x8] sm:$0xff]
        %s3263 = smul.u32 5, 6
        %s3264 = smul.addr %s3263, 8
        %s3265 = scalar_lea.vmem [#allocation2], %s3264
        %v3266 = vld [vmem:[%s3265] sm:$0xff]
        %v3267 = vld [vmem:[%s3265 + $0x8] sm:$0xff]
        %v3268 = vld [vmem:[%s3265 + $0x10] sm:$0xff]
        %v3269 = vld [vmem:[%s3265 + $0x18] sm:$0xff]
        %v3270 = vld [vmem:[%s3265 + $0x20] sm:$0xff]
        %v3271 = vld [vmem:[%s3265 + $0x28] sm:$0xff]
        %v3272 = vpack.c.bf16 %v3260, %v3259
        %3273 = vmatprep.subr.bf16.mxu0 %v1544
        %3274 = vmatpush1.bf16.msra.mxu0 %v1543
        %3275 = vmatprep.subr.bf16.mxu0 %v1547
        %3276 = vmatpush1.bf16.msra.mxu0 %v1546
        %3277 = vmatprep.subr.bf16.mxu0 %v1550
        %3278 = vmatpush1.bf16.msra.mxu0 %v1549
        %3279 = vmatprep.subr.bf16.mxu0 %v1553
        %3280 = vmatpush1.bf16.msra.mxu0 %v1552
        %3281 = vmatprep.subr.bf16.mxu0 %v1556
        %3282 = vmatpush1.bf16.msra.mxu0 %v1555
        %3283 = vmatprep.subr.bf16.mxu0 %v1559
        %3284 = vmatpush1.bf16.msra.mxu0 %v1558
        %3285 = vmatprep.subr.bf16.mxu0 %v1562
        %3286 = vmatpush1.bf16.msra.mxu0 %v1561
        %3287 = vmatprep.subr.bf16.mxu0 %v1565
        %3288 = vmatpush1.bf16.msra.mxu0 %v1564
        %3289 = vmatprep.subr.bf16.mxu0 0
        %3290 = vmatpush1.bf16.msra.mxu0 0
        %3291 = vmatprep.subr.bf16.mxu0 0
        %3292 = vmatpush1.bf16.msra.mxu0 0
        %3293 = vmatprep.subr.bf16.mxu0 0
        %3294 = vmatpush1.bf16.msra.mxu0 0
        %3295 = vmatprep.subr.bf16.mxu0 0
        %3296 = vmatpush1.bf16.msra.mxu0 0
        %3297 = vmatprep.subr.bf16.mxu0 0
        %3298 = vmatpush1.bf16.msra.mxu0 0
        %3299 = vmatprep.subr.bf16.mxu0 0
        %3300 = vmatpush1.bf16.msra.mxu0 0
        %3301 = vmatprep.subr.bf16.mxu0 0
        %3302 = vmatpush1.bf16.msra.mxu0 0
        %3303 = vmatprep.subr.bf16.mxu0 0
        %3304 = vmatpush1.bf16.msra.mxu0 0
        %3305 = vmatprep.mubr.bf16.mxu0 0
        %3306 = vmatmul.mubr.bf16.gmra.mrb[0].mxu0 %v3272
        %v3307 = vpop.f32.mrb[0].mxu0
        %v3308 = vadd.f32 0.0, %v3307
        %v3309 = vpop.f32.mrb[0].mxu0
        %v3310 = vadd.f32 0.0, %v3309
        %v3311 = vpop.f32.mrb[0].mxu0
        %v3312 = vadd.f32 0.0, %v3311
        %v3313 = vpop.f32.mrb[0].mxu0
        %v3314 = vadd.f32 0.0, %v3313
        %3315 = vdwg.mxu0
        %3316 = vmatprep.subr.bf16.mxu0 0
        %3317 = vmatpush1.bf16.msra.mxu0 %v1545
        %3318 = vmatprep.subr.bf16.mxu0 0
        %3319 = vmatpush1.bf16.msra.mxu0 %v1548
        %3320 = vmatprep.subr.bf16.mxu0 0
        %3321 = vmatpush1.bf16.msra.mxu0 %v1551
        %3322 = vmatprep.subr.bf16.mxu0 0
        %3323 = vmatpush1.bf16.msra.mxu0 %v1554
        %3324 = vmatprep.subr.bf16.mxu0 0
        %3325 = vmatpush1.bf16.msra.mxu0 %v1557
        %3326 = vmatprep.subr.bf16.mxu0 0
        %3327 = vmatpush1.bf16.msra.mxu0 %v1560
        %3328 = vmatprep.subr.bf16.mxu0 0
        %3329 = vmatpush1.bf16.msra.mxu0 %v1563
        %3330 = vmatprep.subr.bf16.mxu0 0
        %3331 = vmatpush1.bf16.msra.mxu0 %v1566
        %3332 = vmatprep.subr.bf16.mxu0 0
        %3333 = vmatpush1.bf16.msra.mxu0 0
        %3334 = vmatprep.subr.bf16.mxu0 0
        %3335 = vmatpush1.bf16.msra.mxu0 0
        %3336 = vmatprep.subr.bf16.mxu0 0
        %3337 = vmatpush1.bf16.msra.mxu0 0
        %3338 = vmatprep.subr.bf16.mxu0 0
        %3339 = vmatpush1.bf16.msra.mxu0 0
        %3340 = vmatprep.subr.bf16.mxu0 0
        %3341 = vmatpush1.bf16.msra.mxu0 0
        %3342 = vmatprep.subr.bf16.mxu0 0
        %3343 = vmatpush1.bf16.msra.mxu0 0
        %3344 = vmatprep.subr.bf16.mxu0 0
        %3345 = vmatpush1.bf16.msra.mxu0 0
        %3346 = vmatprep.subr.bf16.mxu0 0
        %3347 = vmatpush1.bf16.msra.mxu0 0
        %3348 = vmatprep.mubr.bf16.mxu0 0
        %3349 = vmatmul.mubr.bf16.gmra.mrb[0].mxu0 %v3272
        %v3350 = vpop.f32.mrb[0].mxu0
        %v3351 = vadd.f32 0.0, %v3350
        %v3352 = vpop.f32.mrb[0].mxu0
        %v3353 = vpop.f32.mrb[0].mxu0
        %v3354 = vadd.f32 0.0, %v3353
        %v3355 = vpop.f32.mrb[0].mxu0
        %3356 = vdwg.mxu0
        %v3357 = vpack.c.bf16 %v3262, %v3261
        %3358 = vmatprep.subr.bf16.mxu0 %v1757
        %3359 = vmatpush1.bf16.msra.mxu0 %v1756
        %3360 = vmatprep.subr.bf16.mxu0 %v1760
        %3361 = vmatpush1.bf16.msra.mxu0 %v1759
        %3362 = vmatprep.subr.bf16.mxu0 %v1763
        %3363 = vmatpush1.bf16.msra.mxu0 %v1762
        %3364 = vmatprep.subr.bf16.mxu0 %v1766
        %3365 = vmatpush1.bf16.msra.mxu0 %v1765
        %3366 = vmatprep.subr.bf16.mxu0 %v1769
        %3367 = vmatpush1.bf16.msra.mxu0 %v1768
        %3368 = vmatprep.subr.bf16.mxu0 %v1772
        %3369 = vmatpush1.bf16.msra.mxu0 %v1771
        %3370 = vmatprep.subr.bf16.mxu0 %v1775
        %3371 = vmatpush1.bf16.msra.mxu0 %v1774
        %3372 = vmatprep.subr.bf16.mxu0 %v1778
        %3373 = vmatpush1.bf16.msra.mxu0 %v1777
        %3374 = vmatprep.subr.bf16.mxu0 0
        %3375 = vmatpush1.bf16.msra.mxu0 0
        %3376 = vmatprep.subr.bf16.mxu0 0
        %3377 = vmatpush1.bf16.msra.mxu0 0
        %3378 = vmatprep.subr.bf16.mxu0 0
        %3379 = vmatpush1.bf16.msra.mxu0 0
        %3380 = vmatprep.subr.bf16.mxu0 0
        %3381 = vmatpush1.bf16.msra.mxu0 0
        %3382 = vmatprep.subr.bf16.mxu0 0
        %3383 = vmatpush1.bf16.msra.mxu0 0
        %3384 = vmatprep.subr.bf16.mxu0 0
        %3385 = vmatpush1.bf16.msra.mxu0 0
        %3386 = vmatprep.subr.bf16.mxu0 0
        %3387 = vmatpush1.bf16.msra.mxu0 0
        %3388 = vmatprep.subr.bf16.mxu0 0
        %3389 = vmatpush1.bf16.msra.mxu0 0
        %3390 = vmatprep.mubr.bf16.mxu0 0
        %3391 = vmatmul.mubr.bf16.gmra.mrb[0].mxu0 %v3357
        %v3392 = vpop.f32.mrb[0].mxu0
        %v3393 = vadd.f32 0.0, %v3392
        %v3394 = vpop.f32.mrb[0].mxu0
        %v3395 = vadd.f32 0.0, %v3394
        %v3396 = vpop.f32.mrb[0].mxu0
        %v3397 = vadd.f32 0.0, %v3396
        %v3398 = vpop.f32.mrb[0].mxu0
        %v3399 = vadd.f32 0.0, %v3398
        %3400 = vdwg.mxu0
        %3401 = vmatprep.subr.bf16.mxu0 0
        %3402 = vmatpush1.bf16.msra.mxu0 %v1758
        %3403 = vmatprep.subr.bf16.mxu0 0
        %3404 = vmatpush1.bf16.msra.mxu0 %v1761
        %3405 = vmatprep.subr.bf16.mxu0 0
        %3406 = vmatpush1.bf16.msra.mxu0 %v1764
        %3407 = vmatprep.subr.bf16.mxu0 0
        %3408 = vmatpush1.bf16.msra.mxu0 %v1767
        %3409 = vmatprep.subr.bf16.mxu0 0
        %3410 = vmatpush1.bf16.msra.mxu0 %v1770
        %3411 = vmatprep.subr.bf16.mxu0 0
        %3412 = vmatpush1.bf16.msra.mxu0 %v1773
        %3413 = vmatprep.subr.bf16.mxu0 0
        %3414 = vmatpush1.bf16.msra.mxu0 %v1776
        %3415 = vmatprep.subr.bf16.mxu0 0
        %3416 = vmatpush1.bf16.msra.mxu0 %v1779
        %3417 = vmatprep.subr.bf16.mxu0 0
        %3418 = vmatpush1.bf16.msra.mxu0 0
        %3419 = vmatprep.subr.bf16.mxu0 0
        %3420 = vmatpush1.bf16.msra.mxu0 0
        %3421 = vmatprep.subr.bf16.mxu0 0
        %3422 = vmatpush1.bf16.msra.mxu0 0
        %3423 = vmatprep.subr.bf16.mxu0 0
        %3424 = vmatpush1.bf16.msra.mxu0 0
        %3425 = vmatprep.subr.bf16.mxu0 0
        %3426 = vmatpush1.bf16.msra.mxu0 0
        %3427 = vmatprep.subr.bf16.mxu0 0
        %3428 = vmatpush1.bf16.msra.mxu0 0
        %3429 = vmatprep.subr.bf16.mxu0 0
        %3430 = vmatpush1.bf16.msra.mxu0 0
        %3431 = vmatprep.subr.bf16.mxu0 0
        %3432 = vmatpush1.bf16.msra.mxu0 0
        %3433 = vmatprep.mubr.bf16.mxu0 0
        %3434 = vmatmul.mubr.bf16.gmra.mrb[0].mxu0 %v3357
        %v3435 = vpop.f32.mrb[0].mxu0
        %v3436 = vadd.f32 0.0, %v3435
        %v3437 = vpop.f32.mrb[0].mxu0
        %v3438 = vpop.f32.mrb[0].mxu0
        %v3439 = vadd.f32 0.0, %v3438
        %v3440 = vpop.f32.mrb[0].mxu0
        %3441 = vdwg.mxu0
        %v3442 = vunpack.c.l.bf16 %v3266
        %v3443 = vunpack.c.h.bf16 %v3266
        %v3444 = vadd.f32 %v3442, %v3308
        %v3445 = vadd.f32 %v3443, %v3312
        %v3446 = vxor.u32 %v3444, 2147483648
        %v3447 = vxor.u32 %v3445, 2147483648
        %v3448 = vmul.f32 %v3446, 1.442695
        %v3449 = vpow.pop %v3448
        %v3450 = vmul.f32 %v3447, 1.442695
        %v3451 = vpow.pop %v3450
        %v3452 = vadd.f32 %v3449, 1.0
        %v3453 = vadd.f32 %v3451, 1.0
        %v3454 = vrcp.pop %v3452
        %v3455 = vmul.f32 1.0, %v3454
        %v3456 = vrcp.pop %v3453
        %v3457 = vmul.f32 1.0, %v3456
        %v3458 = vunpack.c.l.bf16 %v3267
        %v3459 = vunpack.c.h.bf16 %v3267
        %v3460 = vadd.f32 %v3458, %v3310
        %v3461 = vadd.f32 %v3459, %v3314
        %v3462 = vxor.u32 %v3460, 2147483648
        %v3463 = vxor.u32 %v3461, 2147483648
        %v3464 = vmul.f32 %v3462, 1.442695
        %v3465 = vpow.pop %v3464
        %v3466 = vmul.f32 %v3463, 1.442695
        %v3467 = vpow.pop %v3466
        %v3468 = vadd.f32 %v3465, 1.0
        %v3469 = vadd.f32 %v3467, 1.0
        %v3470 = vrcp.pop %v3468
        %v3471 = vmul.f32 1.0, %v3470
        %v3472 = vrcp.pop %v3469
        %v3473 = vmul.f32 1.0, %v3472
        %v3474 = vadd.f32 %v3351, %v1440
        %v3475 = vadd.f32 %v3354, %v1440
        %v3476 = vmul.f32 %v3455, %v3474
        %v3477 = vmul.f32 %v3457, %v3475
        %v3478 = vunpack.c.l.bf16 %v3268
        %v3479 = vunpack.c.h.bf16 %v3268
        %v3480 = vadd.f32 %v3478, %v3476
        %v3481 = vadd.f32 %v3479, %v3477
        %v3482 = vtanh.pop %v3480
        %v3483 = vtanh.pop %v3481
        %v3484 = vsub.f32 1.0, %v3471
        %v3485 = vsub.f32 1.0, %v3473
        %v3486 = vmul.f32 %v3484, %v3482
        %v3487 = vmul.f32 %v3485, %v3483
        %v3488 = vmul.f32 %v3471, %v3259
        %v3489 = vmul.f32 %v3473, %v3260
        %v3490 = vadd.f32 %v3486, %v3488
        %v3491 = vadd.f32 %v3487, %v3489
        %v3492 = vunpack.c.l.bf16 %v3269
        %v3493 = vunpack.c.h.bf16 %v3269
        %v3494 = vadd.f32 %v3492, %v3393
        %v3495 = vadd.f32 %v3493, %v3397
        %v3496 = vxor.u32 %v3494, 2147483648
        %v3497 = vxor.u32 %v3495, 2147483648
        %v3498 = vmul.f32 %v3496, 1.442695
        %v3499 = vpow.pop %v3498
        %v3500 = vmul.f32 %v3497, 1.442695
        %v3501 = vpow.pop %v3500
        %v3502 = vadd.f32 %v3499, 1.0
        %v3503 = vadd.f32 %v3501, 1.0
        %v3504 = vrcp.pop %v3502
        %v3505 = vmul.f32 1.0, %v3504
        %v3506 = vrcp.pop %v3503
        %v3507 = vmul.f32 1.0, %v3506
        %v3508 = vunpack.c.l.bf16 %v3270
        %v3509 = vunpack.c.h.bf16 %v3270
        %v3510 = vadd.f32 %v3508, %v3395
        %v3511 = vadd.f32 %v3509, %v3399
        %v3512 = vxor.u32 %v3510, 2147483648
        %v3513 = vxor.u32 %v3511, 2147483648
        %v3514 = vmul.f32 %v3512, 1.442695
        %v3515 = vpow.pop %v3514
        %v3516 = vmul.f32 %v3513, 1.442695
        %v3517 = vpow.pop %v3516
        %v3518 = vadd.f32 %v3515, 1.0
        %v3519 = vadd.f32 %v3517, 1.0
        %v3520 = vrcp.pop %v3518
        %v3521 = vmul.f32 1.0, %v3520
        %v3522 = vrcp.pop %v3519
        %v3523 = vmul.f32 1.0, %v3522
        %v3524 = vadd.f32 %v3436, %v1447
        %v3525 = vadd.f32 %v3439, %v1447
        %v3526 = vmul.f32 %v3505, %v3524
        %v3527 = vmul.f32 %v3507, %v3525
        %v3528 = vunpack.c.l.bf16 %v3271
        %v3529 = vunpack.c.h.bf16 %v3271
        %v3530 = vadd.f32 %v3528, %v3526
        %v3531 = vadd.f32 %v3529, %v3527
        %v3532 = vtanh.pop %v3530
        %v3533 = vtanh.pop %v3531
        %v3534 = vsub.f32 1.0, %v3521
        %v3535 = vsub.f32 1.0, %v3523
        %v3536 = vmul.f32 %v3534, %v3532
        %v3537 = vmul.f32 %v3535, %v3533
        %v3538 = vmul.f32 %v3521, %v3261
        %v3539 = vmul.f32 %v3523, %v3262
        %v3540 = vadd.f32 %v3536, %v3538
        %v3541 = vadd.f32 %v3537, %v3539
        %s3542 = sadd.s32 %s1988, 5
        %p3543 = scmp.lt.s32.totalorder %s3542, 8
        %s3544 = scalar_select %p3543, 1, 0
        %v3545 = vstv %s3544
        %vm3546 = vcmp.eq.s32.totalorder %v3545, 1
        %v3547 = vsel %vm3546, %v3490, %v3259
        %v3548 = vsel %vm3546, %v3491, %v3260
        %v3549 = vsel %vm3546, %v3540, %v3261
        %v3550 = vsel %vm3546, %v3541, %v3262
        %3551 = vst [vmem:[#allocation3] sm:$0xff] %v3547
        %3552 = vst [vmem:[#allocation3 + $0x8] sm:$0xff] %v3548
        %3553 = vst [vmem:[#allocation4] sm:$0xff] %v3549
        %3554 = vst [vmem:[#allocation4 + $0x8] sm:$0xff] %v3550
        %v3555 = vpack.c.bf16 %v3548, %v3547
        %v3556 = vpack.c.bf16 %v3550, %v3549
        %v3559 = vunpack.c.l.b16 %v3555
        %v3560 = vunpack.c.l.b16 %v3556
        %v3561 = vunpack.c.h.b16 %v3555
        %v3562 = vunpack.c.h.b16 %v3556
        %v3563 = vpack.c.b16 %v3560, %v3559
        %v3564 = vpack.c.b16 %v3562, %v3561
        %s3567 = scalar_lea.vmem %s486, 80 [#allocation17]
        %3568 = vst [vmem:[%s3567] sm:$0xff] %v3563
        %3569 = vst [vmem:[%s3567 + $0x8] sm:$0xff] %v3564
        %p3570 = scmp.eq.s32.totalorder %s34, 1
        // Predicated region
        $region89: #{tpu_custom_call.1} parent=55 // pred_check
          %p3571 = pneg %p3570
        $region90: #{tpu_custom_call.1} parent=55 // pred_check_branch
          %3573 = sbr.rel (%p3571) target = $region92
        $region91: #{tpu_custom_call.1} parent=55 // pred_region
          %v3574 = vld [vmem:[#allocation3] sm:$0xff]
          %v3575 = vld [vmem:[#allocation3 + $0x8] sm:$0xff]
          %v3576 = vpack.c.bf16 %v3575, %v3574
          %v3577 = vld [vmem:[#allocation16] sm:$0xf]
          %v3578 = vld [vmem:[#allocation16 + $0x4] sm:$0xf]
          %v3579 = vld [vmem:[#allocation16 + $0x8] sm:$0xf]
          %v3580 = vld [vmem:[#allocation16 + $0xc] sm:$0xf]
          %v3581 = vld [vmem:[#allocation16 + $0x10] sm:$0xf]
          %v3582 = vld [vmem:[#allocation16 + $0x14] sm:$0xf]
          %v3583 = vld [vmem:[#allocation16 + $0x18] sm:$0xf]
          %v3584 = vld [vmem:[#allocation16 + $0x1c] sm:$0xf]
          %v3585 = vld [vmem:[#allocation16 + $0x20] sm:$0xf]
          %v3586 = vld [vmem:[#allocation16 + $0x24] sm:$0xf]
          %v3587 = vld [vmem:[#allocation16 + $0x28] sm:$0xf]
          %v3588 = vld [vmem:[#allocation16 + $0x2c] sm:$0xf]
          %v3589 = vld [vmem:[#allocation16 + $0x30] sm:$0xf]
          %v3590 = vld [vmem:[#allocation16 + $0x34] sm:$0xf]
          %v3591 = vld [vmem:[#allocation16 + $0x38] sm:$0xf]
          %v3592 = vld [vmem:[#allocation16 + $0x3c] sm:$0xf]
          %v3593 = vld [vmem:[#allocation4] sm:$0xff]
          %v3594 = vld [vmem:[#allocation4 + $0x8] sm:$0xff]
          %v3595 = vpack.c.bf16 %v3594, %v3593
          %v3596 = vld [vmem:[#allocation16 + $0x40] sm:$0xf]
          %v3597 = vld [vmem:[#allocation16 + $0x44] sm:$0xf]
          %v3598 = vld [vmem:[#allocation16 + $0x48] sm:$0xf]
          %v3599 = vld [vmem:[#allocation16 + $0x4c] sm:$0xf]
          %v3600 = vld [vmem:[#allocation16 + $0x50] sm:$0xf]
          %v3601 = vld [vmem:[#allocation16 + $0x54] sm:$0xf]
          %v3602 = vld [vmem:[#allocation16 + $0x58] sm:$0xf]
          %v3603 = vld [vmem:[#allocation16 + $0x5c] sm:$0xf]
          %v3604 = vld [vmem:[#allocation16 + $0x60] sm:$0xf]
          %v3605 = vld [vmem:[#allocation16 + $0x64] sm:$0xf]
          %v3606 = vld [vmem:[#allocation16 + $0x68] sm:$0xf]
          %v3607 = vld [vmem:[#allocation16 + $0x6c] sm:$0xf]
          %v3608 = vld [vmem:[#allocation16 + $0x70] sm:$0xf]
          %v3609 = vld [vmem:[#allocation16 + $0x74] sm:$0xf]
          %v3610 = vld [vmem:[#allocation16 + $0x78] sm:$0xf]
          %v3611 = vld [vmem:[#allocation16 + $0x7c] sm:$0xf]
          %v3628 = vunpack.c.l.b16 %v3596
          %v3629 = vunpack.c.l.b16 %v3597
          %v3630 = vunpack.c.l.b16 %v3598
          %v3631 = vunpack.c.l.b16 %v3599
          %v3632 = vunpack.c.l.b16 %v3600
          %v3633 = vunpack.c.l.b16 %v3601
          %v3634 = vunpack.c.l.b16 %v3602
          %v3635 = vunpack.c.l.b16 %v3603
          %v3636 = vunpack.c.l.b16 %v3604
          %v3637 = vunpack.c.l.b16 %v3605
          %v3638 = vunpack.c.l.b16 %v3606
          %v3639 = vunpack.c.l.b16 %v3607
          %v3640 = vunpack.c.l.b16 %v3608
          %v3641 = vunpack.c.l.b16 %v3609
          %v3642 = vunpack.c.l.b16 %v3610
          %v3643 = vunpack.c.l.b16 %v3611
          %v3644 = vpack.c.b16 %v3629, %v3628
          %v3645 = vpack.c.b16 %v3631, %v3630
          %v3646 = vpack.c.b16 %v3633, %v3632
          %v3647 = vpack.c.b16 %v3635, %v3634
          %v3648 = vpack.c.b16 %v3637, %v3636
          %v3649 = vpack.c.b16 %v3639, %v3638
          %v3650 = vpack.c.b16 %v3641, %v3640
          %v3651 = vpack.c.b16 %v3643, %v3642
          %3660 = vmatprep.subr.bf16.mxu0 0
          %3661 = vmatpush1.bf16.msra.mxu0 %v3644
          %3662 = vmatprep.subr.bf16.mxu0 0
          %3663 = vmatpush1.bf16.msra.mxu0 %v3645
          %3664 = vmatprep.subr.bf16.mxu0 0
          %3665 = vmatpush1.bf16.msra.mxu0 %v3646
          %3666 = vmatprep.subr.bf16.mxu0 0
          %3667 = vmatpush1.bf16.msra.mxu0 %v3647
          %3668 = vmatprep.subr.bf16.mxu0 0
          %3669 = vmatpush1.bf16.msra.mxu0 %v3648
          %3670 = vmatprep.subr.bf16.mxu0 0
          %3671 = vmatpush1.bf16.msra.mxu0 %v3649
          %3672 = vmatprep.subr.bf16.mxu0 0
          %3673 = vmatpush1.bf16.msra.mxu0 %v3650
          %3674 = vmatprep.subr.bf16.mxu0 0
          %3675 = vmatpush1.bf16.msra.mxu0 %v3651
          %3676 = vmatprep.subr.bf16.mxu0 0
          %3677 = vmatpush1.bf16.msra.mxu0 0
          %3678 = vmatprep.subr.bf16.mxu0 0
          %3679 = vmatpush1.bf16.msra.mxu0 0
          %3680 = vmatprep.subr.bf16.mxu0 0
          %3681 = vmatpush1.bf16.msra.mxu0 0
          %3682 = vmatprep.subr.bf16.mxu0 0
          %3683 = vmatpush1.bf16.msra.mxu0 0
          %3684 = vmatprep.subr.bf16.mxu0 0
          %3685 = vmatpush1.bf16.msra.mxu0 0
          %3686 = vmatprep.subr.bf16.mxu0 0
          %3687 = vmatpush1.bf16.msra.mxu0 0
          %3688 = vmatprep.subr.bf16.mxu0 0
          %3689 = vmatpush1.bf16.msra.mxu0 0
          %3690 = vmatprep.subr.bf16.mxu0 0
          %3691 = vmatpush1.bf16.msra.mxu0 0
          %3692 = vmatprep.mubr.bf16.mxu0 0
          %3693 = vmatmul.mubr.bf16.gmra.mrb[0].mxu0 %v3595
          %v3694 = vpop.f32.mrb[0].mxu0
          %v3695 = vadd.f32 0.0, %v3694
          %v3696 = vpop.f32.mrb[0].mxu0
          %v3697 = vpop.f32.mrb[0].mxu0
          %v3698 = vadd.f32 0.0, %v3697
          %v3699 = vpop.f32.mrb[0].mxu0
          %3700 = vdwg.mxu0
          %v3717 = vunpack.c.l.b16 %v3577
          %v3718 = vunpack.c.l.b16 %v3578
          %v3719 = vunpack.c.l.b16 %v3579
          %v3720 = vunpack.c.l.b16 %v3580
          %v3721 = vunpack.c.l.b16 %v3581
          %v3722 = vunpack.c.l.b16 %v3582
          %v3723 = vunpack.c.l.b16 %v3583
          %v3724 = vunpack.c.l.b16 %v3584
          %v3725 = vunpack.c.l.b16 %v3585
          %v3726 = vunpack.c.l.b16 %v3586
          %v3727 = vunpack.c.l.b16 %v3587
          %v3728 = vunpack.c.l.b16 %v3588
          %v3729 = vunpack.c.l.b16 %v3589
          %v3730 = vunpack.c.l.b16 %v3590
          %v3731 = vunpack.c.l.b16 %v3591
          %v3732 = vunpack.c.l.b16 %v3592
          %v3733 = vpack.c.b16 %v3718, %v3717
          %v3734 = vpack.c.b16 %v3720, %v3719
          %v3735 = vpack.c.b16 %v3722, %v3721
          %v3736 = vpack.c.b16 %v3724, %v3723
          %v3737 = vpack.c.b16 %v3726, %v3725
          %v3738 = vpack.c.b16 %v3728, %v3727
          %v3739 = vpack.c.b16 %v3730, %v3729
          %v3740 = vpack.c.b16 %v3732, %v3731
          %3749 = vmatprep.subr.bf16.mxu0 0
          %3750 = vmatpush1.bf16.msra.mxu0 %v3733
          %3751 = vmatprep.subr.bf16.mxu0 0
          %3752 = vmatpush1.bf16.msra.mxu0 %v3734
          %3753 = vmatprep.subr.bf16.mxu0 0
          %3754 = vmatpush1.bf16.msra.mxu0 %v3735
          %3755 = vmatprep.subr.bf16.mxu0 0
          %3756 = vmatpush1.bf16.msra.mxu0 %v3736
          %3757 = vmatprep.subr.bf16.mxu0 0
          %3758 = vmatpush1.bf16.msra.mxu0 %v3737
          %3759 = vmatprep.subr.bf16.mxu0 0
          %3760 = vmatpush1.bf16.msra.mxu0 %v3738
          %3761 = vmatprep.subr.bf16.mxu0 0
          %3762 = vmatpush1.bf16.msra.mxu0 %v3739
          %3763 = vmatprep.subr.bf16.mxu0 0
          %3764 = vmatpush1.bf16.msra.mxu0 %v3740
          %3765 = vmatprep.subr.bf16.mxu0 0
          %3766 = vmatpush1.bf16.msra.mxu0 0
          %3767 = vmatprep.subr.bf16.mxu0 0
          %3768 = vmatpush1.bf16.msra.mxu0 0
          %3769 = vmatprep.subr.bf16.mxu0 0
          %3770 = vmatpush1.bf16.msra.mxu0 0
          %3771 = vmatprep.subr.bf16.mxu0 0
          %3772 = vmatpush1.bf16.msra.mxu0 0
          %3773 = vmatprep.subr.bf16.mxu0 0
          %3774 = vmatpush1.bf16.msra.mxu0 0
          %3775 = vmatprep.subr.bf16.mxu0 0
          %3776 = vmatpush1.bf16.msra.mxu0 0
          %3777 = vmatprep.subr.bf16.mxu0 0
          %3778 = vmatpush1.bf16.msra.mxu0 0
          %3779 = vmatprep.subr.bf16.mxu0 0
          %3780 = vmatpush1.bf16.msra.mxu0 0
          %3781 = vmatprep.mubr.bf16.mxu0 0
          %3782 = vmatmul.mubr.bf16.gmra.mrb[0].mxu0 %v3576
          %v3783 = vpop.f32.mrb[0].mxu0
          %v3784 = vadd.f32 %v3695, %v3783
          %v3785 = vpop.f32.mrb[0].mxu0
          %v3786 = vpop.f32.mrb[0].mxu0
          %v3787 = vadd.f32 %v3698, %v3786
          %v3788 = vpop.f32.mrb[0].mxu0
          %3789 = vdwg.mxu0
          %3790 = vst [vmem:[#allocation18] sm:$0xff] %v3784
          %3791 = vst [vmem:[#allocation18 + $0x8] sm:$0xff] %v3787
        $region92: #{tpu_custom_call.1} parent=55 // pred_fallthru
          _
        %s3792 = sand.u32 %s241, 1
        %s3793 = scalar_lea.sflag [#allocation7], %s3792
        %s3794 = sand.u32 %s241, 1
        %s3795 = smul.addr %s3794, 96
        %s3796 = scalar_lea.vmem [#allocation17], %s3795
        // Predicated region
        $region93: #{tpu_custom_call.1} parent=55 // pred_check
          %p3797 = pneg %p251
        $region94: #{tpu_custom_call.1} parent=55 // pred_check_branch
          %3799 = sbr.rel (%p3797) target = $region96
        $region95: #{tpu_custom_call.1} parent=55 // pred_region
          %s3800 = smul.u32 6, %s34
          %s3802 = ssub.s32 1536, 1536
          %3803 = vsyncadd %s3793, %s3802
          %s3804 = smul.addr %s3800, 4
          %s3805 = smul.addr %s3804, 64
          %s3806 = scalar_lea.hbm %s9, %s3805
          %s3807 = sshll.u32 %s3796, 4
          %s3808 = int_to_ptr.vmem [resolvable:$true] %s3807
          %3813 = dma.vmem_to_hbm [thread:$0]  %s3808, 1536, %s3806, %s3793, 128, 128, 8
        $region96: #{tpu_custom_call.1} parent=55 // pred_fallthru
          _
        // Predicated region
        $region97: #{tpu_custom_call.1} parent=55 // pred_check
          %p3814 = pneg %p272
        $region98: #{tpu_custom_call.1} parent=55 // pred_check_branch
          %3816 = sbr.rel (%p3814) target = $region100
        $region99: #{tpu_custom_call.1} parent=55 // pred_region
          %s3818 = ssub.s32 256, 256
          %3819 = vsyncadd [#allocation19], %s3818
          %s3820 = sshll.u32 [#allocation18], 4
          %s3821 = int_to_ptr.vmem [resolvable:$true] %s3820
          %3826 = dma.vmem_to_hbm [thread:$0]  %s3821, 256, %s10, [#allocation19], 128, 128, 8
        $region100: #{tpu_custom_call.1} parent=55 // pred_fallthru
          _
        // Predicated region
        $region101: #{tpu_custom_call.1} parent=55 // pred_check
          %p3827 = pneg %p272
        $region102: #{tpu_custom_call.1} parent=55 // pred_check_branch
          %3829 = sbr.rel (%p3827) target = $region104
        $region103: #{tpu_custom_call.1} parent=55 // pred_region
          %3830 = dma.done [#allocation19], 256
        $region104: #{tpu_custom_call.1} parent=55 // pred_fallthru
          _
      $region56: #{tpu_custom_call.1} parent=5 // pred_fallthru
        _
      %p3831 = scmp.le.s32.totalorder 2, %s29
      // Predicated region
      $region105: #{tpu_custom_call.1} parent=5 // pred_check
        %p3832 = pneg %p3831
      $region106: #{tpu_custom_call.1} parent=5 // pred_check_branch
        %3834 = sbr.rel (%p3832) target = $region108
      $region107: #{tpu_custom_call.1} parent=5 // pred_region
        %s3835 = ssub.s32 %s29, 2
        // Predicated region
        $region109: #{tpu_custom_call.1} parent=107 // pred_check
          %p3836 = pneg %p257
        $region110: #{tpu_custom_call.1} parent=107 // pred_check_branch
          %3838 = sbr.rel (%p3836) target = $region112
        $region111: #{tpu_custom_call.1} parent=107 // pred_region
          %s3839 = sand.u32 %s242, 1
          %s3840 = scalar_lea.sflag [#allocation7], %s3839
          %s3841 = sand.u32 %s242, 1
          %s3842 = smul.addr %s3841, 96
          %s3843 = scalar_lea.vmem [#allocation17], %s3842
          %3844 = dma.done %s3840, 1536
        $region112: #{tpu_custom_call.1} parent=107 // pred_fallthru
          _
      $region108: #{tpu_custom_call.1} parent=5 // pred_fallthru
        _
    $region6: #{tpu_custom_call.1} parent=1 // loop_footer
      %s33 = sadd.s32 1, %s29
    $region7: #{tpu_custom_call.1} parent=1 // loop_footer_branch
      %28 = sbr.rel target = $region3
    $region8: #{tpu_custom_call.1} parent=1 // loop_exit
      _
    %3845 = vsyncpa [#allocation6], 1
    %s3846 = scalar_lea.sflag [#allocation6], 1
    %3847 = vsyncpa %s3846, 1
    %3848 = vsyncpa [#allocation9], 1
    %s3849 = scalar_lea.sflag [#allocation9], 1
    %3850 = vsyncpa %s3849, 1
    %3851 = vsyncpa [#allocation12], 1
    %3852 = vsyncpa [#allocation15], 1
    %3853 = vsyncpa [#allocation7], 1
    %s3854 = scalar_lea.sflag [#allocation7], 1
    %3855 = vsyncpa %s3854, 1
    %3856 = vsyncpa [#allocation19], 1

</llo_original>
